<compile_context>
chip_gen: v6e
topology: v6e:2x2x1
jax: 0.10.0
libtpu: 0.0.40
codegen_flags: <defaults>
</compile_context>

<pallas_src>
import functools
import math

import jax
import jax.numpy as jnp
from jax import lax
from jax.experimental import pallas as pl

# ----------------------------- config ---------------------------------------
VOCAB = 100
MAX_POS = 64
TYPE_VOCAB = 2
HIDDEN = 32
HEADS = 2
HEAD_DIM = HIDDEN // HEADS
INTERMEDIATE = 64
LAYERS = 2
NUM_CLASSES = 3
PAD_CLASSES = 128            # lane-dense classifier output (sliced to 3 outside)
LN_EPS = 1e-12
ATT_SCALE = 1.0 / math.sqrt(HEAD_DIM)
NEG_INF = -1e9

# ------------------- packed-slab layout (static row offsets) -----------------
SLAB_LANES = 128

# weight slab: every weight block starts at lane 0 (no lane-offset slicing)
_QKV_ROWS = 3 * HEADS * HIDDEN          # 6 head blocks of [HIDDEN, HEAD_DIM]
_WO_OFF = _QKV_ROWS                     # [HIDDEN, HIDDEN]
_W1_OFF = _WO_OFF + HIDDEN              # [HIDDEN, INTERMEDIATE]
_W2_OFF = _W1_OFF + HIDDEN              # [INTERMEDIATE, HIDDEN]
LAYER_W_ROWS = _W2_OFF + INTERMEDIATE   # 320
CLS_W_OFF = LAYERS * LAYER_W_ROWS       # 640
TOTAL_W_ROWS = CLS_W_OFF + HIDDEN       # 672

# bias / LayerNorm slab
_EMB_G_ROW, _EMB_B_ROW, _CLS_B_ROW = 0, 1, 2
_B_BASE = 3
LAYER_B_ROWS = 13                       # 6 qkv-head biases, bo, ln1 g/b, b1, b2, ln2 g/b
TOTAL_B_ROWS = _B_BASE + LAYERS * LAYER_B_ROWS          # 29
TOTAL_B_ROWS_PAD = ((TOTAL_B_ROWS + 7) // 8) * 8        # 32


# ----------------------------- in-kernel helpers ------------------------------
def _gelu(x):
    # TODO(synk): tanh-approx GELU; PyTorch/HF BERT default is exact erf GELU
    # (difference is <1e-3; tanh lowers cleanly to the EUP slot).
    return 0.5 * x * (1.0 + jnp.tanh(0.7978845608028654 * (x + 0.044715 * x * x * x)))


# ----------------------------- fused forward kernel ---------------------------
def md_bio_fused_kernel(x_ref, mask_ref, w_ref, b_ref, out_ref, *, batch, seq_len):
    """Entire forward (emb-LN, 2 encoder layers, classifier) in one invocation."""
    T = batch * seq_len
    x = x_ref[...]                                        # [T, D] f32

    # Block-diagonal (per-batch) + key-padding additive bias, built in-register.
    ii = lax.broadcasted_iota(jnp.int32, (T, T), 0)       # query token index
    jj = lax.broadcasted_iota(jnp.int32, (T, T), 1)       # key token index
    same_batch = None
    for b in range(batch):                                # static unroll (B=2)
        lo, hi = b * seq_len, (b + 1) * seq_len
        blk = ((ii >= lo) & (ii < hi)) & ((jj >= lo) & (jj < hi))
        same_batch = blk if same_batch is None else (same_batch | blk)
    key_valid = mask_ref[...] > 0.5                       # [1, T], broadcasts over rows
    attn_bias = jnp.where(same_batch & key_valid, 0.0, NEG_INF).astype(jnp.float32)

    def layernorm(v, g_row):
        g = b_ref[g_row:g_row + 1, 0:HIDDEN]
        bb = b_ref[g_row + 1:g_row + 2, 0:HIDDEN]
        mean = jnp.mean(v, axis=-1, keepdims=True)
        var = jnp.mean(jnp.square(v - mean), axis=-1, keepdims=True)
        return (v - mean) * lax.rsqrt(var + LN_EPS) * g + bb

    x = layernorm(x, _EMB_G_ROW)                          # embedding LayerNorm

    for l in range(LAYERS):                               # static unroll (LAYERS=2)
        wl = l * LAYER_W_ROWS
        bl = _B_BASE + l * LAYER_B_ROWS

        def head_proj(slot):
            # slot in [0..3H): q_h0, q_h1, k_h0, k_h1, v_h0, v_h1.  Weights are
            # row-stacked at lane 0 -> plain prefix loads, no lane shuffles.
            r = wl + slot * HIDDEN
            w = w_ref[r:r + HIDDEN, 0:HEAD_DIM]                       # [D, Hd]
            bias = b_ref[bl + slot:bl + slot + 1, 0:HEAD_DIM]         # [1, Hd]
            return jnp.dot(x, w, preferred_element_type=jnp.float32) + bias

        qh = jnp.stack([head_proj(0 * HEADS + h) for h in range(HEADS)], axis=0)
        kh = jnp.stack([head_proj(1 * HEADS + h) for h in range(HEADS)], axis=0)
        vh = jnp.stack([head_proj(2 * HEADS + h) for h in range(HEADS)], axis=0)

        # Head-batched attention; contract last-with-last (no K transpose).
        s = jnp.einsum("hsd,htd->hst", qh, kh,
                       preferred_element_type=jnp.float32) * ATT_SCALE
        s = s + attn_bias[None, :, :]
        m = jnp.max(s, axis=-1, keepdims=True)
        p = jnp.exp(s - m)
        denom = jnp.sum(p, axis=-1, keepdims=True)
        ctx = jnp.einsum("hst,htd->hsd", p, vh,
                         preferred_element_type=jnp.float32) / denom   # [H, T, Hd]

        # Output projection: per-head row-blocks of Wo (head merge without concat).
        attn_out = b_ref[bl + 6:bl + 7, 0:HIDDEN]                       # bo, [1, D]
        for h in range(HEADS):
            r = wl + _WO_OFF + h * HEAD_DIM
            attn_out = attn_out + jnp.dot(
                ctx[h], w_ref[r:r + HEAD_DIM, 0:HIDDEN],
                preferred_element_type=jnp.float32)
        x = layernorm(x + attn_out, bl + 7)

        # FFN
        w1 = w_ref[wl + _W1_OFF:wl + _W1_OFF + HIDDEN, 0:INTERMEDIATE]
        b1 = b_ref[bl + 9:bl + 10, 0:INTERMEDIATE]
        hmid = _gelu(jnp.dot(x, w1, preferred_element_type=jnp.float32) + b1)
        w2 = w_ref[wl + _W2_OFF:wl + _W2_OFF + INTERMEDIATE, 0:HIDDEN]
        b2 = b_ref[bl + 10:bl + 11, 0:HIDDEN]
        ffn = jnp.dot(hmid, w2, preferred_element_type=jnp.float32) + b2
        x = layernorm(x + ffn, bl + 11)

    # Classifier (Dropout(0.1) identity at inference); lane-dense 128-wide store.
    clsw = w_ref[CLS_W_OFF:CLS_W_OFF + HIDDEN, 0:PAD_CLASSES]
    clsb = b_ref[_CLS_B_ROW:_CLS_B_ROW + 1, 0:PAD_CLASSES]
    logits = jnp.dot(x, clsw, preferred_element_type=jnp.float32) + clsb
    out_ref[...] = logits.astype(out_ref.dtype)


# ----------------------------- parameters ------------------------------------
def init_params(key):
    def normal(k, shape, scale=0.02):
        return scale * jax.random.normal(k, shape, dtype=jnp.float32)

    keys = iter(jax.random.split(key, 8 + LAYERS * 8))
    p = {
        "word_emb": normal(next(keys), (VOCAB, HIDDEN)),
        "pos_emb": normal(next(keys), (MAX_POS, HIDDEN)),
        "type_emb": normal(next(keys), (TYPE_VOCAB, HIDDEN)),
        "emb_ln_g": jnp.ones((HIDDEN,), jnp.float32),
        "emb_ln_b": jnp.zeros((HIDDEN,), jnp.float32),
        "cls_w": normal(next(keys), (HIDDEN, NUM_CLASSES)),
        "cls_b": jnp.zeros((NUM_CLASSES,), jnp.float32),
        "layers": [],
    }
    for _ in range(LAYERS):
        lp = {
            "wq": normal(next(keys), (HIDDEN, HIDDEN)), "bq": jnp.zeros((HIDDEN,), jnp.float32),
            "wk": normal(next(keys), (HIDDEN, HIDDEN)), "bk": jnp.zeros((HIDDEN,), jnp.float32),
            "wv": normal(next(keys), (HIDDEN, HIDDEN)), "bv": jnp.zeros((HIDDEN,), jnp.float32),
            "wo": normal(next(keys), (HIDDEN, HIDDEN)), "bo": jnp.zeros((HIDDEN,), jnp.float32),
            "ln1_g": jnp.ones((HIDDEN,), jnp.float32), "ln1_b": jnp.zeros((HIDDEN,), jnp.float32),
            "w1": normal(next(keys), (HIDDEN, INTERMEDIATE)), "b1": jnp.zeros((INTERMEDIATE,), jnp.float32),
            "w2": normal(next(keys), (INTERMEDIATE, HIDDEN)), "b2": jnp.zeros((HIDDEN,), jnp.float32),
            "ln2_g": jnp.ones((HIDDEN,), jnp.float32), "ln2_b": jnp.zeros((HIDDEN,), jnp.float32),
        }
        p["layers"].append(lp)
    return p


def pack_params(p):
    """Consolidate every weight into one f32 weight slab and every bias/LN param
    into one f32 bias slab; per-head Q/K/V weight blocks are row-stacked at lane
    offset 0 so the kernel never lane-slices."""
    W = jnp.zeros((TOTAL_W_ROWS, SLAB_LANES), jnp.float32)
    Bm = jnp.zeros((TOTAL_B_ROWS_PAD, SLAB_LANES), jnp.float32)

    Bm = Bm.at[_EMB_G_ROW, 0:HIDDEN].set(p["emb_ln_g"])
    Bm = Bm.at[_EMB_B_ROW, 0:HIDDEN].set(p["emb_ln_b"])
    Bm = Bm.at[_CLS_B_ROW, 0:NUM_CLASSES].set(p["cls_b"])

    for l, lp in enumerate(p["layers"]):
        wl = l * LAYER_W_ROWS
        bl = _B_BASE + l * LAYER_B_ROWS
        for qi, (wname, bname) in enumerate((("wq", "bq"), ("wk", "bk"), ("wv", "bv"))):
            wmat, bvec = lp[wname], lp[bname]
            for h in range(HEADS):
                slot = qi * HEADS + h
                cols = slice(h * HEAD_DIM, (h + 1) * HEAD_DIM)
                W = W.at[wl + slot * HIDDEN:wl + (slot + 1) * HIDDEN,
                         0:HEAD_DIM].set(wmat[:, cols])
                Bm = Bm.at[bl + slot, 0:HEAD_DIM].set(bvec[cols])
        W = W.at[wl + _WO_OFF:wl + _WO_OFF + HIDDEN, 0:HIDDEN].set(lp["wo"])
        W = W.at[wl + _W1_OFF:wl + _W1_OFF + HIDDEN, 0:INTERMEDIATE].set(lp["w1"])
        W = W.at[wl + _W2_OFF:wl + _W2_OFF + INTERMEDIATE, 0:HIDDEN].set(lp["w2"])
        Bm = Bm.at[bl + 6, 0:HIDDEN].set(lp["bo"])
        Bm = Bm.at[bl + 7, 0:HIDDEN].set(lp["ln1_g"])
        Bm = Bm.at[bl + 8, 0:HIDDEN].set(lp["ln1_b"])
        Bm = Bm.at[bl + 9, 0:INTERMEDIATE].set(lp["b1"])
        Bm = Bm.at[bl + 10, 0:HIDDEN].set(lp["b2"])
        Bm = Bm.at[bl + 11, 0:HIDDEN].set(lp["ln2_g"])
        Bm = Bm.at[bl + 12, 0:HIDDEN].set(lp["ln2_b"])

    W = W.at[CLS_W_OFF:CLS_W_OFF + HIDDEN, 0:NUM_CLASSES].set(p["cls_w"])

    return {
        "word_emb": p["word_emb"],
        "pos_emb": p["pos_emb"],
        "type_emb": p["type_emb"],
        "w_slab": W,          # [672, 128] f32, ~344 KB
        "b_slab": Bm,         # [32, 128] f32, 16 KB
    }


# ----------------------------- forward ----------------------------------------
def md_bio_forward(params, input_ids, attention_mask):
    B, S = input_ids.shape
    T = B * S

    # Embedding gather + position/type add: JAX glue.
    # TODO(synk): embedding-table gather stays outside Pallas; an in-kernel DMA
    # gather is not worth it at VOCAB=100 / HIDDEN=32.
    x = jnp.take(params["word_emb"], input_ids, axis=0)                  # [B,S,D]
    x = x + params["pos_emb"][None, :S, :] + params["type_emb"][0][None, None, :]
    x = x.reshape(T, HIDDEN)                                             # [B*S, D] slab
    mask = attention_mask.astype(jnp.float32).reshape(1, T)              # key mask

    # Single kernel invocation (no grid): everything sits in VMEM once,
    # 4 input DMAs total, no per-step pipeline overhead, single TensorCore.
    logits_padded = pl.pallas_call(
        functools.partial(md_bio_fused_kernel, batch=B, seq_len=S),
        out_shape=jax.ShapeDtypeStruct((T, PAD_CLASSES), jnp.float32),
    )(x, mask, params["w_slab"], params["b_slab"])

    return logits_padded.reshape(B, S, PAD_CLASSES)[:, :, :NUM_CLASSES]


# ----------------------------- main -------------------------------------------
if __name__ == "__main__":
    root = jax.random.PRNGKey(0)
    k_params, k_ids = jax.random.split(root)

    B, S = 2, 8
    params = pack_params(init_params(k_params))
    input_ids = jax.random.randint(k_ids, (B, S), 0, VOCAB, dtype=jnp.int32)
    attention_mask = jnp.ones((B, S), dtype=jnp.int32).at[1, 6:].set(0)

    fwd = jax.jit(md_bio_forward)
    logits = fwd(params, input_ids, attention_mask)
    jax.block_until_ready(logits)

    assert logits.shape == (B, S, NUM_CLASSES)
    assert logits.dtype == jnp.float32
    assert bool(jnp.all(jnp.isfinite(logits)))
    print("KERNEL_OK")
</pallas_src>

<mosaic_0001>
module attributes {stable_mosaic.version = 11 : i64} {
  func.func @md_bio_fused_kernel(%arg0: memref<16x32xf32, #tpu.memory_space<vmem>>, %arg1: memref<1x16xf32, #tpu.memory_space<vmem>>, %arg2: memref<672x128xf32, #tpu.memory_space<vmem>>, %arg3: memref<32x128xf32, #tpu.memory_space<vmem>>, %arg4: memref<16x128xf32, #tpu.memory_space<vmem>>) attributes {dimension_semantics = [], scalar_prefetch = 0 : i64, scratch_operands = 0 : i64, tpu.core_type = #tpu.core_type<tc>} {
    %c0 = arith.constant 0 : index
    %c0_0 = arith.constant 0 : index
    %0 = vector.load %arg0[%c0, %c0_0] : memref<16x32xf32, #tpu.memory_space<vmem>>, vector<16x32xf32>
    %1 = tpu.iota {dimensions = array<i32: 0>} : vector<16x16xi32>
    %2 = tpu.iota {dimensions = array<i32: 1>} : vector<16x16xi32>
    %c0_i32 = arith.constant 0 : i32
    %3 = vector.broadcast %c0_i32 : i32 to vector<16x16xi32>
    %4 = arith.cmpi sge, %1, %3 : vector<16x16xi32>
    %c8_i32 = arith.constant 8 : i32
    %5 = vector.broadcast %c8_i32 : i32 to vector<16x16xi32>
    %6 = arith.cmpi slt, %1, %5 : vector<16x16xi32>
    %7 = arith.andi %4, %6 : vector<16x16xi1>
    %c0_i32_1 = arith.constant 0 : i32
    %8 = vector.broadcast %c0_i32_1 : i32 to vector<16x16xi32>
    %9 = arith.cmpi sge, %2, %8 : vector<16x16xi32>
    %c8_i32_2 = arith.constant 8 : i32
    %10 = vector.broadcast %c8_i32_2 : i32 to vector<16x16xi32>
    %11 = arith.cmpi slt, %2, %10 : vector<16x16xi32>
    %12 = arith.andi %9, %11 : vector<16x16xi1>
    %13 = arith.andi %7, %12 : vector<16x16xi1>
    %c8_i32_3 = arith.constant 8 : i32
    %14 = vector.broadcast %c8_i32_3 : i32 to vector<16x16xi32>
    %15 = arith.cmpi sge, %1, %14 : vector<16x16xi32>
    %c16_i32 = arith.constant 16 : i32
    %16 = vector.broadcast %c16_i32 : i32 to vector<16x16xi32>
    %17 = arith.cmpi slt, %1, %16 : vector<16x16xi32>
    %18 = arith.andi %15, %17 : vector<16x16xi1>
    %c8_i32_4 = arith.constant 8 : i32
    %19 = vector.broadcast %c8_i32_4 : i32 to vector<16x16xi32>
    %20 = arith.cmpi sge, %2, %19 : vector<16x16xi32>
    %c16_i32_5 = arith.constant 16 : i32
    %21 = vector.broadcast %c16_i32_5 : i32 to vector<16x16xi32>
    %22 = arith.cmpi slt, %2, %21 : vector<16x16xi32>
    %23 = arith.andi %20, %22 : vector<16x16xi1>
    %24 = arith.andi %18, %23 : vector<16x16xi1>
    %25 = arith.ori %13, %24 : vector<16x16xi1>
    %c0_6 = arith.constant 0 : index
    %c0_7 = arith.constant 0 : index
    %26 = vector.load %arg1[%c0_6, %c0_7] : memref<1x16xf32, #tpu.memory_space<vmem>>, vector<1x16xf32>
    %cst = arith.constant 5.000000e-01 : f32
    %27 = vector.broadcast %cst : f32 to vector<1x16xf32>
    %28 = arith.cmpf ogt, %26, %27 : vector<1x16xf32>
    %29 = vector.broadcast %28 : vector<1x16xi1> to vector<16x16xi1>
    %30 = arith.andi %25, %29 : vector<16x16xi1>
    %cst_8 = arith.constant 0.000000e+00 : f32
    %cst_9 = arith.constant -1.000000e+09 : f32
    %31 = vector.broadcast %cst_8 : f32 to vector<16x16xf32>
    %32 = vector.broadcast %cst_9 : f32 to vector<16x16xf32>
    %33 = arith.select %30, %31, %32 : vector<16x16xi1>, vector<16x16xf32>
    %c0_10 = arith.constant 0 : index
    %c0_11 = arith.constant 0 : index
    %34 = vector.load %arg3[%c0_10, %c0_11] : memref<32x128xf32, #tpu.memory_space<vmem>>, vector<1x32xf32>
    %c1 = arith.constant 1 : index
    %c0_12 = arith.constant 0 : index
    %35 = vector.load %arg3[%c1, %c0_12] : memref<32x128xf32, #tpu.memory_space<vmem>>, vector<1x32xf32>
    %cst_13 = arith.constant dense<0.000000e+00> : vector<16xf32>
    %36 = vector.multi_reduction <add>, %0, %cst_13 [1] : vector<16x32xf32> to vector<16xf32>
    %37 = vector.shape_cast %36 : vector<16xf32> to vector<16x1xf32>
    %cst_14 = arith.constant 3.200000e+01 : f32
    %38 = vector.broadcast %cst_14 : f32 to vector<16x1xf32>
    %39 = arith.divf %37, %38 : vector<16x1xf32>
    %40 = vector.broadcast %39 : vector<16x1xf32> to vector<16x32xf32>
    %41 = arith.subf %0, %40 : vector<16x32xf32>
    %42 = arith.mulf %41, %41 : vector<16x32xf32>
    %cst_15 = arith.constant dense<0.000000e+00> : vector<16xf32>
    %43 = vector.multi_reduction <add>, %42, %cst_15 [1] : vector<16x32xf32> to vector<16xf32>
    %44 = vector.shape_cast %43 : vector<16xf32> to vector<16x1xf32>
    %cst_16 = arith.constant 3.200000e+01 : f32
    %45 = vector.broadcast %cst_16 : f32 to vector<16x1xf32>
    %46 = arith.divf %44, %45 : vector<16x1xf32>
    %47 = vector.broadcast %39 : vector<16x1xf32> to vector<16x32xf32>
    %48 = arith.subf %0, %47 : vector<16x32xf32>
    %cst_17 = arith.constant 9.99999996E-13 : f32
    %49 = vector.broadcast %cst_17 : f32 to vector<16x1xf32>
    %50 = arith.addf %46, %49 : vector<16x1xf32>
    %51 = math.rsqrt %50 : vector<16x1xf32>
    %52 = vector.broadcast %51 : vector<16x1xf32> to vector<16x32xf32>
    %53 = arith.mulf %48, %52 : vector<16x32xf32>
    %54 = vector.broadcast %34 : vector<1x32xf32> to vector<16x32xf32>
    %55 = arith.mulf %53, %54 : vector<16x32xf32>
    %56 = vector.broadcast %35 : vector<1x32xf32> to vector<16x32xf32>
    %57 = arith.addf %55, %56 : vector<16x32xf32>
    %c0_18 = arith.constant 0 : index
    %c0_19 = arith.constant 0 : index
    %58 = vector.load %arg2[%c0_18, %c0_19] : memref<672x128xf32, #tpu.memory_space<vmem>>, vector<32x16xf32>
    %c3 = arith.constant 3 : index
    %c0_20 = arith.constant 0 : index
    %59 = vector.load %arg3[%c3, %c0_20] : memref<32x128xf32, #tpu.memory_space<vmem>>, vector<1x16xf32>
    %cst_21 = arith.constant dense<0.000000e+00> : vector<16x16xf32>
    %60 = tpu.matmul %57, %58, %cst_21 {dimension_numbers = #tpu.dot_dimension_numbers<[1], [0], [0], [1], [0, 0, 1, 1], [], []>} : vector<16x32xf32>, vector<32x16xf32>, vector<16x16xf32> -> vector<16x16xf32>
    %61 = vector.broadcast %59 : vector<1x16xf32> to vector<16x16xf32>
    %62 = arith.addf %60, %61 : vector<16x16xf32>
    %c32 = arith.constant 32 : index
    %c0_22 = arith.constant 0 : index
    %63 = vector.load %arg2[%c32, %c0_22] : memref<672x128xf32, #tpu.memory_space<vmem>>, vector<32x16xf32>
    %c4 = arith.constant 4 : index
    %c0_23 = arith.constant 0 : index
    %64 = vector.load %arg3[%c4, %c0_23] : memref<32x128xf32, #tpu.memory_space<vmem>>, vector<1x16xf32>
    %cst_24 = arith.constant dense<0.000000e+00> : vector<16x16xf32>
    %65 = tpu.matmul %57, %63, %cst_24 {dimension_numbers = #tpu.dot_dimension_numbers<[1], [0], [0], [1], [0, 0, 1, 1], [], []>} : vector<16x32xf32>, vector<32x16xf32>, vector<16x16xf32> -> vector<16x16xf32>
    %66 = vector.broadcast %64 : vector<1x16xf32> to vector<16x16xf32>
    %67 = arith.addf %65, %66 : vector<16x16xf32>
    %68 = vector.shape_cast %62 : vector<16x16xf32> to vector<1x16x16xf32>
    %69 = vector.shape_cast %67 : vector<16x16xf32> to vector<1x16x16xf32>
    %70 = tpu.concatenate %68, %69 in 0 : vector<1x16x16xf32>, vector<1x16x16xf32> -> vector<2x16x16xf32>
    %c64 = arith.constant 64 : index
    %c0_25 = arith.constant 0 : index
    %71 = vector.load %arg2[%c64, %c0_25] : memref<672x128xf32, #tpu.memory_space<vmem>>, vector<32x16xf32>
    %c5 = arith.constant 5 : index
    %c0_26 = arith.constant 0 : index
    %72 = vector.load %arg3[%c5, %c0_26] : memref<32x128xf32, #tpu.memory_space<vmem>>, vector<1x16xf32>
    %cst_27 = arith.constant dense<0.000000e+00> : vector<16x16xf32>
    %73 = tpu.matmul %57, %71, %cst_27 {dimension_numbers = #tpu.dot_dimension_numbers<[1], [0], [0], [1], [0, 0, 1, 1], [], []>} : vector<16x32xf32>, vector<32x16xf32>, vector<16x16xf32> -> vector<16x16xf32>
    %74 = vector.broadcast %72 : vector<1x16xf32> to vector<16x16xf32>
    %75 = arith.addf %73, %74 : vector<16x16xf32>
    %c96 = arith.constant 96 : index
    %c0_28 = arith.constant 0 : index
    %76 = vector.load %arg2[%c96, %c0_28] : memref<672x128xf32, #tpu.memory_space<vmem>>, vector<32x16xf32>
    %c6 = arith.constant 6 : index
    %c0_29 = arith.constant 0 : index
    %77 = vector.load %arg3[%c6, %c0_29] : memref<32x128xf32, #tpu.memory_space<vmem>>, vector<1x16xf32>
    %cst_30 = arith.constant dense<0.000000e+00> : vector<16x16xf32>
    %78 = tpu.matmul %57, %76, %cst_30 {dimension_numbers = #tpu.dot_dimension_numbers<[1], [0], [0], [1], [0, 0, 1, 1], [], []>} : vector<16x32xf32>, vector<32x16xf32>, vector<16x16xf32> -> vector<16x16xf32>
    %79 = vector.broadcast %77 : vector<1x16xf32> to vector<16x16xf32>
    %80 = arith.addf %78, %79 : vector<16x16xf32>
    %81 = vector.shape_cast %75 : vector<16x16xf32> to vector<1x16x16xf32>
    %82 = vector.shape_cast %80 : vector<16x16xf32> to vector<1x16x16xf32>
    %83 = tpu.concatenate %81, %82 in 0 : vector<1x16x16xf32>, vector<1x16x16xf32> -> vector<2x16x16xf32>
    %c128 = arith.constant 128 : index
    %c0_31 = arith.constant 0 : index
    %84 = vector.load %arg2[%c128, %c0_31] : memref<672x128xf32, #tpu.memory_space<vmem>>, vector<32x16xf32>
    %c7 = arith.constant 7 : index
    %c0_32 = arith.constant 0 : index
    %85 = vector.load %arg3[%c7, %c0_32] : memref<32x128xf32, #tpu.memory_space<vmem>>, vector<1x16xf32>
    %cst_33 = arith.constant dense<0.000000e+00> : vector<16x16xf32>
    %86 = tpu.matmul %57, %84, %cst_33 {dimension_numbers = #tpu.dot_dimension_numbers<[1], [0], [0], [1], [0, 0, 1, 1], [], []>} : vector<16x32xf32>, vector<32x16xf32>, vector<16x16xf32> -> vector<16x16xf32>
    %87 = vector.broadcast %85 : vector<1x16xf32> to vector<16x16xf32>
    %88 = arith.addf %86, %87 : vector<16x16xf32>
    %c160 = arith.constant 160 : index
    %c0_34 = arith.constant 0 : index
    %89 = vector.load %arg2[%c160, %c0_34] : memref<672x128xf32, #tpu.memory_space<vmem>>, vector<32x16xf32>
    %c8 = arith.constant 8 : index
    %c0_35 = arith.constant 0 : index
    %90 = vector.load %arg3[%c8, %c0_35] : memref<32x128xf32, #tpu.memory_space<vmem>>, vector<1x16xf32>
    %cst_36 = arith.constant dense<0.000000e+00> : vector<16x16xf32>
    %91 = tpu.matmul %57, %89, %cst_36 {dimension_numbers = #tpu.dot_dimension_numbers<[1], [0], [0], [1], [0, 0, 1, 1], [], []>} : vector<16x32xf32>, vector<32x16xf32>, vector<16x16xf32> -> vector<16x16xf32>
    %92 = vector.broadcast %90 : vector<1x16xf32> to vector<16x16xf32>
    %93 = arith.addf %91, %92 : vector<16x16xf32>
    %94 = vector.shape_cast %88 : vector<16x16xf32> to vector<1x16x16xf32>
    %95 = vector.shape_cast %93 : vector<16x16xf32> to vector<1x16x16xf32>
    %96 = tpu.concatenate %94, %95 in 0 : vector<1x16x16xf32>, vector<1x16x16xf32> -> vector<2x16x16xf32>
    "tpu.trace_start"() <{level = 10 : i32, message = "hsd,htd->hst"}> : () -> ()
    %cst_37 = arith.constant dense<0.000000e+00> : vector<2x16x16xf32>
    %97 = tpu.matmul %70, %83, %cst_37 {dimension_numbers = #tpu.dot_dimension_numbers<[2], [2], [1], [1], [0, 0, 0, 1, 1, 1], [0], [0]>} : vector<2x16x16xf32>, vector<2x16x16xf32>, vector<2x16x16xf32> -> vector<2x16x16xf32>
    "tpu.trace_stop"() : () -> ()
    %cst_38 = arith.constant 2.500000e-01 : f32
    %98 = vector.broadcast %cst_38 : f32 to vector<2x16x16xf32>
    %99 = arith.mulf %97, %98 : vector<2x16x16xf32>
    %100 = vector.shape_cast %33 : vector<16x16xf32> to vector<1x16x16xf32>
    %101 = vector.broadcast %100 : vector<1x16x16xf32> to vector<2x16x16xf32>
    %102 = arith.addf %99, %101 : vector<2x16x16xf32>
    %cst_39 = arith.constant dense<0xFF800000> : vector<2x16xf32>
    %103 = vector.multi_reduction <maximumf>, %102, %cst_39 [2] : vector<2x16x16xf32> to vector<2x16xf32>
    %104 = vector.shape_cast %103 : vector<2x16xf32> to vector<2x16x1xf32>
    %105 = vector.broadcast %104 : vector<2x16x1xf32> to vector<2x16x16xf32>
    %106 = arith.subf %102, %105 : vector<2x16x16xf32>
    %107 = math.exp %106 : vector<2x16x16xf32>
    %cst_40 = arith.constant dense<0.000000e+00> : vector<2x16xf32>
    %108 = vector.multi_reduction <add>, %107, %cst_40 [2] : vector<2x16x16xf32> to vector<2x16xf32>
    %109 = vector.shape_cast %108 : vector<2x16xf32> to vector<2x16x1xf32>
    "tpu.trace_start"() <{level = 10 : i32, message = "hst,htd->hsd"}> : () -> ()
    %cst_41 = arith.constant dense<0.000000e+00> : vector<2x16x16xf32>
    %110 = tpu.matmul %107, %96, %cst_41 {dimension_numbers = #tpu.dot_dimension_numbers<[2], [1], [1], [2], [0, 0, 0, 1, 1, 2], [0], [0]>} : vector<2x16x16xf32>, vector<2x16x16xf32>, vector<2x16x16xf32> -> vector<2x16x16xf32>
    "tpu.trace_stop"() : () -> ()
    %111 = vector.broadcast %109 : vector<2x16x1xf32> to vector<2x16x16xf32>
    %112 = arith.divf %110, %111 : vector<2x16x16xf32>
    %c9 = arith.constant 9 : index
    %c0_42 = arith.constant 0 : index
    %113 = vector.load %arg3[%c9, %c0_42] : memref<32x128xf32, #tpu.memory_space<vmem>>, vector<1x32xf32>
    %114 = vector.extract_strided_slice %112 {offsets = [0, 0, 0], sizes = [1, 16, 16], strides = [1, 1, 1]} : vector<2x16x16xf32> to vector<1x16x16xf32>
    %115 = vector.shape_cast %114 : vector<1x16x16xf32> to vector<16x16xf32>
    %c192 = arith.constant 192 : index
    %c0_43 = arith.constant 0 : index
    %116 = vector.load %arg2[%c192, %c0_43] : memref<672x128xf32, #tpu.memory_space<vmem>>, vector<16x32xf32>
    %cst_44 = arith.constant dense<0.000000e+00> : vector<16x32xf32>
    %117 = tpu.matmul %115, %116, %cst_44 {dimension_numbers = #tpu.dot_dimension_numbers<[1], [0], [0], [1], [0, 0, 1, 1], [], []>} : vector<16x16xf32>, vector<16x32xf32>, vector<16x32xf32> -> vector<16x32xf32>
    %118 = vector.broadcast %113 : vector<1x32xf32> to vector<16x32xf32>
    %119 = arith.addf %118, %117 : vector<16x32xf32>
    %120 = vector.extract_strided_slice %112 {offsets = [1, 0, 0], sizes = [1, 16, 16], strides = [1, 1, 1]} : vector<2x16x16xf32> to vector<1x16x16xf32>
    %121 = vector.shape_cast %120 : vector<1x16x16xf32> to vector<16x16xf32>
    %c208 = arith.constant 208 : index
    %c0_45 = arith.constant 0 : index
    %122 = vector.load %arg2[%c208, %c0_45] : memref<672x128xf32, #tpu.memory_space<vmem>>, vector<16x32xf32>
    %cst_46 = arith.constant dense<0.000000e+00> : vector<16x32xf32>
    %123 = tpu.matmul %121, %122, %cst_46 {dimension_numbers = #tpu.dot_dimension_numbers<[1], [0], [0], [1], [0, 0, 1, 1], [], []>} : vector<16x16xf32>, vector<16x32xf32>, vector<16x32xf32> -> vector<16x32xf32>
    %124 = arith.addf %119, %123 : vector<16x32xf32>
    %125 = arith.addf %57, %124 : vector<16x32xf32>
    %c10 = arith.constant 10 : index
    %c0_47 = arith.constant 0 : index
    %126 = vector.load %arg3[%c10, %c0_47] : memref<32x128xf32, #tpu.memory_space<vmem>>, vector<1x32xf32>
    %c11 = arith.constant 11 : index
    %c0_48 = arith.constant 0 : index
    %127 = vector.load %arg3[%c11, %c0_48] : memref<32x128xf32, #tpu.memory_space<vmem>>, vector<1x32xf32>
    %cst_49 = arith.constant dense<0.000000e+00> : vector<16xf32>
    %128 = vector.multi_reduction <add>, %125, %cst_49 [1] : vector<16x32xf32> to vector<16xf32>
    %129 = vector.shape_cast %128 : vector<16xf32> to vector<16x1xf32>
    %cst_50 = arith.constant 3.200000e+01 : f32
    %130 = vector.broadcast %cst_50 : f32 to vector<16x1xf32>
    %131 = arith.divf %129, %130 : vector<16x1xf32>
    %132 = vector.broadcast %131 : vector<16x1xf32> to vector<16x32xf32>
    %133 = arith.subf %125, %132 : vector<16x32xf32>
    %134 = arith.mulf %133, %133 : vector<16x32xf32>
    %cst_51 = arith.constant dense<0.000000e+00> : vector<16xf32>
    %135 = vector.multi_reduction <add>, %134, %cst_51 [1] : vector<16x32xf32> to vector<16xf32>
    %136 = vector.shape_cast %135 : vector<16xf32> to vector<16x1xf32>
    %cst_52 = arith.constant 3.200000e+01 : f32
    %137 = vector.broadcast %cst_52 : f32 to vector<16x1xf32>
    %138 = arith.divf %136, %137 : vector<16x1xf32>
    %139 = vector.broadcast %131 : vector<16x1xf32> to vector<16x32xf32>
    %140 = arith.subf %125, %139 : vector<16x32xf32>
    %cst_53 = arith.constant 9.99999996E-13 : f32
    %141 = vector.broadcast %cst_53 : f32 to vector<16x1xf32>
    %142 = arith.addf %138, %141 : vector<16x1xf32>
    %143 = math.rsqrt %142 : vector<16x1xf32>
    %144 = vector.broadcast %143 : vector<16x1xf32> to vector<16x32xf32>
    %145 = arith.mulf %140, %144 : vector<16x32xf32>
    %146 = vector.broadcast %126 : vector<1x32xf32> to vector<16x32xf32>
    %147 = arith.mulf %145, %146 : vector<16x32xf32>
    %148 = vector.broadcast %127 : vector<1x32xf32> to vector<16x32xf32>
    %149 = arith.addf %147, %148 : vector<16x32xf32>
    %c224 = arith.constant 224 : index
    %c0_54 = arith.constant 0 : index
    %150 = vector.load %arg2[%c224, %c0_54] : memref<672x128xf32, #tpu.memory_space<vmem>>, vector<32x64xf32>
    %c12 = arith.constant 12 : index
    %c0_55 = arith.constant 0 : index
    %151 = vector.load %arg3[%c12, %c0_55] : memref<32x128xf32, #tpu.memory_space<vmem>>, vector<1x64xf32>
    %cst_56 = arith.constant dense<0.000000e+00> : vector<16x64xf32>
    %152 = tpu.matmul %149, %150, %cst_56 {dimension_numbers = #tpu.dot_dimension_numbers<[1], [0], [0], [1], [0, 0, 1, 1], [], []>} : vector<16x32xf32>, vector<32x64xf32>, vector<16x64xf32> -> vector<16x64xf32>
    %153 = vector.broadcast %151 : vector<1x64xf32> to vector<16x64xf32>
    %154 = arith.addf %152, %153 : vector<16x64xf32>
    %cst_57 = arith.constant 5.000000e-01 : f32
    %155 = vector.broadcast %cst_57 : f32 to vector<16x64xf32>
    %156 = arith.mulf %155, %154 : vector<16x64xf32>
    %cst_58 = arith.constant 4.471500e-02 : f32
    %157 = vector.broadcast %cst_58 : f32 to vector<16x64xf32>
    %158 = arith.mulf %157, %154 : vector<16x64xf32>
    %159 = arith.mulf %158, %154 : vector<16x64xf32>
    %160 = arith.mulf %159, %154 : vector<16x64xf32>
    %161 = arith.addf %154, %160 : vector<16x64xf32>
    %cst_59 = arith.constant 0.797884583 : f32
    %162 = vector.broadcast %cst_59 : f32 to vector<16x64xf32>
    %163 = arith.mulf %162, %161 : vector<16x64xf32>
    %164 = math.tanh %163 : vector<16x64xf32>
    %cst_60 = arith.constant 1.000000e+00 : f32
    %165 = vector.broadcast %cst_60 : f32 to vector<16x64xf32>
    %166 = arith.addf %165, %164 : vector<16x64xf32>
    %167 = arith.mulf %156, %166 : vector<16x64xf32>
    %c256 = arith.constant 256 : index
    %c0_61 = arith.constant 0 : index
    %168 = vector.load %arg2[%c256, %c0_61] : memref<672x128xf32, #tpu.memory_space<vmem>>, vector<64x32xf32>
    %c13 = arith.constant 13 : index
    %c0_62 = arith.constant 0 : index
    %169 = vector.load %arg3[%c13, %c0_62] : memref<32x128xf32, #tpu.memory_space<vmem>>, vector<1x32xf32>
    %cst_63 = arith.constant dense<0.000000e+00> : vector<16x32xf32>
    %170 = tpu.matmul %167, %168, %cst_63 {dimension_numbers = #tpu.dot_dimension_numbers<[1], [0], [0], [1], [0, 0, 1, 1], [], []>} : vector<16x64xf32>, vector<64x32xf32>, vector<16x32xf32> -> vector<16x32xf32>
    %171 = vector.broadcast %169 : vector<1x32xf32> to vector<16x32xf32>
    %172 = arith.addf %170, %171 : vector<16x32xf32>
    %173 = arith.addf %149, %172 : vector<16x32xf32>
    %c14 = arith.constant 14 : index
    %c0_64 = arith.constant 0 : index
    %174 = vector.load %arg3[%c14, %c0_64] : memref<32x128xf32, #tpu.memory_space<vmem>>, vector<1x32xf32>
    %c15 = arith.constant 15 : index
    %c0_65 = arith.constant 0 : index
    %175 = vector.load %arg3[%c15, %c0_65] : memref<32x128xf32, #tpu.memory_space<vmem>>, vector<1x32xf32>
    %cst_66 = arith.constant dense<0.000000e+00> : vector<16xf32>
    %176 = vector.multi_reduction <add>, %173, %cst_66 [1] : vector<16x32xf32> to vector<16xf32>
    %177 = vector.shape_cast %176 : vector<16xf32> to vector<16x1xf32>
    %cst_67 = arith.constant 3.200000e+01 : f32
    %178 = vector.broadcast %cst_67 : f32 to vector<16x1xf32>
    %179 = arith.divf %177, %178 : vector<16x1xf32>
    %180 = vector.broadcast %179 : vector<16x1xf32> to vector<16x32xf32>
    %181 = arith.subf %173, %180 : vector<16x32xf32>
    %182 = arith.mulf %181, %181 : vector<16x32xf32>
    %cst_68 = arith.constant dense<0.000000e+00> : vector<16xf32>
    %183 = vector.multi_reduction <add>, %182, %cst_68 [1] : vector<16x32xf32> to vector<16xf32>
    %184 = vector.shape_cast %183 : vector<16xf32> to vector<16x1xf32>
    %cst_69 = arith.constant 3.200000e+01 : f32
    %185 = vector.broadcast %cst_69 : f32 to vector<16x1xf32>
    %186 = arith.divf %184, %185 : vector<16x1xf32>
    %187 = vector.broadcast %179 : vector<16x1xf32> to vector<16x32xf32>
    %188 = arith.subf %173, %187 : vector<16x32xf32>
    %cst_70 = arith.constant 9.99999996E-13 : f32
    %189 = vector.broadcast %cst_70 : f32 to vector<16x1xf32>
    %190 = arith.addf %186, %189 : vector<16x1xf32>
    %191 = math.rsqrt %190 : vector<16x1xf32>
    %192 = vector.broadcast %191 : vector<16x1xf32> to vector<16x32xf32>
    %193 = arith.mulf %188, %192 : vector<16x32xf32>
    %194 = vector.broadcast %174 : vector<1x32xf32> to vector<16x32xf32>
    %195 = arith.mulf %193, %194 : vector<16x32xf32>
    %196 = vector.broadcast %175 : vector<1x32xf32> to vector<16x32xf32>
    %197 = arith.addf %195, %196 : vector<16x32xf32>
    %c320 = arith.constant 320 : index
    %c0_71 = arith.constant 0 : index
    %198 = vector.load %arg2[%c320, %c0_71] : memref<672x128xf32, #tpu.memory_space<vmem>>, vector<32x16xf32>
    %c16 = arith.constant 16 : index
    %c0_72 = arith.constant 0 : index
    %199 = vector.load %arg3[%c16, %c0_72] : memref<32x128xf32, #tpu.memory_space<vmem>>, vector<1x16xf32>
    %cst_73 = arith.constant dense<0.000000e+00> : vector<16x16xf32>
    %200 = tpu.matmul %197, %198, %cst_73 {dimension_numbers = #tpu.dot_dimension_numbers<[1], [0], [0], [1], [0, 0, 1, 1], [], []>} : vector<16x32xf32>, vector<32x16xf32>, vector<16x16xf32> -> vector<16x16xf32>
    %201 = vector.broadcast %199 : vector<1x16xf32> to vector<16x16xf32>
    %202 = arith.addf %200, %201 : vector<16x16xf32>
    %c352 = arith.constant 352 : index
    %c0_74 = arith.constant 0 : index
    %203 = vector.load %arg2[%c352, %c0_74] : memref<672x128xf32, #tpu.memory_space<vmem>>, vector<32x16xf32>
    %c17 = arith.constant 17 : index
    %c0_75 = arith.constant 0 : index
    %204 = vector.load %arg3[%c17, %c0_75] : memref<32x128xf32, #tpu.memory_space<vmem>>, vector<1x16xf32>
    %cst_76 = arith.constant dense<0.000000e+00> : vector<16x16xf32>
    %205 = tpu.matmul %197, %203, %cst_76 {dimension_numbers = #tpu.dot_dimension_numbers<[1], [0], [0], [1], [0, 0, 1, 1], [], []>} : vector<16x32xf32>, vector<32x16xf32>, vector<16x16xf32> -> vector<16x16xf32>
    %206 = vector.broadcast %204 : vector<1x16xf32> to vector<16x16xf32>
    %207 = arith.addf %205, %206 : vector<16x16xf32>
    %208 = vector.shape_cast %202 : vector<16x16xf32> to vector<1x16x16xf32>
    %209 = vector.shape_cast %207 : vector<16x16xf32> to vector<1x16x16xf32>
    %210 = tpu.concatenate %208, %209 in 0 : vector<1x16x16xf32>, vector<1x16x16xf32> -> vector<2x16x16xf32>
    %c384 = arith.constant 384 : index
    %c0_77 = arith.constant 0 : index
    %211 = vector.load %arg2[%c384, %c0_77] : memref<672x128xf32, #tpu.memory_space<vmem>>, vector<32x16xf32>
    %c18 = arith.constant 18 : index
    %c0_78 = arith.constant 0 : index
    %212 = vector.load %arg3[%c18, %c0_78] : memref<32x128xf32, #tpu.memory_space<vmem>>, vector<1x16xf32>
    %cst_79 = arith.constant dense<0.000000e+00> : vector<16x16xf32>
    %213 = tpu.matmul %197, %211, %cst_79 {dimension_numbers = #tpu.dot_dimension_numbers<[1], [0], [0], [1], [0, 0, 1, 1], [], []>} : vector<16x32xf32>, vector<32x16xf32>, vector<16x16xf32> -> vector<16x16xf32>
    %214 = vector.broadcast %212 : vector<1x16xf32> to vector<16x16xf32>
    %215 = arith.addf %213, %214 : vector<16x16xf32>
    %c416 = arith.constant 416 : index
    %c0_80 = arith.constant 0 : index
    %216 = vector.load %arg2[%c416, %c0_80] : memref<672x128xf32, #tpu.memory_space<vmem>>, vector<32x16xf32>
    %c19 = arith.constant 19 : index
    %c0_81 = arith.constant 0 : index
    %217 = vector.load %arg3[%c19, %c0_81] : memref<32x128xf32, #tpu.memory_space<vmem>>, vector<1x16xf32>
    %cst_82 = arith.constant dense<0.000000e+00> : vector<16x16xf32>
    %218 = tpu.matmul %197, %216, %cst_82 {dimension_numbers = #tpu.dot_dimension_numbers<[1], [0], [0], [1], [0, 0, 1, 1], [], []>} : vector<16x32xf32>, vector<32x16xf32>, vector<16x16xf32> -> vector<16x16xf32>
    %219 = vector.broadcast %217 : vector<1x16xf32> to vector<16x16xf32>
    %220 = arith.addf %218, %219 : vector<16x16xf32>
    %221 = vector.shape_cast %215 : vector<16x16xf32> to vector<1x16x16xf32>
    %222 = vector.shape_cast %220 : vector<16x16xf32> to vector<1x16x16xf32>
    %223 = tpu.concatenate %221, %222 in 0 : vector<1x16x16xf32>, vector<1x16x16xf32> -> vector<2x16x16xf32>
    %c448 = arith.constant 448 : index
    %c0_83 = arith.constant 0 : index
    %224 = vector.load %arg2[%c448, %c0_83] : memref<672x128xf32, #tpu.memory_space<vmem>>, vector<32x16xf32>
    %c20 = arith.constant 20 : index
    %c0_84 = arith.constant 0 : index
    %225 = vector.load %arg3[%c20, %c0_84] : memref<32x128xf32, #tpu.memory_space<vmem>>, vector<1x16xf32>
    %cst_85 = arith.constant dense<0.000000e+00> : vector<16x16xf32>
    %226 = tpu.matmul %197, %224, %cst_85 {dimension_numbers = #tpu.dot_dimension_numbers<[1], [0], [0], [1], [0, 0, 1, 1], [], []>} : vector<16x32xf32>, vector<32x16xf32>, vector<16x16xf32> -> vector<16x16xf32>
    %227 = vector.broadcast %225 : vector<1x16xf32> to vector<16x16xf32>
    %228 = arith.addf %226, %227 : vector<16x16xf32>
    %c480 = arith.constant 480 : index
    %c0_86 = arith.constant 0 : index
    %229 = vector.load %arg2[%c480, %c0_86] : memref<672x128xf32, #tpu.memory_space<vmem>>, vector<32x16xf32>
    %c21 = arith.constant 21 : index
    %c0_87 = arith.constant 0 : index
    %230 = vector.load %arg3[%c21, %c0_87] : memref<32x128xf32, #tpu.memory_space<vmem>>, vector<1x16xf32>
    %cst_88 = arith.constant dense<0.000000e+00> : vector<16x16xf32>
    %231 = tpu.matmul %197, %229, %cst_88 {dimension_numbers = #tpu.dot_dimension_numbers<[1], [0], [0], [1], [0, 0, 1, 1], [], []>} : vector<16x32xf32>, vector<32x16xf32>, vector<16x16xf32> -> vector<16x16xf32>
    %232 = vector.broadcast %230 : vector<1x16xf32> to vector<16x16xf32>
    %233 = arith.addf %231, %232 : vector<16x16xf32>
    %234 = vector.shape_cast %228 : vector<16x16xf32> to vector<1x16x16xf32>
    %235 = vector.shape_cast %233 : vector<16x16xf32> to vector<1x16x16xf32>
    %236 = tpu.concatenate %234, %235 in 0 : vector<1x16x16xf32>, vector<1x16x16xf32> -> vector<2x16x16xf32>
    "tpu.trace_start"() <{level = 10 : i32, message = "hsd,htd->hst"}> : () -> ()
    %cst_89 = arith.constant dense<0.000000e+00> : vector<2x16x16xf32>
    %237 = tpu.matmul %210, %223, %cst_89 {dimension_numbers = #tpu.dot_dimension_numbers<[2], [2], [1], [1], [0, 0, 0, 1, 1, 1], [0], [0]>} : vector<2x16x16xf32>, vector<2x16x16xf32>, vector<2x16x16xf32> -> vector<2x16x16xf32>
    "tpu.trace_stop"() : () -> ()
    %cst_90 = arith.constant 2.500000e-01 : f32
    %238 = vector.broadcast %cst_90 : f32 to vector<2x16x16xf32>
    %239 = arith.mulf %237, %238 : vector<2x16x16xf32>
    %240 = vector.shape_cast %33 : vector<16x16xf32> to vector<1x16x16xf32>
    %241 = vector.broadcast %240 : vector<1x16x16xf32> to vector<2x16x16xf32>
    %242 = arith.addf %239, %241 : vector<2x16x16xf32>
    %cst_91 = arith.constant dense<0xFF800000> : vector<2x16xf32>
    %243 = vector.multi_reduction <maximumf>, %242, %cst_91 [2] : vector<2x16x16xf32> to vector<2x16xf32>
    %244 = vector.shape_cast %243 : vector<2x16xf32> to vector<2x16x1xf32>
    %245 = vector.broadcast %244 : vector<2x16x1xf32> to vector<2x16x16xf32>
    %246 = arith.subf %242, %245 : vector<2x16x16xf32>
    %247 = math.exp %246 : vector<2x16x16xf32>
    %cst_92 = arith.constant dense<0.000000e+00> : vector<2x16xf32>
    %248 = vector.multi_reduction <add>, %247, %cst_92 [2] : vector<2x16x16xf32> to vector<2x16xf32>
    %249 = vector.shape_cast %248 : vector<2x16xf32> to vector<2x16x1xf32>
    "tpu.trace_start"() <{level = 10 : i32, message = "hst,htd->hsd"}> : () -> ()
    %cst_93 = arith.constant dense<0.000000e+00> : vector<2x16x16xf32>
    %250 = tpu.matmul %247, %236, %cst_93 {dimension_numbers = #tpu.dot_dimension_numbers<[2], [1], [1], [2], [0, 0, 0, 1, 1, 2], [0], [0]>} : vector<2x16x16xf32>, vector<2x16x16xf32>, vector<2x16x16xf32> -> vector<2x16x16xf32>
    "tpu.trace_stop"() : () -> ()
    %251 = vector.broadcast %249 : vector<2x16x1xf32> to vector<2x16x16xf32>
    %252 = arith.divf %250, %251 : vector<2x16x16xf32>
    %c22 = arith.constant 22 : index
    %c0_94 = arith.constant 0 : index
    %253 = vector.load %arg3[%c22, %c0_94] : memref<32x128xf32, #tpu.memory_space<vmem>>, vector<1x32xf32>
    %254 = vector.extract_strided_slice %252 {offsets = [0, 0, 0], sizes = [1, 16, 16], strides = [1, 1, 1]} : vector<2x16x16xf32> to vector<1x16x16xf32>
    %255 = vector.shape_cast %254 : vector<1x16x16xf32> to vector<16x16xf32>
    %c512 = arith.constant 512 : index
    %c0_95 = arith.constant 0 : index
    %256 = vector.load %arg2[%c512, %c0_95] : memref<672x128xf32, #tpu.memory_space<vmem>>, vector<16x32xf32>
    %cst_96 = arith.constant dense<0.000000e+00> : vector<16x32xf32>
    %257 = tpu.matmul %255, %256, %cst_96 {dimension_numbers = #tpu.dot_dimension_numbers<[1], [0], [0], [1], [0, 0, 1, 1], [], []>} : vector<16x16xf32>, vector<16x32xf32>, vector<16x32xf32> -> vector<16x32xf32>
    %258 = vector.broadcast %253 : vector<1x32xf32> to vector<16x32xf32>
    %259 = arith.addf %258, %257 : vector<16x32xf32>
    %260 = vector.extract_strided_slice %252 {offsets = [1, 0, 0], sizes = [1, 16, 16], strides = [1, 1, 1]} : vector<2x16x16xf32> to vector<1x16x16xf32>
    %261 = vector.shape_cast %260 : vector<1x16x16xf32> to vector<16x16xf32>
    %c528 = arith.constant 528 : index
    %c0_97 = arith.constant 0 : index
    %262 = vector.load %arg2[%c528, %c0_97] : memref<672x128xf32, #tpu.memory_space<vmem>>, vector<16x32xf32>
    %cst_98 = arith.constant dense<0.000000e+00> : vector<16x32xf32>
    %263 = tpu.matmul %261, %262, %cst_98 {dimension_numbers = #tpu.dot_dimension_numbers<[1], [0], [0], [1], [0, 0, 1, 1], [], []>} : vector<16x16xf32>, vector<16x32xf32>, vector<16x32xf32> -> vector<16x32xf32>
    %264 = arith.addf %259, %263 : vector<16x32xf32>
    %265 = arith.addf %197, %264 : vector<16x32xf32>
    %c23 = arith.constant 23 : index
    %c0_99 = arith.constant 0 : index
    %266 = vector.load %arg3[%c23, %c0_99] : memref<32x128xf32, #tpu.memory_space<vmem>>, vector<1x32xf32>
    %c24 = arith.constant 24 : index
    %c0_100 = arith.constant 0 : index
    %267 = vector.load %arg3[%c24, %c0_100] : memref<32x128xf32, #tpu.memory_space<vmem>>, vector<1x32xf32>
    %cst_101 = arith.constant dense<0.000000e+00> : vector<16xf32>
    %268 = vector.multi_reduction <add>, %265, %cst_101 [1] : vector<16x32xf32> to vector<16xf32>
    %269 = vector.shape_cast %268 : vector<16xf32> to vector<16x1xf32>
    %cst_102 = arith.constant 3.200000e+01 : f32
    %270 = vector.broadcast %cst_102 : f32 to vector<16x1xf32>
    %271 = arith.divf %269, %270 : vector<16x1xf32>
    %272 = vector.broadcast %271 : vector<16x1xf32> to vector<16x32xf32>
    %273 = arith.subf %265, %272 : vector<16x32xf32>
    %274 = arith.mulf %273, %273 : vector<16x32xf32>
    %cst_103 = arith.constant dense<0.000000e+00> : vector<16xf32>
    %275 = vector.multi_reduction <add>, %274, %cst_103 [1] : vector<16x32xf32> to vector<16xf32>
    %276 = vector.shape_cast %275 : vector<16xf32> to vector<16x1xf32>
    %cst_104 = arith.constant 3.200000e+01 : f32
    %277 = vector.broadcast %cst_104 : f32 to vector<16x1xf32>
    %278 = arith.divf %276, %277 : vector<16x1xf32>
    %279 = vector.broadcast %271 : vector<16x1xf32> to vector<16x32xf32>
    %280 = arith.subf %265, %279 : vector<16x32xf32>
    %cst_105 = arith.constant 9.99999996E-13 : f32
    %281 = vector.broadcast %cst_105 : f32 to vector<16x1xf32>
    %282 = arith.addf %278, %281 : vector<16x1xf32>
    %283 = math.rsqrt %282 : vector<16x1xf32>
    %284 = vector.broadcast %283 : vector<16x1xf32> to vector<16x32xf32>
    %285 = arith.mulf %280, %284 : vector<16x32xf32>
    %286 = vector.broadcast %266 : vector<1x32xf32> to vector<16x32xf32>
    %287 = arith.mulf %285, %286 : vector<16x32xf32>
    %288 = vector.broadcast %267 : vector<1x32xf32> to vector<16x32xf32>
    %289 = arith.addf %287, %288 : vector<16x32xf32>
    %c544 = arith.constant 544 : index
    %c0_106 = arith.constant 0 : index
    %290 = vector.load %arg2[%c544, %c0_106] : memref<672x128xf32, #tpu.memory_space<vmem>>, vector<32x64xf32>
    %c25 = arith.constant 25 : index
    %c0_107 = arith.constant 0 : index
    %291 = vector.load %arg3[%c25, %c0_107] : memref<32x128xf32, #tpu.memory_space<vmem>>, vector<1x64xf32>
    %cst_108 = arith.constant dense<0.000000e+00> : vector<16x64xf32>
    %292 = tpu.matmul %289, %290, %cst_108 {dimension_numbers = #tpu.dot_dimension_numbers<[1], [0], [0], [1], [0, 0, 1, 1], [], []>} : vector<16x32xf32>, vector<32x64xf32>, vector<16x64xf32> -> vector<16x64xf32>
    %293 = vector.broadcast %291 : vector<1x64xf32> to vector<16x64xf32>
    %294 = arith.addf %292, %293 : vector<16x64xf32>
    %cst_109 = arith.constant 5.000000e-01 : f32
    %295 = vector.broadcast %cst_109 : f32 to vector<16x64xf32>
    %296 = arith.mulf %295, %294 : vector<16x64xf32>
    %cst_110 = arith.constant 4.471500e-02 : f32
    %297 = vector.broadcast %cst_110 : f32 to vector<16x64xf32>
    %298 = arith.mulf %297, %294 : vector<16x64xf32>
    %299 = arith.mulf %298, %294 : vector<16x64xf32>
    %300 = arith.mulf %299, %294 : vector<16x64xf32>
    %301 = arith.addf %294, %300 : vector<16x64xf32>
    %cst_111 = arith.constant 0.797884583 : f32
    %302 = vector.broadcast %cst_111 : f32 to vector<16x64xf32>
    %303 = arith.mulf %302, %301 : vector<16x64xf32>
    %304 = math.tanh %303 : vector<16x64xf32>
    %cst_112 = arith.constant 1.000000e+00 : f32
    %305 = vector.broadcast %cst_112 : f32 to vector<16x64xf32>
    %306 = arith.addf %305, %304 : vector<16x64xf32>
    %307 = arith.mulf %296, %306 : vector<16x64xf32>
    %c576 = arith.constant 576 : index
    %c0_113 = arith.constant 0 : index
    %308 = vector.load %arg2[%c576, %c0_113] : memref<672x128xf32, #tpu.memory_space<vmem>>, vector<64x32xf32>
    %c26 = arith.constant 26 : index
    %c0_114 = arith.constant 0 : index
    %309 = vector.load %arg3[%c26, %c0_114] : memref<32x128xf32, #tpu.memory_space<vmem>>, vector<1x32xf32>
    %cst_115 = arith.constant dense<0.000000e+00> : vector<16x32xf32>
    %310 = tpu.matmul %307, %308, %cst_115 {dimension_numbers = #tpu.dot_dimension_numbers<[1], [0], [0], [1], [0, 0, 1, 1], [], []>} : vector<16x64xf32>, vector<64x32xf32>, vector<16x32xf32> -> vector<16x32xf32>
    %311 = vector.broadcast %309 : vector<1x32xf32> to vector<16x32xf32>
    %312 = arith.addf %310, %311 : vector<16x32xf32>
    %313 = arith.addf %289, %312 : vector<16x32xf32>
    %c27 = arith.constant 27 : index
    %c0_116 = arith.constant 0 : index
    %314 = vector.load %arg3[%c27, %c0_116] : memref<32x128xf32, #tpu.memory_space<vmem>>, vector<1x32xf32>
    %c28 = arith.constant 28 : index
    %c0_117 = arith.constant 0 : index
    %315 = vector.load %arg3[%c28, %c0_117] : memref<32x128xf32, #tpu.memory_space<vmem>>, vector<1x32xf32>
    %cst_118 = arith.constant dense<0.000000e+00> : vector<16xf32>
    %316 = vector.multi_reduction <add>, %313, %cst_118 [1] : vector<16x32xf32> to vector<16xf32>
    %317 = vector.shape_cast %316 : vector<16xf32> to vector<16x1xf32>
    %cst_119 = arith.constant 3.200000e+01 : f32
    %318 = vector.broadcast %cst_119 : f32 to vector<16x1xf32>
    %319 = arith.divf %317, %318 : vector<16x1xf32>
    %320 = vector.broadcast %319 : vector<16x1xf32> to vector<16x32xf32>
    %321 = arith.subf %313, %320 : vector<16x32xf32>
    %322 = arith.mulf %321, %321 : vector<16x32xf32>
    %cst_120 = arith.constant dense<0.000000e+00> : vector<16xf32>
    %323 = vector.multi_reduction <add>, %322, %cst_120 [1] : vector<16x32xf32> to vector<16xf32>
    %324 = vector.shape_cast %323 : vector<16xf32> to vector<16x1xf32>
    %cst_121 = arith.constant 3.200000e+01 : f32
    %325 = vector.broadcast %cst_121 : f32 to vector<16x1xf32>
    %326 = arith.divf %324, %325 : vector<16x1xf32>
    %327 = vector.broadcast %319 : vector<16x1xf32> to vector<16x32xf32>
    %328 = arith.subf %313, %327 : vector<16x32xf32>
    %cst_122 = arith.constant 9.99999996E-13 : f32
    %329 = vector.broadcast %cst_122 : f32 to vector<16x1xf32>
    %330 = arith.addf %326, %329 : vector<16x1xf32>
    %331 = math.rsqrt %330 : vector<16x1xf32>
    %332 = vector.broadcast %331 : vector<16x1xf32> to vector<16x32xf32>
    %333 = arith.mulf %328, %332 : vector<16x32xf32>
    %334 = vector.broadcast %314 : vector<1x32xf32> to vector<16x32xf32>
    %335 = arith.mulf %333, %334 : vector<16x32xf32>
    %336 = vector.broadcast %315 : vector<1x32xf32> to vector<16x32xf32>
    %337 = arith.addf %335, %336 : vector<16x32xf32>
    %c640 = arith.constant 640 : index
    %c0_123 = arith.constant 0 : index
    %338 = vector.load %arg2[%c640, %c0_123] : memref<672x128xf32, #tpu.memory_space<vmem>>, vector<32x128xf32>
    %c2 = arith.constant 2 : index
    %c0_124 = arith.constant 0 : index
    %339 = vector.load %arg3[%c2, %c0_124] : memref<32x128xf32, #tpu.memory_space<vmem>>, vector<1x128xf32>
    %cst_125 = arith.constant dense<0.000000e+00> : vector<16x128xf32>
    %340 = tpu.matmul %337, %338, %cst_125 {dimension_numbers = #tpu.dot_dimension_numbers<[1], [0], [0], [1], [0, 0, 1, 1], [], []>} : vector<16x32xf32>, vector<32x128xf32>, vector<16x128xf32> -> vector<16x128xf32>
    %341 = vector.broadcast %339 : vector<1x128xf32> to vector<16x128xf32>
    %342 = arith.addf %340, %341 : vector<16x128xf32>
    %c0_126 = arith.constant 0 : index
    %c0_127 = arith.constant 0 : index
    %343 = vector.load %arg4[%c0_126, %c0_127] : memref<16x128xf32, #tpu.memory_space<vmem>>, vector<16x128xf32>
    tpu.vector_store %arg4[%c0_126, %c0_127], %342 {strides = array<i32>} : memref<16x128xf32, #tpu.memory_space<vmem>>, vector<16x128xf32>,
    return
  }
}

</mosaic_0001>

<llo_original>
// kernel: md_bio_forward.1
$region0: #{md_bio_forward.1}
  #allocation0 [shape = 'u32[]', space=smem, size = 0x4, offset = 0x4, fixed_abs, tag = 'smem constant byte address 0x4 - core index']
  #allocation1 [shape = 'u32[144,128]{1,0:T(1,128)}', space=vmem, size = 0x12000, scoped, tag = 'internal scratch']
  %s0 = inlined_call_operand.vmem [shape: f32[16,32], index: 0, kind: input, shape index: {}]
  %s1 = inlined_call_operand.vmem [shape: f32[1,16], index: 1, kind: input, shape index: {}]
  %s2 = inlined_call_operand.hbm [shape: f32[672,128], index: 2, kind: input, shape index: {}]
  %s3 = inlined_call_operand.vmem [shape: f32[32,128], index: 3, kind: input, shape index: {}]
  %s4 = inlined_call_operand.vmem [shape: f32[16,128], index: 4, kind: output, shape index: {}]
  %s5 = sld [smem:[#allocation0]]
  $region30: #{md_bio_forward.1} parent=0
    _
  %s7 = ssub.s32 1, %s5
  %s8 = scalar_select 0, %s7, %s5
  $region1: #{md_bio_forward.1} parent=0
    #allocation2 [shape = 'u8[344064]{0}', space=vmem, size = 0x54000, scoped, tag = 'input window, operand 2, single buffered']
    #allocation3 [shape = 's32[1]{0}', space=sflag, size = 0x4, scoped, tag = 'scoped memory for md_bio_forward.1']
    %9 = vsyncpa [#allocation3], 0
    // Predicated region
    $region2: #{md_bio_forward.1} parent=1 // pred_check
      _
    $region3: #{md_bio_forward.1} parent=1 // pred_check_branch
      %11 = sbr.rel (0) target = $region5
    $region4: #{md_bio_forward.1} parent=1 // pred_region
      _
    $region5: #{md_bio_forward.1} parent=1 // pred_fallthru
      _
    // Predicated region
    $region6: #{md_bio_forward.1} parent=1 // pred_check
      _
    $region7: #{md_bio_forward.1} parent=1 // pred_check_branch
      %13 = sbr.rel (0) target = $region9
    $region8: #{md_bio_forward.1} parent=1 // pred_region
      _
    $region9: #{md_bio_forward.1} parent=1 // pred_fallthru
      _
    // Predicated region
    $region10: #{md_bio_forward.1} parent=1 // pred_check
      _
    $region11: #{md_bio_forward.1} parent=1 // pred_check_branch
      %15 = sbr.rel (0) target = $region13
    $region12: #{md_bio_forward.1} parent=1 // pred_region
      %s17 = ssub.s32 10752, 10752
      %18 = vsyncadd [#allocation3], %s17
      %s19 = sshll.u32 [#allocation2], 4
      %s20 = int_to_ptr.vmem [resolvable:$true] %s19
      %25 = dma.hbm_to_vmem [thread:$0]  %s2, 10752, %s20, [#allocation3], 128, 128, 8
    $region13: #{md_bio_forward.1} parent=1 // pred_fallthru
      _
    // Predicated region
    $region14: #{md_bio_forward.1} parent=1 // pred_check
      _
    $region15: #{md_bio_forward.1} parent=1 // pred_check_branch
      %27 = sbr.rel (0) target = $region17
    $region16: #{md_bio_forward.1} parent=1 // pred_region
      _
    $region17: #{md_bio_forward.1} parent=1 // pred_fallthru
      _
    // Predicated region
    $region18: #{md_bio_forward.1} parent=1 // pred_check
      _
    $region19: #{md_bio_forward.1} parent=1 // pred_check_branch
      %29 = sbr.rel (0) target = $region21
    $region20: #{md_bio_forward.1} parent=1 // pred_region
      %30 = dma.done [#allocation3], 10752
    $region21: #{md_bio_forward.1} parent=1 // pred_fallthru
      _
    %v31 = vld [vmem:[%s0] sm:$0xff]
    %v32 = vld [vmem:[%s0 + $0x8] sm:$0xff]
    %v33 = vlaneseq
    %v34 = vshrl.u32 %v33, 7
    %v35 = vadd.s32 %v34, 8
    %v36 = vlaneseq
    %v37 = vand.u32 %v36, 127
    %vm38 = vcmp.ge.s32.totalorder %v34, 0
    %vm39 = vcmp.ge.s32.totalorder %v35, 0
    %vm40 = vcmp.lt.s32.totalorder %v34, 8
    %vm41 = vcmp.lt.s32.totalorder %v35, 8
    %vm42 = vmand %vm38, %vm40
    %vm43 = vmand %vm39, %vm41
    %vm44 = vcmp.ge.s32.totalorder %v37, 0
    %vm45 = vcmp.lt.s32.totalorder %v37, 8
    %vm46 = vmand %vm44, %vm45
    %vm47 = vmand %vm42, %vm46
    %vm48 = vmand %vm43, %vm46
    %vm49 = vcmp.ge.s32.totalorder %v34, 8
    %vm50 = vcmp.ge.s32.totalorder %v35, 8
    %vm51 = vcmp.lt.s32.totalorder %v34, 16
    %vm52 = vcmp.lt.s32.totalorder %v35, 16
    %vm53 = vmand %vm49, %vm51
    %vm54 = vmand %vm50, %vm52
    %vm55 = vcmp.ge.s32.totalorder %v37, 8
    %vm56 = vcmp.lt.s32.totalorder %v37, 16
    %vm57 = vmand %vm55, %vm56
    %vm58 = vmand %vm53, %vm57
    %vm59 = vmand %vm54, %vm57
    %vm60 = vmor %vm47, %vm58
    %vm61 = vmor %vm48, %vm59
    %v62 = vld [vmem:[%s1] sm:$0x1]
    %vm63 = vcmp.gt.f32.partialorder %v62, 0.5
    %v64 = vsel %vm63, 1, 0
    %v65 = vlaneseq
    %v66 = vshrl.u32 %v65, 7
    %v67 = vsub.s32 0, %v66
    %v68 = vrot.slane %v64, %v67
    %vm69 = vcmp.eq.s32.totalorder %v68, 1
    %vm70 = vmand %vm60, %vm69
    %vm71 = vmand %vm61, %vm69
    %v72 = vsel %vm70, 0.0, -1e+09
    %v73 = vsel %vm71, 0.0, -1e+09
    %v74 = vld [vmem:[%s3] sm:$0x1]
    %v75 = vld [vmem:[%s3 + $0x1] sm:$0x1]
    %vm76 = vcmask 261120
    %v77 = vsel %vm76, %v31, 0.0
    %78 = vadd.xlane.f32.xlu0 %v77
    %v79 = vpop.xlane.xlu0 %78
    %v80 = vsel %vm76, %v32, 0.0
    %81 = vadd.xlane.f32.xlu0 %v80
    %v82 = vpop.xlane.xlu0 %81
    %v83 = vrcp.pop 32.0
    %v84 = vmul.f32 %v79, %v83
    %v85 = vmul.f32 %v82, %v83
    %v86 = vsub.f32 %v31, %v84
    %v87 = vsub.f32 %v32, %v85
    %v88 = vmul.f32 %v86, %v86
    %v89 = vmul.f32 %v87, %v87
    %v90 = vsel %vm76, %v88, 0.0
    %91 = vadd.xlane.f32.xlu0 %v90
    %v92 = vpop.xlane.xlu0 %91
    %v93 = vsel %vm76, %v89, 0.0
    %94 = vadd.xlane.f32.xlu0 %v93
    %v95 = vpop.xlane.xlu0 %94
    %v96 = vmul.f32 %v92, %v83
    %v97 = vmul.f32 %v95, %v83
    %v98 = vadd.f32 %v96, 1e-12
    %v99 = vadd.f32 %v97, 1e-12
    %v100 = vrsqrt.pop %v98
    %v101 = vrsqrt.pop %v99
    %v102 = vmul.f32 %v86, %v100
    %v103 = vmul.f32 %v87, %v101
    %v104 = vlaneseq
    %v105 = vshrl.u32 %v104, 7
    %v106 = vsub.s32 0, %v105
    %v107 = vrot.slane %v74, %v106
    %v108 = vmul.f32 %v102, %v107
    %v109 = vmul.f32 %v103, %v107
    %v110 = vlaneseq
    %v111 = vshrl.u32 %v110, 7
    %v112 = vsub.s32 0, %v111
    %v113 = vrot.slane %v75, %v112
    %v114 = vadd.f32 %v108, %v113
    %v115 = vadd.f32 %v109, %v113
    %v116 = vld [vmem:[#allocation2] sm:$0xff]
    %v117 = vld [vmem:[#allocation2 + $0x8] sm:$0xff]
    %v118 = vld [vmem:[#allocation2 + $0x10] sm:$0xff]
    %v119 = vld [vmem:[#allocation2 + $0x18] sm:$0xff]
    %v120 = vld [vmem:[%s3 + $0x3] sm:$0x1]
    %v121 = vlaneseq
    %v122 = vshrl.u32 %v121, 7
    %v123 = vsub.s32 0, %v122
    %v124 = vrot.slane %v120, %v123
    %v126 = vsel %vm76, %v114, 0
    %v129 = vsel %vm76, %v115, 0
    %131 = vmatprep.subr.mxu0 0.0
    %132 = vmatpush1.msra.mxu0 0.0
    %133 = vmatprep.subr.mxu0 0.0
    %134 = vmatpush1.msra.mxu0 0.0
    %135 = vmatprep.subr.mxu0 0.0
    %136 = vmatpush1.msra.mxu0 0.0
    %137 = vmatprep.subr.mxu0 0.0
    %138 = vmatpush1.msra.mxu0 0.0
    %139 = vmatprep.subr.mxu0 0.0
    %140 = vmatpush1.msra.mxu0 0.0
    %141 = vmatprep.subr.mxu0 0.0
    %142 = vmatpush1.msra.mxu0 0.0
    %143 = vmatprep.subr.mxu0 0.0
    %144 = vmatpush1.msra.mxu0 0.0
    %145 = vmatprep.subr.mxu0 0.0
    %146 = vmatpush1.msra.mxu0 0.0
    %147 = vmatprep.subr.mxu0 0.0
    %148 = vmatpush1.msra.mxu0 0.0
    %149 = vmatprep.subr.mxu0 0.0
    %150 = vmatpush1.msra.mxu0 0.0
    %151 = vmatprep.subr.mxu0 0.0
    %152 = vmatpush1.msra.mxu0 0.0
    %153 = vmatprep.subr.mxu0 0.0
    %154 = vmatpush1.msra.mxu0 0.0
    %155 = vmatprep.subr.mxu0 0.0
    %156 = vmatpush1.msra.mxu0 %v119
    %157 = vmatprep.subr.mxu0 0.0
    %158 = vmatpush1.msra.mxu0 %v118
    %159 = vmatprep.subr.mxu0 0.0
    %160 = vmatpush1.msra.mxu0 %v117
    %161 = vmatprep.subr.mxu0 0.0
    %162 = vmatpush1.msra.mxu0 %v116
    %163 = vmatprep.subr.mxu0 0.0
    %164 = vmatpush2.msra.mxu0 0.0
    %165 = vmatprep.subr.mxu0 0.0
    %166 = vmatpush2.msra.mxu0 0.0
    %167 = vmatprep.subr.mxu0 0.0
    %168 = vmatpush2.msra.mxu0 0.0
    %169 = vmatprep.subr.mxu0 0.0
    %170 = vmatpush2.msra.mxu0 0.0
    %171 = vmatprep.subr.mxu0 0.0
    %172 = vmatpush2.msra.mxu0 0.0
    %173 = vmatprep.subr.mxu0 0.0
    %174 = vmatpush2.msra.mxu0 0.0
    %175 = vmatprep.subr.mxu0 0.0
    %176 = vmatpush2.msra.mxu0 0.0
    %177 = vmatprep.subr.mxu0 0.0
    %178 = vmatpush2.msra.mxu0 0.0
    %179 = vmatprep.subr.mxu0 0.0
    %180 = vmatpush2.msra.mxu0 0.0
    %181 = vmatprep.subr.mxu0 0.0
    %182 = vmatpush2.msra.mxu0 0.0
    %183 = vmatprep.subr.mxu0 0.0
    %184 = vmatpush2.msra.mxu0 0.0
    %185 = vmatprep.subr.mxu0 0.0
    %186 = vmatpush2.msra.mxu0 0.0
    %187 = vmatprep.subr.mxu0 0.0
    %188 = vmatpush2.msra.mxu0 0.0
    %189 = vmatprep.subr.mxu0 0.0
    %190 = vmatpush2.msra.mxu0 0.0
    %191 = vmatprep.subr.mxu0 0.0
    %192 = vmatpush2.msra.mxu0 0.0
    %193 = vmatprep.subr.mxu0 0.0
    %194 = vmatpush2.msra.mxu0 0.0
    %195 = vmatprep.mubr.f32.mxu0 0.0
    %196 = vmatmul.mubr.f32.gmra.mxu0 %v126
    %v197 = vpop.f32.mrf.mxu0
    %v198 = vadd.f32 %v124, %v197
    %v199 = vpop.f32.mrf.mxu0
    %200 = vmatprep.mubr.f32.mxu0 0.0
    %201 = vmatmul.mubr.f32.gmra.mxu0 %v129
    %v202 = vpop.f32.mrf.mxu0
    %v203 = vadd.f32 %v124, %v202
    %v204 = vpop.f32.mrf.mxu0
    %205 = vdwg.mxu0
    %v206 = vld [vmem:[#allocation2 + $0x20] sm:$0xff]
    %v207 = vld [vmem:[#allocation2 + $0x28] sm:$0xff]
    %v208 = vld [vmem:[#allocation2 + $0x30] sm:$0xff]
    %v209 = vld [vmem:[#allocation2 + $0x38] sm:$0xff]
    %v210 = vld [vmem:[%s3 + $0x4] sm:$0x1]
    %v211 = vlaneseq
    %v212 = vshrl.u32 %v211, 7
    %v213 = vsub.s32 0, %v212
    %v214 = vrot.slane %v210, %v213
    %215 = vmatprep.subr.mxu0 0.0
    %216 = vmatpush1.msra.mxu0 0.0
    %217 = vmatprep.subr.mxu0 0.0
    %218 = vmatpush1.msra.mxu0 0.0
    %219 = vmatprep.subr.mxu0 0.0
    %220 = vmatpush1.msra.mxu0 0.0
    %221 = vmatprep.subr.mxu0 0.0
    %222 = vmatpush1.msra.mxu0 0.0
    %223 = vmatprep.subr.mxu0 0.0
    %224 = vmatpush1.msra.mxu0 0.0
    %225 = vmatprep.subr.mxu0 0.0
    %226 = vmatpush1.msra.mxu0 0.0
    %227 = vmatprep.subr.mxu0 0.0
    %228 = vmatpush1.msra.mxu0 0.0
    %229 = vmatprep.subr.mxu0 0.0
    %230 = vmatpush1.msra.mxu0 0.0
    %231 = vmatprep.subr.mxu0 0.0
    %232 = vmatpush1.msra.mxu0 0.0
    %233 = vmatprep.subr.mxu0 0.0
    %234 = vmatpush1.msra.mxu0 0.0
    %235 = vmatprep.subr.mxu0 0.0
    %236 = vmatpush1.msra.mxu0 0.0
    %237 = vmatprep.subr.mxu0 0.0
    %238 = vmatpush1.msra.mxu0 0.0
    %239 = vmatprep.subr.mxu0 0.0
    %240 = vmatpush1.msra.mxu0 %v209
    %241 = vmatprep.subr.mxu0 0.0
    %242 = vmatpush1.msra.mxu0 %v208
    %243 = vmatprep.subr.mxu0 0.0
    %244 = vmatpush1.msra.mxu0 %v207
    %245 = vmatprep.subr.mxu0 0.0
    %246 = vmatpush1.msra.mxu0 %v206
    %247 = vmatprep.subr.mxu0 0.0
    %248 = vmatpush2.msra.mxu0 0.0
    %249 = vmatprep.subr.mxu0 0.0
    %250 = vmatpush2.msra.mxu0 0.0
    %251 = vmatprep.subr.mxu0 0.0
    %252 = vmatpush2.msra.mxu0 0.0
    %253 = vmatprep.subr.mxu0 0.0
    %254 = vmatpush2.msra.mxu0 0.0
    %255 = vmatprep.subr.mxu0 0.0
    %256 = vmatpush2.msra.mxu0 0.0
    %257 = vmatprep.subr.mxu0 0.0
    %258 = vmatpush2.msra.mxu0 0.0
    %259 = vmatprep.subr.mxu0 0.0
    %260 = vmatpush2.msra.mxu0 0.0
    %261 = vmatprep.subr.mxu0 0.0
    %262 = vmatpush2.msra.mxu0 0.0
    %263 = vmatprep.subr.mxu0 0.0
    %264 = vmatpush2.msra.mxu0 0.0
    %265 = vmatprep.subr.mxu0 0.0
    %266 = vmatpush2.msra.mxu0 0.0
    %267 = vmatprep.subr.mxu0 0.0
    %268 = vmatpush2.msra.mxu0 0.0
    %269 = vmatprep.subr.mxu0 0.0
    %270 = vmatpush2.msra.mxu0 0.0
    %271 = vmatprep.subr.mxu0 0.0
    %272 = vmatpush2.msra.mxu0 0.0
    %273 = vmatprep.subr.mxu0 0.0
    %274 = vmatpush2.msra.mxu0 0.0
    %275 = vmatprep.subr.mxu0 0.0
    %276 = vmatpush2.msra.mxu0 0.0
    %277 = vmatprep.subr.mxu0 0.0
    %278 = vmatpush2.msra.mxu0 0.0
    %279 = vmatprep.mubr.f32.mxu0 0.0
    %280 = vmatmul.mubr.f32.gmra.mxu0 %v126
    %v281 = vpop.f32.mrf.mxu0
    %v282 = vadd.f32 %v214, %v281
    %v283 = vpop.f32.mrf.mxu0
    %284 = vmatprep.mubr.f32.mxu0 0.0
    %285 = vmatmul.mubr.f32.gmra.mxu0 %v129
    %v286 = vpop.f32.mrf.mxu0
    %v287 = vadd.f32 %v214, %v286
    %v288 = vpop.f32.mrf.mxu0
    %289 = vdwg.mxu0
    %v290 = vld [vmem:[#allocation2 + $0x40] sm:$0xff]
    %v291 = vld [vmem:[#allocation2 + $0x48] sm:$0xff]
    %v292 = vld [vmem:[#allocation2 + $0x50] sm:$0xff]
    %v293 = vld [vmem:[#allocation2 + $0x58] sm:$0xff]
    %v294 = vld [vmem:[%s3 + $0x5] sm:$0x1]
    %v295 = vlaneseq
    %v296 = vshrl.u32 %v295, 7
    %v297 = vsub.s32 0, %v296
    %v298 = vrot.slane %v294, %v297
    %299 = vmatprep.subr.mxu0 0.0
    %300 = vmatpush1.msra.mxu0 0.0
    %301 = vmatprep.subr.mxu0 0.0
    %302 = vmatpush1.msra.mxu0 0.0
    %303 = vmatprep.subr.mxu0 0.0
    %304 = vmatpush1.msra.mxu0 0.0
    %305 = vmatprep.subr.mxu0 0.0
    %306 = vmatpush1.msra.mxu0 0.0
    %307 = vmatprep.subr.mxu0 0.0
    %308 = vmatpush1.msra.mxu0 0.0
    %309 = vmatprep.subr.mxu0 0.0
    %310 = vmatpush1.msra.mxu0 0.0
    %311 = vmatprep.subr.mxu0 0.0
    %312 = vmatpush1.msra.mxu0 0.0
    %313 = vmatprep.subr.mxu0 0.0
    %314 = vmatpush1.msra.mxu0 0.0
    %315 = vmatprep.subr.mxu0 0.0
    %316 = vmatpush1.msra.mxu0 0.0
    %317 = vmatprep.subr.mxu0 0.0
    %318 = vmatpush1.msra.mxu0 0.0
    %319 = vmatprep.subr.mxu0 0.0
    %320 = vmatpush1.msra.mxu0 0.0
    %321 = vmatprep.subr.mxu0 0.0
    %322 = vmatpush1.msra.mxu0 0.0
    %323 = vmatprep.subr.mxu0 0.0
    %324 = vmatpush1.msra.mxu0 %v293
    %325 = vmatprep.subr.mxu0 0.0
    %326 = vmatpush1.msra.mxu0 %v292
    %327 = vmatprep.subr.mxu0 0.0
    %328 = vmatpush1.msra.mxu0 %v291
    %329 = vmatprep.subr.mxu0 0.0
    %330 = vmatpush1.msra.mxu0 %v290
    %331 = vmatprep.subr.mxu0 0.0
    %332 = vmatpush2.msra.mxu0 0.0
    %333 = vmatprep.subr.mxu0 0.0
    %334 = vmatpush2.msra.mxu0 0.0
    %335 = vmatprep.subr.mxu0 0.0
    %336 = vmatpush2.msra.mxu0 0.0
    %337 = vmatprep.subr.mxu0 0.0
    %338 = vmatpush2.msra.mxu0 0.0
    %339 = vmatprep.subr.mxu0 0.0
    %340 = vmatpush2.msra.mxu0 0.0
    %341 = vmatprep.subr.mxu0 0.0
    %342 = vmatpush2.msra.mxu0 0.0
    %343 = vmatprep.subr.mxu0 0.0
    %344 = vmatpush2.msra.mxu0 0.0
    %345 = vmatprep.subr.mxu0 0.0
    %346 = vmatpush2.msra.mxu0 0.0
    %347 = vmatprep.subr.mxu0 0.0
    %348 = vmatpush2.msra.mxu0 0.0
    %349 = vmatprep.subr.mxu0 0.0
    %350 = vmatpush2.msra.mxu0 0.0
    %351 = vmatprep.subr.mxu0 0.0
    %352 = vmatpush2.msra.mxu0 0.0
    %353 = vmatprep.subr.mxu0 0.0
    %354 = vmatpush2.msra.mxu0 0.0
    %355 = vmatprep.subr.mxu0 0.0
    %356 = vmatpush2.msra.mxu0 0.0
    %357 = vmatprep.subr.mxu0 0.0
    %358 = vmatpush2.msra.mxu0 0.0
    %359 = vmatprep.subr.mxu0 0.0
    %360 = vmatpush2.msra.mxu0 0.0
    %361 = vmatprep.subr.mxu0 0.0
    %362 = vmatpush2.msra.mxu0 0.0
    %363 = vmatprep.mubr.f32.mxu0 0.0
    %364 = vmatmul.mubr.f32.gmra.mxu0 %v126
    %v365 = vpop.f32.mrf.mxu0
    %v366 = vadd.f32 %v298, %v365
    %v367 = vpop.f32.mrf.mxu0
    %368 = vmatprep.mubr.f32.mxu0 0.0
    %369 = vmatmul.mubr.f32.gmra.mxu0 %v129
    %v370 = vpop.f32.mrf.mxu0
    %v371 = vadd.f32 %v298, %v370
    %v372 = vpop.f32.mrf.mxu0
    %373 = vdwg.mxu0
    %v374 = vld [vmem:[#allocation2 + $0x60] sm:$0xff]
    %v375 = vld [vmem:[#allocation2 + $0x68] sm:$0xff]
    %v376 = vld [vmem:[#allocation2 + $0x70] sm:$0xff]
    %v377 = vld [vmem:[#allocation2 + $0x78] sm:$0xff]
    %v378 = vld [vmem:[%s3 + $0x6] sm:$0x1]
    %v379 = vlaneseq
    %v380 = vshrl.u32 %v379, 7
    %v381 = vsub.s32 0, %v380
    %v382 = vrot.slane %v378, %v381
    %383 = vmatprep.subr.mxu0 0.0
    %384 = vmatpush1.msra.mxu0 0.0
    %385 = vmatprep.subr.mxu0 0.0
    %386 = vmatpush1.msra.mxu0 0.0
    %387 = vmatprep.subr.mxu0 0.0
    %388 = vmatpush1.msra.mxu0 0.0
    %389 = vmatprep.subr.mxu0 0.0
    %390 = vmatpush1.msra.mxu0 0.0
    %391 = vmatprep.subr.mxu0 0.0
    %392 = vmatpush1.msra.mxu0 0.0
    %393 = vmatprep.subr.mxu0 0.0
    %394 = vmatpush1.msra.mxu0 0.0
    %395 = vmatprep.subr.mxu0 0.0
    %396 = vmatpush1.msra.mxu0 0.0
    %397 = vmatprep.subr.mxu0 0.0
    %398 = vmatpush1.msra.mxu0 0.0
    %399 = vmatprep.subr.mxu0 0.0
    %400 = vmatpush1.msra.mxu0 0.0
    %401 = vmatprep.subr.mxu0 0.0
    %402 = vmatpush1.msra.mxu0 0.0
    %403 = vmatprep.subr.mxu0 0.0
    %404 = vmatpush1.msra.mxu0 0.0
    %405 = vmatprep.subr.mxu0 0.0
    %406 = vmatpush1.msra.mxu0 0.0
    %407 = vmatprep.subr.mxu0 0.0
    %408 = vmatpush1.msra.mxu0 %v377
    %409 = vmatprep.subr.mxu0 0.0
    %410 = vmatpush1.msra.mxu0 %v376
    %411 = vmatprep.subr.mxu0 0.0
    %412 = vmatpush1.msra.mxu0 %v375
    %413 = vmatprep.subr.mxu0 0.0
    %414 = vmatpush1.msra.mxu0 %v374
    %415 = vmatprep.subr.mxu0 0.0
    %416 = vmatpush2.msra.mxu0 0.0
    %417 = vmatprep.subr.mxu0 0.0
    %418 = vmatpush2.msra.mxu0 0.0
    %419 = vmatprep.subr.mxu0 0.0
    %420 = vmatpush2.msra.mxu0 0.0
    %421 = vmatprep.subr.mxu0 0.0
    %422 = vmatpush2.msra.mxu0 0.0
    %423 = vmatprep.subr.mxu0 0.0
    %424 = vmatpush2.msra.mxu0 0.0
    %425 = vmatprep.subr.mxu0 0.0
    %426 = vmatpush2.msra.mxu0 0.0
    %427 = vmatprep.subr.mxu0 0.0
    %428 = vmatpush2.msra.mxu0 0.0
    %429 = vmatprep.subr.mxu0 0.0
    %430 = vmatpush2.msra.mxu0 0.0
    %431 = vmatprep.subr.mxu0 0.0
    %432 = vmatpush2.msra.mxu0 0.0
    %433 = vmatprep.subr.mxu0 0.0
    %434 = vmatpush2.msra.mxu0 0.0
    %435 = vmatprep.subr.mxu0 0.0
    %436 = vmatpush2.msra.mxu0 0.0
    %437 = vmatprep.subr.mxu0 0.0
    %438 = vmatpush2.msra.mxu0 0.0
    %439 = vmatprep.subr.mxu0 0.0
    %440 = vmatpush2.msra.mxu0 0.0
    %441 = vmatprep.subr.mxu0 0.0
    %442 = vmatpush2.msra.mxu0 0.0
    %443 = vmatprep.subr.mxu0 0.0
    %444 = vmatpush2.msra.mxu0 0.0
    %445 = vmatprep.subr.mxu0 0.0
    %446 = vmatpush2.msra.mxu0 0.0
    %447 = vmatprep.mubr.f32.mxu0 0.0
    %448 = vmatmul.mubr.f32.gmra.mxu0 %v126
    %v449 = vpop.f32.mrf.mxu0
    %v450 = vadd.f32 %v382, %v449
    %v451 = vpop.f32.mrf.mxu0
    %452 = vmatprep.mubr.f32.mxu0 0.0
    %453 = vmatmul.mubr.f32.gmra.mxu0 %v129
    %v454 = vpop.f32.mrf.mxu0
    %v455 = vadd.f32 %v382, %v454
    %v456 = vpop.f32.mrf.mxu0
    %457 = vdwg.mxu0
    %v458 = vld [vmem:[#allocation2 + $0x80] sm:$0xff]
    %v459 = vld [vmem:[#allocation2 + $0x88] sm:$0xff]
    %v460 = vld [vmem:[#allocation2 + $0x90] sm:$0xff]
    %v461 = vld [vmem:[#allocation2 + $0x98] sm:$0xff]
    %v462 = vld [vmem:[%s3 + $0x7] sm:$0x1]
    %v463 = vlaneseq
    %v464 = vshrl.u32 %v463, 7
    %v465 = vsub.s32 0, %v464
    %v466 = vrot.slane %v462, %v465
    %467 = vmatprep.subr.mxu0 0.0
    %468 = vmatpush1.msra.mxu0 0.0
    %469 = vmatprep.subr.mxu0 0.0
    %470 = vmatpush1.msra.mxu0 0.0
    %471 = vmatprep.subr.mxu0 0.0
    %472 = vmatpush1.msra.mxu0 0.0
    %473 = vmatprep.subr.mxu0 0.0
    %474 = vmatpush1.msra.mxu0 0.0
    %475 = vmatprep.subr.mxu0 0.0
    %476 = vmatpush1.msra.mxu0 0.0
    %477 = vmatprep.subr.mxu0 0.0
    %478 = vmatpush1.msra.mxu0 0.0
    %479 = vmatprep.subr.mxu0 0.0
    %480 = vmatpush1.msra.mxu0 0.0
    %481 = vmatprep.subr.mxu0 0.0
    %482 = vmatpush1.msra.mxu0 0.0
    %483 = vmatprep.subr.mxu0 0.0
    %484 = vmatpush1.msra.mxu0 0.0
    %485 = vmatprep.subr.mxu0 0.0
    %486 = vmatpush1.msra.mxu0 0.0
    %487 = vmatprep.subr.mxu0 0.0
    %488 = vmatpush1.msra.mxu0 0.0
    %489 = vmatprep.subr.mxu0 0.0
    %490 = vmatpush1.msra.mxu0 0.0
    %491 = vmatprep.subr.mxu0 0.0
    %492 = vmatpush1.msra.mxu0 %v461
    %493 = vmatprep.subr.mxu0 0.0
    %494 = vmatpush1.msra.mxu0 %v460
    %495 = vmatprep.subr.mxu0 0.0
    %496 = vmatpush1.msra.mxu0 %v459
    %497 = vmatprep.subr.mxu0 0.0
    %498 = vmatpush1.msra.mxu0 %v458
    %499 = vmatprep.subr.mxu0 0.0
    %500 = vmatpush2.msra.mxu0 0.0
    %501 = vmatprep.subr.mxu0 0.0
    %502 = vmatpush2.msra.mxu0 0.0
    %503 = vmatprep.subr.mxu0 0.0
    %504 = vmatpush2.msra.mxu0 0.0
    %505 = vmatprep.subr.mxu0 0.0
    %506 = vmatpush2.msra.mxu0 0.0
    %507 = vmatprep.subr.mxu0 0.0
    %508 = vmatpush2.msra.mxu0 0.0
    %509 = vmatprep.subr.mxu0 0.0
    %510 = vmatpush2.msra.mxu0 0.0
    %511 = vmatprep.subr.mxu0 0.0
    %512 = vmatpush2.msra.mxu0 0.0
    %513 = vmatprep.subr.mxu0 0.0
    %514 = vmatpush2.msra.mxu0 0.0
    %515 = vmatprep.subr.mxu0 0.0
    %516 = vmatpush2.msra.mxu0 0.0
    %517 = vmatprep.subr.mxu0 0.0
    %518 = vmatpush2.msra.mxu0 0.0
    %519 = vmatprep.subr.mxu0 0.0
    %520 = vmatpush2.msra.mxu0 0.0
    %521 = vmatprep.subr.mxu0 0.0
    %522 = vmatpush2.msra.mxu0 0.0
    %523 = vmatprep.subr.mxu0 0.0
    %524 = vmatpush2.msra.mxu0 0.0
    %525 = vmatprep.subr.mxu0 0.0
    %526 = vmatpush2.msra.mxu0 0.0
    %527 = vmatprep.subr.mxu0 0.0
    %528 = vmatpush2.msra.mxu0 0.0
    %529 = vmatprep.subr.mxu0 0.0
    %530 = vmatpush2.msra.mxu0 0.0
    %531 = vmatprep.mubr.f32.mxu0 0.0
    %532 = vmatmul.mubr.f32.gmra.mxu0 %v126
    %v533 = vpop.f32.mrf.mxu0
    %v534 = vadd.f32 %v466, %v533
    %v535 = vpop.f32.mrf.mxu0
    %536 = vmatprep.mubr.f32.mxu0 0.0
    %537 = vmatmul.mubr.f32.gmra.mxu0 %v129
    %v538 = vpop.f32.mrf.mxu0
    %v539 = vadd.f32 %v466, %v538
    %v540 = vpop.f32.mrf.mxu0
    %541 = vdwg.mxu0
    %v542 = vld [vmem:[#allocation2 + $0xa0] sm:$0xff]
    %v543 = vld [vmem:[#allocation2 + $0xa8] sm:$0xff]
    %v544 = vld [vmem:[#allocation2 + $0xb0] sm:$0xff]
    %v545 = vld [vmem:[#allocation2 + $0xb8] sm:$0xff]
    %v546 = vld [vmem:[%s3 + $0x8] sm:$0x1]
    %v547 = vlaneseq
    %v548 = vshrl.u32 %v547, 7
    %v549 = vsub.s32 0, %v548
    %v550 = vrot.slane %v546, %v549
    %551 = vmatprep.subr.mxu0 0.0
    %552 = vmatpush1.msra.mxu0 0.0
    %553 = vmatprep.subr.mxu0 0.0
    %554 = vmatpush1.msra.mxu0 0.0
    %555 = vmatprep.subr.mxu0 0.0
    %556 = vmatpush1.msra.mxu0 0.0
    %557 = vmatprep.subr.mxu0 0.0
    %558 = vmatpush1.msra.mxu0 0.0
    %559 = vmatprep.subr.mxu0 0.0
    %560 = vmatpush1.msra.mxu0 0.0
    %561 = vmatprep.subr.mxu0 0.0
    %562 = vmatpush1.msra.mxu0 0.0
    %563 = vmatprep.subr.mxu0 0.0
    %564 = vmatpush1.msra.mxu0 0.0
    %565 = vmatprep.subr.mxu0 0.0
    %566 = vmatpush1.msra.mxu0 0.0
    %567 = vmatprep.subr.mxu0 0.0
    %568 = vmatpush1.msra.mxu0 0.0
    %569 = vmatprep.subr.mxu0 0.0
    %570 = vmatpush1.msra.mxu0 0.0
    %571 = vmatprep.subr.mxu0 0.0
    %572 = vmatpush1.msra.mxu0 0.0
    %573 = vmatprep.subr.mxu0 0.0
    %574 = vmatpush1.msra.mxu0 0.0
    %575 = vmatprep.subr.mxu0 0.0
    %576 = vmatpush1.msra.mxu0 %v545
    %577 = vmatprep.subr.mxu0 0.0
    %578 = vmatpush1.msra.mxu0 %v544
    %579 = vmatprep.subr.mxu0 0.0
    %580 = vmatpush1.msra.mxu0 %v543
    %581 = vmatprep.subr.mxu0 0.0
    %582 = vmatpush1.msra.mxu0 %v542
    %583 = vmatprep.subr.mxu0 0.0
    %584 = vmatpush2.msra.mxu0 0.0
    %585 = vmatprep.subr.mxu0 0.0
    %586 = vmatpush2.msra.mxu0 0.0
    %587 = vmatprep.subr.mxu0 0.0
    %588 = vmatpush2.msra.mxu0 0.0
    %589 = vmatprep.subr.mxu0 0.0
    %590 = vmatpush2.msra.mxu0 0.0
    %591 = vmatprep.subr.mxu0 0.0
    %592 = vmatpush2.msra.mxu0 0.0
    %593 = vmatprep.subr.mxu0 0.0
    %594 = vmatpush2.msra.mxu0 0.0
    %595 = vmatprep.subr.mxu0 0.0
    %596 = vmatpush2.msra.mxu0 0.0
    %597 = vmatprep.subr.mxu0 0.0
    %598 = vmatpush2.msra.mxu0 0.0
    %599 = vmatprep.subr.mxu0 0.0
    %600 = vmatpush2.msra.mxu0 0.0
    %601 = vmatprep.subr.mxu0 0.0
    %602 = vmatpush2.msra.mxu0 0.0
    %603 = vmatprep.subr.mxu0 0.0
    %604 = vmatpush2.msra.mxu0 0.0
    %605 = vmatprep.subr.mxu0 0.0
    %606 = vmatpush2.msra.mxu0 0.0
    %607 = vmatprep.subr.mxu0 0.0
    %608 = vmatpush2.msra.mxu0 0.0
    %609 = vmatprep.subr.mxu0 0.0
    %610 = vmatpush2.msra.mxu0 0.0
    %611 = vmatprep.subr.mxu0 0.0
    %612 = vmatpush2.msra.mxu0 0.0
    %613 = vmatprep.subr.mxu0 0.0
    %614 = vmatpush2.msra.mxu0 0.0
    %615 = vmatprep.mubr.f32.mxu0 0.0
    %616 = vmatmul.mubr.f32.gmra.mxu0 %v126
    %v617 = vpop.f32.mrf.mxu0
    %v618 = vadd.f32 %v550, %v617
    %v619 = vpop.f32.mrf.mxu0
    %620 = vmatprep.mubr.f32.mxu0 0.0
    %621 = vmatmul.mubr.f32.gmra.mxu0 %v129
    %v622 = vpop.f32.mrf.mxu0
    %v623 = vadd.f32 %v550, %v622
    %v624 = vpop.f32.mrf.mxu0
    %625 = vdwg.mxu0
    %vm626 = vcmask 130048
    %v628 = vsel %vm626, %v198, 0
    %v631 = vsel %vm626, %v203, 0
    %v634 = vsel %vm626, %v366, 0
    %v637 = vsel %vm626, %v371, 0
    %639 = vmatprep.subr.mxu0 0.0
    %640 = vmatpush1.xpose.msra.mxu0 0.0
    %641 = vmatprep.subr.mxu0 0.0
    %642 = vmatpush1.xpose.msra.mxu0 0.0
    %643 = vmatprep.subr.mxu0 0.0
    %644 = vmatpush1.xpose.msra.mxu0 0.0
    %645 = vmatprep.subr.mxu0 0.0
    %646 = vmatpush1.xpose.msra.mxu0 0.0
    %647 = vmatprep.subr.mxu0 0.0
    %648 = vmatpush1.xpose.msra.mxu0 0.0
    %649 = vmatprep.subr.mxu0 0.0
    %650 = vmatpush1.xpose.msra.mxu0 0.0
    %651 = vmatprep.subr.mxu0 0.0
    %652 = vmatpush1.xpose.msra.mxu0 0.0
    %653 = vmatprep.subr.mxu0 0.0
    %654 = vmatpush1.xpose.msra.mxu0 0.0
    %655 = vmatprep.subr.mxu0 0.0
    %656 = vmatpush1.xpose.msra.mxu0 0.0
    %657 = vmatprep.subr.mxu0 0.0
    %658 = vmatpush1.xpose.msra.mxu0 0.0
    %659 = vmatprep.subr.mxu0 0.0
    %660 = vmatpush1.xpose.msra.mxu0 0.0
    %661 = vmatprep.subr.mxu0 0.0
    %662 = vmatpush1.xpose.msra.mxu0 0.0
    %663 = vmatprep.subr.mxu0 0.0
    %664 = vmatpush1.xpose.msra.mxu0 0.0
    %665 = vmatprep.subr.mxu0 0.0
    %666 = vmatpush1.xpose.msra.mxu0 0.0
    %667 = vmatprep.subr.mxu0 0.0
    %668 = vmatpush1.xpose.msra.mxu0 %v637
    %669 = vmatprep.subr.mxu0 0.0
    %670 = vmatpush1.xpose.msra.mxu0 %v634
    %671 = vmatprep.subr.mxu0 0.0
    %672 = vmatpush2.xpose.msra.mxu0 0.0
    %673 = vmatprep.subr.mxu0 0.0
    %674 = vmatpush2.xpose.msra.mxu0 0.0
    %675 = vmatprep.subr.mxu0 0.0
    %676 = vmatpush2.xpose.msra.mxu0 0.0
    %677 = vmatprep.subr.mxu0 0.0
    %678 = vmatpush2.xpose.msra.mxu0 0.0
    %679 = vmatprep.subr.mxu0 0.0
    %680 = vmatpush2.xpose.msra.mxu0 0.0
    %681 = vmatprep.subr.mxu0 0.0
    %682 = vmatpush2.xpose.msra.mxu0 0.0
    %683 = vmatprep.subr.mxu0 0.0
    %684 = vmatpush2.xpose.msra.mxu0 0.0
    %685 = vmatprep.subr.mxu0 0.0
    %686 = vmatpush2.xpose.msra.mxu0 0.0
    %687 = vmatprep.subr.mxu0 0.0
    %688 = vmatpush2.xpose.msra.mxu0 0.0
    %689 = vmatprep.subr.mxu0 0.0
    %690 = vmatpush2.xpose.msra.mxu0 0.0
    %691 = vmatprep.subr.mxu0 0.0
    %692 = vmatpush2.xpose.msra.mxu0 0.0
    %693 = vmatprep.subr.mxu0 0.0
    %694 = vmatpush2.xpose.msra.mxu0 0.0
    %695 = vmatprep.subr.mxu0 0.0
    %696 = vmatpush2.xpose.msra.mxu0 0.0
    %697 = vmatprep.subr.mxu0 0.0
    %698 = vmatpush2.xpose.msra.mxu0 0.0
    %699 = vmatprep.subr.mxu0 0.0
    %700 = vmatpush2.xpose.msra.mxu0 0.0
    %701 = vmatprep.subr.mxu0 0.0
    %702 = vmatpush2.xpose.msra.mxu0 0.0
    %703 = vmatprep.mubr.f32.mxu0 0.0
    %704 = vmatmul.mubr.f32.gmra.mxu0 %v628
    %v705 = vpop.f32.mrf.mxu0
    %v706 = vadd.f32 0.0, %v705
    %v707 = vpop.f32.mrf.mxu0
    %708 = vmatprep.mubr.f32.mxu0 0.0
    %709 = vmatmul.mubr.f32.gmra.mxu0 %v631
    %v710 = vpop.f32.mrf.mxu0
    %v711 = vadd.f32 0.0, %v710
    %v712 = vpop.f32.mrf.mxu0
    %713 = vdwg.mxu0
    %v715 = vsel %vm626, %v282, 0
    %v718 = vsel %vm626, %v287, 0
    %v721 = vsel %vm626, %v450, 0
    %v724 = vsel %vm626, %v455, 0
    %726 = vmatprep.subr.mxu0 0.0
    %727 = vmatpush1.xpose.msra.mxu0 0.0
    %728 = vmatprep.subr.mxu0 0.0
    %729 = vmatpush1.xpose.msra.mxu0 0.0
    %730 = vmatprep.subr.mxu0 0.0
    %731 = vmatpush1.xpose.msra.mxu0 0.0
    %732 = vmatprep.subr.mxu0 0.0
    %733 = vmatpush1.xpose.msra.mxu0 0.0
    %734 = vmatprep.subr.mxu0 0.0
    %735 = vmatpush1.xpose.msra.mxu0 0.0
    %736 = vmatprep.subr.mxu0 0.0
    %737 = vmatpush1.xpose.msra.mxu0 0.0
    %738 = vmatprep.subr.mxu0 0.0
    %739 = vmatpush1.xpose.msra.mxu0 0.0
    %740 = vmatprep.subr.mxu0 0.0
    %741 = vmatpush1.xpose.msra.mxu0 0.0
    %742 = vmatprep.subr.mxu0 0.0
    %743 = vmatpush1.xpose.msra.mxu0 0.0
    %744 = vmatprep.subr.mxu0 0.0
    %745 = vmatpush1.xpose.msra.mxu0 0.0
    %746 = vmatprep.subr.mxu0 0.0
    %747 = vmatpush1.xpose.msra.mxu0 0.0
    %748 = vmatprep.subr.mxu0 0.0
    %749 = vmatpush1.xpose.msra.mxu0 0.0
    %750 = vmatprep.subr.mxu0 0.0
    %751 = vmatpush1.xpose.msra.mxu0 0.0
    %752 = vmatprep.subr.mxu0 0.0
    %753 = vmatpush1.xpose.msra.mxu0 0.0
    %754 = vmatprep.subr.mxu0 0.0
    %755 = vmatpush1.xpose.msra.mxu0 %v724
    %756 = vmatprep.subr.mxu0 0.0
    %757 = vmatpush1.xpose.msra.mxu0 %v721
    %758 = vmatprep.subr.mxu0 0.0
    %759 = vmatpush2.xpose.msra.mxu0 0.0
    %760 = vmatprep.subr.mxu0 0.0
    %761 = vmatpush2.xpose.msra.mxu0 0.0
    %762 = vmatprep.subr.mxu0 0.0
    %763 = vmatpush2.xpose.msra.mxu0 0.0
    %764 = vmatprep.subr.mxu0 0.0
    %765 = vmatpush2.xpose.msra.mxu0 0.0
    %766 = vmatprep.subr.mxu0 0.0
    %767 = vmatpush2.xpose.msra.mxu0 0.0
    %768 = vmatprep.subr.mxu0 0.0
    %769 = vmatpush2.xpose.msra.mxu0 0.0
    %770 = vmatprep.subr.mxu0 0.0
    %771 = vmatpush2.xpose.msra.mxu0 0.0
    %772 = vmatprep.subr.mxu0 0.0
    %773 = vmatpush2.xpose.msra.mxu0 0.0
    %774 = vmatprep.subr.mxu0 0.0
    %775 = vmatpush2.xpose.msra.mxu0 0.0
    %776 = vmatprep.subr.mxu0 0.0
    %777 = vmatpush2.xpose.msra.mxu0 0.0
    %778 = vmatprep.subr.mxu0 0.0
    %779 = vmatpush2.xpose.msra.mxu0 0.0
    %780 = vmatprep.subr.mxu0 0.0
    %781 = vmatpush2.xpose.msra.mxu0 0.0
    %782 = vmatprep.subr.mxu0 0.0
    %783 = vmatpush2.xpose.msra.mxu0 0.0
    %784 = vmatprep.subr.mxu0 0.0
    %785 = vmatpush2.xpose.msra.mxu0 0.0
    %786 = vmatprep.subr.mxu0 0.0
    %787 = vmatpush2.xpose.msra.mxu0 0.0
    %788 = vmatprep.subr.mxu0 0.0
    %789 = vmatpush2.xpose.msra.mxu0 0.0
    %790 = vmatprep.mubr.f32.mxu0 0.0
    %791 = vmatmul.mubr.f32.gmra.mxu0 %v715
    %v792 = vpop.f32.mrf.mxu0
    %v793 = vadd.f32 0.0, %v792
    %v794 = vpop.f32.mrf.mxu0
    %795 = vmatprep.mubr.f32.mxu0 0.0
    %796 = vmatmul.mubr.f32.gmra.mxu0 %v718
    %v797 = vpop.f32.mrf.mxu0
    %v798 = vadd.f32 0.0, %v797
    %v799 = vpop.f32.mrf.mxu0
    %800 = vdwg.mxu0
    %v801 = vmul.f32 %v706, 0.25
    %v802 = vmul.f32 %v711, 0.25
    %v803 = vmul.f32 %v793, 0.25
    %v804 = vmul.f32 %v798, 0.25
    %v805 = vadd.f32 %v801, %v72
    %v806 = vadd.f32 %v802, %v73
    %v807 = vadd.f32 %v803, %v72
    %v808 = vadd.f32 %v804, %v73
    %v809 = vsel %vm626, %v805, -inf
    %810 = vmax.xlane.f32.xlu0 %v809
    %v811 = vpop.xlane.xlu0 %810
    %v812 = vsel %vm626, %v806, -inf
    %813 = vmax.xlane.f32.xlu0 %v812
    %v814 = vpop.xlane.xlu0 %813
    %v815 = vsel %vm626, %v807, -inf
    %816 = vmax.xlane.f32.xlu0 %v815
    %v817 = vpop.xlane.xlu0 %816
    %v818 = vsel %vm626, %v808, -inf
    %819 = vmax.xlane.f32.xlu0 %v818
    %v820 = vpop.xlane.xlu0 %819
    %v821 = vsub.f32 %v805, %v811
    %v822 = vsub.f32 %v806, %v814
    %v823 = vsub.f32 %v807, %v817
    %v824 = vsub.f32 %v808, %v820
    %v825 = vmul.f32 %v821, 1.442695
    %v826 = vpow.pop %v825
    %v827 = vmul.f32 %v822, 1.442695
    %v828 = vpow.pop %v827
    %v829 = vmul.f32 %v823, 1.442695
    %v830 = vpow.pop %v829
    %v831 = vmul.f32 %v824, 1.442695
    %v832 = vpow.pop %v831
    %v833 = vsel %vm626, %v826, 0.0
    %834 = vadd.xlane.f32.xlu0 %v833
    %v835 = vpop.xlane.xlu0 %834
    %v836 = vsel %vm626, %v828, 0.0
    %837 = vadd.xlane.f32.xlu0 %v836
    %v838 = vpop.xlane.xlu0 %837
    %v839 = vsel %vm626, %v830, 0.0
    %840 = vadd.xlane.f32.xlu0 %v839
    %v841 = vpop.xlane.xlu0 %840
    %v842 = vsel %vm626, %v832, 0.0
    %843 = vadd.xlane.f32.xlu0 %v842
    %v844 = vpop.xlane.xlu0 %843
    %v846 = vsel %vm626, %v826, 0
    %v849 = vsel %vm626, %v828, 0
    %851 = vmatprep.subr.mxu0 0.0
    %852 = vmatpush1.msra.mxu0 0.0
    %853 = vmatprep.subr.mxu0 0.0
    %854 = vmatpush1.msra.mxu0 0.0
    %855 = vmatprep.subr.mxu0 0.0
    %856 = vmatpush1.msra.mxu0 0.0
    %857 = vmatprep.subr.mxu0 0.0
    %858 = vmatpush1.msra.mxu0 0.0
    %859 = vmatprep.subr.mxu0 0.0
    %860 = vmatpush1.msra.mxu0 0.0
    %861 = vmatprep.subr.mxu0 0.0
    %862 = vmatpush1.msra.mxu0 0.0
    %863 = vmatprep.subr.mxu0 0.0
    %864 = vmatpush1.msra.mxu0 0.0
    %865 = vmatprep.subr.mxu0 0.0
    %866 = vmatpush1.msra.mxu0 0.0
    %867 = vmatprep.subr.mxu0 0.0
    %868 = vmatpush1.msra.mxu0 0.0
    %869 = vmatprep.subr.mxu0 0.0
    %870 = vmatpush1.msra.mxu0 0.0
    %871 = vmatprep.subr.mxu0 0.0
    %872 = vmatpush1.msra.mxu0 0.0
    %873 = vmatprep.subr.mxu0 0.0
    %874 = vmatpush1.msra.mxu0 0.0
    %875 = vmatprep.subr.mxu0 0.0
    %876 = vmatpush1.msra.mxu0 0.0
    %877 = vmatprep.subr.mxu0 0.0
    %878 = vmatpush1.msra.mxu0 0.0
    %879 = vmatprep.subr.mxu0 0.0
    %880 = vmatpush1.msra.mxu0 %v539
    %881 = vmatprep.subr.mxu0 0.0
    %882 = vmatpush1.msra.mxu0 %v534
    %883 = vmatprep.subr.mxu0 0.0
    %884 = vmatpush2.msra.mxu0 0.0
    %885 = vmatprep.subr.mxu0 0.0
    %886 = vmatpush2.msra.mxu0 0.0
    %887 = vmatprep.subr.mxu0 0.0
    %888 = vmatpush2.msra.mxu0 0.0
    %889 = vmatprep.subr.mxu0 0.0
    %890 = vmatpush2.msra.mxu0 0.0
    %891 = vmatprep.subr.mxu0 0.0
    %892 = vmatpush2.msra.mxu0 0.0
    %893 = vmatprep.subr.mxu0 0.0
    %894 = vmatpush2.msra.mxu0 0.0
    %895 = vmatprep.subr.mxu0 0.0
    %896 = vmatpush2.msra.mxu0 0.0
    %897 = vmatprep.subr.mxu0 0.0
    %898 = vmatpush2.msra.mxu0 0.0
    %899 = vmatprep.subr.mxu0 0.0
    %900 = vmatpush2.msra.mxu0 0.0
    %901 = vmatprep.subr.mxu0 0.0
    %902 = vmatpush2.msra.mxu0 0.0
    %903 = vmatprep.subr.mxu0 0.0
    %904 = vmatpush2.msra.mxu0 0.0
    %905 = vmatprep.subr.mxu0 0.0
    %906 = vmatpush2.msra.mxu0 0.0
    %907 = vmatprep.subr.mxu0 0.0
    %908 = vmatpush2.msra.mxu0 0.0
    %909 = vmatprep.subr.mxu0 0.0
    %910 = vmatpush2.msra.mxu0 0.0
    %911 = vmatprep.subr.mxu0 0.0
    %912 = vmatpush2.msra.mxu0 0.0
    %913 = vmatprep.subr.mxu0 0.0
    %914 = vmatpush2.msra.mxu0 0.0
    %915 = vmatprep.mubr.f32.mxu0 0.0
    %916 = vmatmul.mubr.f32.gmra.mxu0 %v846
    %v917 = vpop.f32.mrf.mxu0
    %v918 = vadd.f32 0.0, %v917
    %v919 = vpop.f32.mrf.mxu0
    %920 = vmatprep.mubr.f32.mxu0 0.0
    %921 = vmatmul.mubr.f32.gmra.mxu0 %v849
    %v922 = vpop.f32.mrf.mxu0
    %v923 = vadd.f32 0.0, %v922
    %v924 = vpop.f32.mrf.mxu0
    %925 = vdwg.mxu0
    %v927 = vsel %vm626, %v830, 0
    %v930 = vsel %vm626, %v832, 0
    %932 = vmatprep.subr.mxu0 0.0
    %933 = vmatpush1.msra.mxu0 0.0
    %934 = vmatprep.subr.mxu0 0.0
    %935 = vmatpush1.msra.mxu0 0.0
    %936 = vmatprep.subr.mxu0 0.0
    %937 = vmatpush1.msra.mxu0 0.0
    %938 = vmatprep.subr.mxu0 0.0
    %939 = vmatpush1.msra.mxu0 0.0
    %940 = vmatprep.subr.mxu0 0.0
    %941 = vmatpush1.msra.mxu0 0.0
    %942 = vmatprep.subr.mxu0 0.0
    %943 = vmatpush1.msra.mxu0 0.0
    %944 = vmatprep.subr.mxu0 0.0
    %945 = vmatpush1.msra.mxu0 0.0
    %946 = vmatprep.subr.mxu0 0.0
    %947 = vmatpush1.msra.mxu0 0.0
    %948 = vmatprep.subr.mxu0 0.0
    %949 = vmatpush1.msra.mxu0 0.0
    %950 = vmatprep.subr.mxu0 0.0
    %951 = vmatpush1.msra.mxu0 0.0
    %952 = vmatprep.subr.mxu0 0.0
    %953 = vmatpush1.msra.mxu0 0.0
    %954 = vmatprep.subr.mxu0 0.0
    %955 = vmatpush1.msra.mxu0 0.0
    %956 = vmatprep.subr.mxu0 0.0
    %957 = vmatpush1.msra.mxu0 0.0
    %958 = vmatprep.subr.mxu0 0.0
    %959 = vmatpush1.msra.mxu0 0.0
    %960 = vmatprep.subr.mxu0 0.0
    %961 = vmatpush1.msra.mxu0 %v623
    %962 = vmatprep.subr.mxu0 0.0
    %963 = vmatpush1.msra.mxu0 %v618
    %964 = vmatprep.subr.mxu0 0.0
    %965 = vmatpush2.msra.mxu0 0.0
    %966 = vmatprep.subr.mxu0 0.0
    %967 = vmatpush2.msra.mxu0 0.0
    %968 = vmatprep.subr.mxu0 0.0
    %969 = vmatpush2.msra.mxu0 0.0
    %970 = vmatprep.subr.mxu0 0.0
    %971 = vmatpush2.msra.mxu0 0.0
    %972 = vmatprep.subr.mxu0 0.0
    %973 = vmatpush2.msra.mxu0 0.0
    %974 = vmatprep.subr.mxu0 0.0
    %975 = vmatpush2.msra.mxu0 0.0
    %976 = vmatprep.subr.mxu0 0.0
    %977 = vmatpush2.msra.mxu0 0.0
    %978 = vmatprep.subr.mxu0 0.0
    %979 = vmatpush2.msra.mxu0 0.0
    %980 = vmatprep.subr.mxu0 0.0
    %981 = vmatpush2.msra.mxu0 0.0
    %982 = vmatprep.subr.mxu0 0.0
    %983 = vmatpush2.msra.mxu0 0.0
    %984 = vmatprep.subr.mxu0 0.0
    %985 = vmatpush2.msra.mxu0 0.0
    %986 = vmatprep.subr.mxu0 0.0
    %987 = vmatpush2.msra.mxu0 0.0
    %988 = vmatprep.subr.mxu0 0.0
    %989 = vmatpush2.msra.mxu0 0.0
    %990 = vmatprep.subr.mxu0 0.0
    %991 = vmatpush2.msra.mxu0 0.0
    %992 = vmatprep.subr.mxu0 0.0
    %993 = vmatpush2.msra.mxu0 0.0
    %994 = vmatprep.subr.mxu0 0.0
    %995 = vmatpush2.msra.mxu0 0.0
    %996 = vmatprep.mubr.f32.mxu0 0.0
    %997 = vmatmul.mubr.f32.gmra.mxu0 %v927
    %v998 = vpop.f32.mrf.mxu0
    %v999 = vadd.f32 0.0, %v998
    %v1000 = vpop.f32.mrf.mxu0
    %1001 = vmatprep.mubr.f32.mxu0 0.0
    %1002 = vmatmul.mubr.f32.gmra.mxu0 %v930
    %v1003 = vpop.f32.mrf.mxu0
    %v1004 = vadd.f32 0.0, %v1003
    %v1005 = vpop.f32.mrf.mxu0
    %1006 = vdwg.mxu0
    %v1007 = vrcp.pop %v835
    %v1008 = vmul.f32 %v918, %v1007
    %v1009 = vrcp.pop %v838
    %v1010 = vmul.f32 %v923, %v1009
    %v1011 = vrcp.pop %v841
    %v1012 = vmul.f32 %v999, %v1011
    %v1013 = vrcp.pop %v844
    %v1014 = vmul.f32 %v1004, %v1013
    %v1015 = vld [vmem:[%s3 + $0x9] sm:$0x1]
    %v1016 = vld [vmem:[#allocation2 + $0xc0] sm:$0xff]
    %v1017 = vld [vmem:[#allocation2 + $0xc8] sm:$0xff]
    %v1019 = vsel %vm626, %v1008, 0
    %v1022 = vsel %vm626, %v1010, 0
    %1024 = vmatprep.subr.mxu0 0.0
    %1025 = vmatpush1.msra.mxu0 0.0
    %1026 = vmatprep.subr.mxu0 0.0
    %1027 = vmatpush1.msra.mxu0 0.0
    %1028 = vmatprep.subr.mxu0 0.0
    %1029 = vmatpush1.msra.mxu0 0.0
    %1030 = vmatprep.subr.mxu0 0.0
    %1031 = vmatpush1.msra.mxu0 0.0
    %1032 = vmatprep.subr.mxu0 0.0
    %1033 = vmatpush1.msra.mxu0 0.0
    %1034 = vmatprep.subr.mxu0 0.0
    %1035 = vmatpush1.msra.mxu0 0.0
    %1036 = vmatprep.subr.mxu0 0.0
    %1037 = vmatpush1.msra.mxu0 0.0
    %1038 = vmatprep.subr.mxu0 0.0
    %1039 = vmatpush1.msra.mxu0 0.0
    %1040 = vmatprep.subr.mxu0 0.0
    %1041 = vmatpush1.msra.mxu0 0.0
    %1042 = vmatprep.subr.mxu0 0.0
    %1043 = vmatpush1.msra.mxu0 0.0
    %1044 = vmatprep.subr.mxu0 0.0
    %1045 = vmatpush1.msra.mxu0 0.0
    %1046 = vmatprep.subr.mxu0 0.0
    %1047 = vmatpush1.msra.mxu0 0.0
    %1048 = vmatprep.subr.mxu0 0.0
    %1049 = vmatpush1.msra.mxu0 0.0
    %1050 = vmatprep.subr.mxu0 0.0
    %1051 = vmatpush1.msra.mxu0 0.0
    %1052 = vmatprep.subr.mxu0 0.0
    %1053 = vmatpush1.msra.mxu0 %v1017
    %1054 = vmatprep.subr.mxu0 0.0
    %1055 = vmatpush1.msra.mxu0 %v1016
    %1056 = vmatprep.subr.mxu0 0.0
    %1057 = vmatpush2.msra.mxu0 0.0
    %1058 = vmatprep.subr.mxu0 0.0
    %1059 = vmatpush2.msra.mxu0 0.0
    %1060 = vmatprep.subr.mxu0 0.0
    %1061 = vmatpush2.msra.mxu0 0.0
    %1062 = vmatprep.subr.mxu0 0.0
    %1063 = vmatpush2.msra.mxu0 0.0
    %1064 = vmatprep.subr.mxu0 0.0
    %1065 = vmatpush2.msra.mxu0 0.0
    %1066 = vmatprep.subr.mxu0 0.0
    %1067 = vmatpush2.msra.mxu0 0.0
    %1068 = vmatprep.subr.mxu0 0.0
    %1069 = vmatpush2.msra.mxu0 0.0
    %1070 = vmatprep.subr.mxu0 0.0
    %1071 = vmatpush2.msra.mxu0 0.0
    %1072 = vmatprep.subr.mxu0 0.0
    %1073 = vmatpush2.msra.mxu0 0.0
    %1074 = vmatprep.subr.mxu0 0.0
    %1075 = vmatpush2.msra.mxu0 0.0
    %1076 = vmatprep.subr.mxu0 0.0
    %1077 = vmatpush2.msra.mxu0 0.0
    %1078 = vmatprep.subr.mxu0 0.0
    %1079 = vmatpush2.msra.mxu0 0.0
    %1080 = vmatprep.subr.mxu0 0.0
    %1081 = vmatpush2.msra.mxu0 0.0
    %1082 = vmatprep.subr.mxu0 0.0
    %1083 = vmatpush2.msra.mxu0 0.0
    %1084 = vmatprep.subr.mxu0 0.0
    %1085 = vmatpush2.msra.mxu0 0.0
    %1086 = vmatprep.subr.mxu0 0.0
    %1087 = vmatpush2.msra.mxu0 0.0
    %1088 = vmatprep.mubr.f32.mxu0 0.0
    %1089 = vmatmul.mubr.f32.gmra.mxu0 %v1019
    %v1090 = vpop.f32.mrf.mxu0
    %v1091 = vadd.f32 0.0, %v1090
    %v1092 = vpop.f32.mrf.mxu0
    %1093 = vmatprep.mubr.f32.mxu0 0.0
    %1094 = vmatmul.mubr.f32.gmra.mxu0 %v1022
    %v1095 = vpop.f32.mrf.mxu0
    %v1096 = vadd.f32 0.0, %v1095
    %v1097 = vpop.f32.mrf.mxu0
    %1098 = vdwg.mxu0
    %v1099 = vlaneseq
    %v1100 = vshrl.u32 %v1099, 7
    %v1101 = vsub.s32 0, %v1100
    %v1102 = vrot.slane %v1015, %v1101
    %v1103 = vadd.f32 %v1102, %v1091
    %v1104 = vadd.f32 %v1102, %v1096
    %v1105 = vld [vmem:[#allocation2 + $0xd0] sm:$0xff]
    %v1106 = vld [vmem:[#allocation2 + $0xd8] sm:$0xff]
    %v1108 = vsel %vm626, %v1012, 0
    %v1111 = vsel %vm626, %v1014, 0
    %1113 = vmatprep.subr.mxu0 0.0
    %1114 = vmatpush1.msra.mxu0 0.0
    %1115 = vmatprep.subr.mxu0 0.0
    %1116 = vmatpush1.msra.mxu0 0.0
    %1117 = vmatprep.subr.mxu0 0.0
    %1118 = vmatpush1.msra.mxu0 0.0
    %1119 = vmatprep.subr.mxu0 0.0
    %1120 = vmatpush1.msra.mxu0 0.0
    %1121 = vmatprep.subr.mxu0 0.0
    %1122 = vmatpush1.msra.mxu0 0.0
    %1123 = vmatprep.subr.mxu0 0.0
    %1124 = vmatpush1.msra.mxu0 0.0
    %1125 = vmatprep.subr.mxu0 0.0
    %1126 = vmatpush1.msra.mxu0 0.0
    %1127 = vmatprep.subr.mxu0 0.0
    %1128 = vmatpush1.msra.mxu0 0.0
    %1129 = vmatprep.subr.mxu0 0.0
    %1130 = vmatpush1.msra.mxu0 0.0
    %1131 = vmatprep.subr.mxu0 0.0
    %1132 = vmatpush1.msra.mxu0 0.0
    %1133 = vmatprep.subr.mxu0 0.0
    %1134 = vmatpush1.msra.mxu0 0.0
    %1135 = vmatprep.subr.mxu0 0.0
    %1136 = vmatpush1.msra.mxu0 0.0
    %1137 = vmatprep.subr.mxu0 0.0
    %1138 = vmatpush1.msra.mxu0 0.0
    %1139 = vmatprep.subr.mxu0 0.0
    %1140 = vmatpush1.msra.mxu0 0.0
    %1141 = vmatprep.subr.mxu0 0.0
    %1142 = vmatpush1.msra.mxu0 %v1106
    %1143 = vmatprep.subr.mxu0 0.0
    %1144 = vmatpush1.msra.mxu0 %v1105
    %1145 = vmatprep.subr.mxu0 0.0
    %1146 = vmatpush2.msra.mxu0 0.0
    %1147 = vmatprep.subr.mxu0 0.0
    %1148 = vmatpush2.msra.mxu0 0.0
    %1149 = vmatprep.subr.mxu0 0.0
    %1150 = vmatpush2.msra.mxu0 0.0
    %1151 = vmatprep.subr.mxu0 0.0
    %1152 = vmatpush2.msra.mxu0 0.0
    %1153 = vmatprep.subr.mxu0 0.0
    %1154 = vmatpush2.msra.mxu0 0.0
    %1155 = vmatprep.subr.mxu0 0.0
    %1156 = vmatpush2.msra.mxu0 0.0
    %1157 = vmatprep.subr.mxu0 0.0
    %1158 = vmatpush2.msra.mxu0 0.0
    %1159 = vmatprep.subr.mxu0 0.0
    %1160 = vmatpush2.msra.mxu0 0.0
    %1161 = vmatprep.subr.mxu0 0.0
    %1162 = vmatpush2.msra.mxu0 0.0
    %1163 = vmatprep.subr.mxu0 0.0
    %1164 = vmatpush2.msra.mxu0 0.0
    %1165 = vmatprep.subr.mxu0 0.0
    %1166 = vmatpush2.msra.mxu0 0.0
    %1167 = vmatprep.subr.mxu0 0.0
    %1168 = vmatpush2.msra.mxu0 0.0
    %1169 = vmatprep.subr.mxu0 0.0
    %1170 = vmatpush2.msra.mxu0 0.0
    %1171 = vmatprep.subr.mxu0 0.0
    %1172 = vmatpush2.msra.mxu0 0.0
    %1173 = vmatprep.subr.mxu0 0.0
    %1174 = vmatpush2.msra.mxu0 0.0
    %1175 = vmatprep.subr.mxu0 0.0
    %1176 = vmatpush2.msra.mxu0 0.0
    %1177 = vmatprep.mubr.f32.mxu0 0.0
    %1178 = vmatmul.mubr.f32.gmra.mxu0 %v1108
    %v1179 = vpop.f32.mrf.mxu0
    %v1180 = vadd.f32 0.0, %v1179
    %v1181 = vpop.f32.mrf.mxu0
    %1182 = vmatprep.mubr.f32.mxu0 0.0
    %1183 = vmatmul.mubr.f32.gmra.mxu0 %v1111
    %v1184 = vpop.f32.mrf.mxu0
    %v1185 = vadd.f32 0.0, %v1184
    %v1186 = vpop.f32.mrf.mxu0
    %1187 = vdwg.mxu0
    %v1188 = vadd.f32 %v1103, %v1180
    %v1189 = vadd.f32 %v1104, %v1185
    %v1190 = vadd.f32 %v114, %v1188
    %v1191 = vadd.f32 %v115, %v1189
    %v1192 = vld [vmem:[%s3 + $0xa] sm:$0x1]
    %v1193 = vld [vmem:[%s3 + $0xb] sm:$0x1]
    %v1194 = vsel %vm76, %v1190, 0.0
    %1195 = vadd.xlane.f32.xlu0 %v1194
    %v1196 = vpop.xlane.xlu0 %1195
    %v1197 = vsel %vm76, %v1191, 0.0
    %1198 = vadd.xlane.f32.xlu0 %v1197
    %v1199 = vpop.xlane.xlu0 %1198
    %v1200 = vmul.f32 %v1196, %v83
    %v1201 = vmul.f32 %v1199, %v83
    %v1202 = vsub.f32 %v1190, %v1200
    %v1203 = vsub.f32 %v1191, %v1201
    %v1204 = vmul.f32 %v1202, %v1202
    %v1205 = vmul.f32 %v1203, %v1203
    %v1206 = vsel %vm76, %v1204, 0.0
    %1207 = vadd.xlane.f32.xlu0 %v1206
    %v1208 = vpop.xlane.xlu0 %1207
    %v1209 = vsel %vm76, %v1205, 0.0
    %1210 = vadd.xlane.f32.xlu0 %v1209
    %v1211 = vpop.xlane.xlu0 %1210
    %v1212 = vmul.f32 %v1208, %v83
    %v1213 = vmul.f32 %v1211, %v83
    %v1214 = vadd.f32 %v1212, 1e-12
    %v1215 = vadd.f32 %v1213, 1e-12
    %v1216 = vrsqrt.pop %v1214
    %v1217 = vrsqrt.pop %v1215
    %v1218 = vmul.f32 %v1202, %v1216
    %v1219 = vmul.f32 %v1203, %v1217
    %v1220 = vlaneseq
    %v1221 = vshrl.u32 %v1220, 7
    %v1222 = vsub.s32 0, %v1221
    %v1223 = vrot.slane %v1192, %v1222
    %v1224 = vmul.f32 %v1218, %v1223
    %v1225 = vmul.f32 %v1219, %v1223
    %v1226 = vlaneseq
    %v1227 = vshrl.u32 %v1226, 7
    %v1228 = vsub.s32 0, %v1227
    %v1229 = vrot.slane %v1193, %v1228
    %v1230 = vadd.f32 %v1224, %v1229
    %v1231 = vadd.f32 %v1225, %v1229
    %v1232 = vld [vmem:[#allocation2 + $0xe0] sm:$0xff]
    %v1233 = vld [vmem:[#allocation2 + $0xe8] sm:$0xff]
    %v1234 = vld [vmem:[#allocation2 + $0xf0] sm:$0xff]
    %v1235 = vld [vmem:[#allocation2 + $0xf8] sm:$0xff]
    %v1236 = vld [vmem:[%s3 + $0xc] sm:$0x1]
    %v1237 = vlaneseq
    %v1238 = vshrl.u32 %v1237, 7
    %v1239 = vsub.s32 0, %v1238
    %v1240 = vrot.slane %v1236, %v1239
    %v1242 = vsel %vm76, %v1230, 0
    %v1245 = vsel %vm76, %v1231, 0
    %1247 = vmatprep.subr.mxu0 0.0
    %1248 = vmatpush1.msra.mxu0 0.0
    %1249 = vmatprep.subr.mxu0 0.0
    %1250 = vmatpush1.msra.mxu0 0.0
    %1251 = vmatprep.subr.mxu0 0.0
    %1252 = vmatpush1.msra.mxu0 0.0
    %1253 = vmatprep.subr.mxu0 0.0
    %1254 = vmatpush1.msra.mxu0 0.0
    %1255 = vmatprep.subr.mxu0 0.0
    %1256 = vmatpush1.msra.mxu0 0.0
    %1257 = vmatprep.subr.mxu0 0.0
    %1258 = vmatpush1.msra.mxu0 0.0
    %1259 = vmatprep.subr.mxu0 0.0
    %1260 = vmatpush1.msra.mxu0 0.0
    %1261 = vmatprep.subr.mxu0 0.0
    %1262 = vmatpush1.msra.mxu0 0.0
    %1263 = vmatprep.subr.mxu0 0.0
    %1264 = vmatpush1.msra.mxu0 0.0
    %1265 = vmatprep.subr.mxu0 0.0
    %1266 = vmatpush1.msra.mxu0 0.0
    %1267 = vmatprep.subr.mxu0 0.0
    %1268 = vmatpush1.msra.mxu0 0.0
    %1269 = vmatprep.subr.mxu0 0.0
    %1270 = vmatpush1.msra.mxu0 0.0
    %1271 = vmatprep.subr.mxu0 0.0
    %1272 = vmatpush1.msra.mxu0 %v1235
    %1273 = vmatprep.subr.mxu0 0.0
    %1274 = vmatpush1.msra.mxu0 %v1234
    %1275 = vmatprep.subr.mxu0 0.0
    %1276 = vmatpush1.msra.mxu0 %v1233
    %1277 = vmatprep.subr.mxu0 0.0
    %1278 = vmatpush1.msra.mxu0 %v1232
    %1279 = vmatprep.subr.mxu0 0.0
    %1280 = vmatpush2.msra.mxu0 0.0
    %1281 = vmatprep.subr.mxu0 0.0
    %1282 = vmatpush2.msra.mxu0 0.0
    %1283 = vmatprep.subr.mxu0 0.0
    %1284 = vmatpush2.msra.mxu0 0.0
    %1285 = vmatprep.subr.mxu0 0.0
    %1286 = vmatpush2.msra.mxu0 0.0
    %1287 = vmatprep.subr.mxu0 0.0
    %1288 = vmatpush2.msra.mxu0 0.0
    %1289 = vmatprep.subr.mxu0 0.0
    %1290 = vmatpush2.msra.mxu0 0.0
    %1291 = vmatprep.subr.mxu0 0.0
    %1292 = vmatpush2.msra.mxu0 0.0
    %1293 = vmatprep.subr.mxu0 0.0
    %1294 = vmatpush2.msra.mxu0 0.0
    %1295 = vmatprep.subr.mxu0 0.0
    %1296 = vmatpush2.msra.mxu0 0.0
    %1297 = vmatprep.subr.mxu0 0.0
    %1298 = vmatpush2.msra.mxu0 0.0
    %1299 = vmatprep.subr.mxu0 0.0
    %1300 = vmatpush2.msra.mxu0 0.0
    %1301 = vmatprep.subr.mxu0 0.0
    %1302 = vmatpush2.msra.mxu0 0.0
    %1303 = vmatprep.subr.mxu0 0.0
    %1304 = vmatpush2.msra.mxu0 0.0
    %1305 = vmatprep.subr.mxu0 0.0
    %1306 = vmatpush2.msra.mxu0 0.0
    %1307 = vmatprep.subr.mxu0 0.0
    %1308 = vmatpush2.msra.mxu0 0.0
    %1309 = vmatprep.subr.mxu0 0.0
    %1310 = vmatpush2.msra.mxu0 0.0
    %1311 = vmatprep.mubr.f32.mxu0 0.0
    %1312 = vmatmul.mubr.f32.gmra.mxu0 %v1242
    %v1313 = vpop.f32.mrf.mxu0
    %v1314 = vadd.f32 %v1240, %v1313
    %v1315 = vpop.f32.mrf.mxu0
    %1316 = vmatprep.mubr.f32.mxu0 0.0
    %1317 = vmatmul.mubr.f32.gmra.mxu0 %v1245
    %v1318 = vpop.f32.mrf.mxu0
    %v1319 = vadd.f32 %v1240, %v1318
    %v1320 = vpop.f32.mrf.mxu0
    %1321 = vdwg.mxu0
    %v1322 = vmul.f32 %v1314, 0.5
    %v1323 = vmul.f32 %v1319, 0.5
    %v1324 = vmul.f32 %v1314, 0.044715
    %v1325 = vmul.f32 %v1319, 0.044715
    %v1326 = vmul.f32 %v1324, %v1314
    %v1327 = vmul.f32 %v1325, %v1319
    %v1328 = vmul.f32 %v1326, %v1314
    %v1329 = vmul.f32 %v1327, %v1319
    %v1330 = vadd.f32 %v1314, %v1328
    %v1331 = vadd.f32 %v1319, %v1329
    %v1332 = vmul.f32 %v1330, 0.7978846
    %v1333 = vmul.f32 %v1331, 0.7978846
    %v1334 = vtanh.pop %v1332
    %v1335 = vtanh.pop %v1333
    %v1336 = vadd.f32 %v1334, 1.0
    %v1337 = vadd.f32 %v1335, 1.0
    %v1338 = vmul.f32 %v1322, %v1336
    %v1339 = vmul.f32 %v1323, %v1337
    %v1340 = vld [vmem:[#allocation2 + $0x100] sm:$0xff]
    %v1341 = vld [vmem:[#allocation2 + $0x108] sm:$0xff]
    %v1342 = vld [vmem:[#allocation2 + $0x110] sm:$0xff]
    %v1343 = vld [vmem:[#allocation2 + $0x118] sm:$0xff]
    %v1344 = vld [vmem:[#allocation2 + $0x120] sm:$0xff]
    %v1345 = vld [vmem:[#allocation2 + $0x128] sm:$0xff]
    %v1346 = vld [vmem:[#allocation2 + $0x130] sm:$0xff]
    %v1347 = vld [vmem:[#allocation2 + $0x138] sm:$0xff]
    %v1348 = vld [vmem:[%s3 + $0xd] sm:$0x1]
    %v1349 = vlaneseq
    %v1350 = vshrl.u32 %v1349, 7
    %v1351 = vsub.s32 0, %v1350
    %v1352 = vrot.slane %v1348, %v1351
    %vm1353 = vcmask 523264
    %v1355 = vsel %vm1353, %v1338, 0
    %v1358 = vsel %vm1353, %v1339, 0
    %1360 = vmatprep.subr.mxu0 0.0
    %1361 = vmatpush1.msra.mxu0 0.0
    %1362 = vmatprep.subr.mxu0 0.0
    %1363 = vmatpush1.msra.mxu0 0.0
    %1364 = vmatprep.subr.mxu0 0.0
    %1365 = vmatpush1.msra.mxu0 0.0
    %1366 = vmatprep.subr.mxu0 0.0
    %1367 = vmatpush1.msra.mxu0 0.0
    %1368 = vmatprep.subr.mxu0 0.0
    %1369 = vmatpush1.msra.mxu0 0.0
    %1370 = vmatprep.subr.mxu0 0.0
    %1371 = vmatpush1.msra.mxu0 0.0
    %1372 = vmatprep.subr.mxu0 0.0
    %1373 = vmatpush1.msra.mxu0 0.0
    %1374 = vmatprep.subr.mxu0 0.0
    %1375 = vmatpush1.msra.mxu0 0.0
    %1376 = vmatprep.subr.mxu0 0.0
    %1377 = vmatpush1.msra.mxu0 %v1347
    %1378 = vmatprep.subr.mxu0 0.0
    %1379 = vmatpush1.msra.mxu0 %v1346
    %1380 = vmatprep.subr.mxu0 0.0
    %1381 = vmatpush1.msra.mxu0 %v1345
    %1382 = vmatprep.subr.mxu0 0.0
    %1383 = vmatpush1.msra.mxu0 %v1344
    %1384 = vmatprep.subr.mxu0 0.0
    %1385 = vmatpush1.msra.mxu0 %v1343
    %1386 = vmatprep.subr.mxu0 0.0
    %1387 = vmatpush1.msra.mxu0 %v1342
    %1388 = vmatprep.subr.mxu0 0.0
    %1389 = vmatpush1.msra.mxu0 %v1341
    %1390 = vmatprep.subr.mxu0 0.0
    %1391 = vmatpush1.msra.mxu0 %v1340
    %1392 = vmatprep.subr.mxu0 0.0
    %1393 = vmatpush2.msra.mxu0 0.0
    %1394 = vmatprep.subr.mxu0 0.0
    %1395 = vmatpush2.msra.mxu0 0.0
    %1396 = vmatprep.subr.mxu0 0.0
    %1397 = vmatpush2.msra.mxu0 0.0
    %1398 = vmatprep.subr.mxu0 0.0
    %1399 = vmatpush2.msra.mxu0 0.0
    %1400 = vmatprep.subr.mxu0 0.0
    %1401 = vmatpush2.msra.mxu0 0.0
    %1402 = vmatprep.subr.mxu0 0.0
    %1403 = vmatpush2.msra.mxu0 0.0
    %1404 = vmatprep.subr.mxu0 0.0
    %1405 = vmatpush2.msra.mxu0 0.0
    %1406 = vmatprep.subr.mxu0 0.0
    %1407 = vmatpush2.msra.mxu0 0.0
    %1408 = vmatprep.subr.mxu0 0.0
    %1409 = vmatpush2.msra.mxu0 0.0
    %1410 = vmatprep.subr.mxu0 0.0
    %1411 = vmatpush2.msra.mxu0 0.0
    %1412 = vmatprep.subr.mxu0 0.0
    %1413 = vmatpush2.msra.mxu0 0.0
    %1414 = vmatprep.subr.mxu0 0.0
    %1415 = vmatpush2.msra.mxu0 0.0
    %1416 = vmatprep.subr.mxu0 0.0
    %1417 = vmatpush2.msra.mxu0 0.0
    %1418 = vmatprep.subr.mxu0 0.0
    %1419 = vmatpush2.msra.mxu0 0.0
    %1420 = vmatprep.subr.mxu0 0.0
    %1421 = vmatpush2.msra.mxu0 0.0
    %1422 = vmatprep.subr.mxu0 0.0
    %1423 = vmatpush2.msra.mxu0 0.0
    %1424 = vmatprep.mubr.f32.mxu0 0.0
    %1425 = vmatmul.mubr.f32.gmra.mxu0 %v1355
    %v1426 = vpop.f32.mrf.mxu0
    %v1427 = vadd.f32 %v1352, %v1426
    %v1428 = vpop.f32.mrf.mxu0
    %1429 = vmatprep.mubr.f32.mxu0 0.0
    %1430 = vmatmul.mubr.f32.gmra.mxu0 %v1358
    %v1431 = vpop.f32.mrf.mxu0
    %v1432 = vadd.f32 %v1352, %v1431
    %v1433 = vpop.f32.mrf.mxu0
    %1434 = vdwg.mxu0
    %v1435 = vadd.f32 %v1230, %v1427
    %v1436 = vadd.f32 %v1231, %v1432
    %v1437 = vld [vmem:[%s3 + $0xe] sm:$0x1]
    %v1438 = vld [vmem:[%s3 + $0xf] sm:$0x1]
    %v1439 = vsel %vm76, %v1435, 0.0
    %1440 = vadd.xlane.f32.xlu0 %v1439
    %v1441 = vpop.xlane.xlu0 %1440
    %v1442 = vsel %vm76, %v1436, 0.0
    %1443 = vadd.xlane.f32.xlu0 %v1442
    %v1444 = vpop.xlane.xlu0 %1443
    %v1445 = vmul.f32 %v1441, %v83
    %v1446 = vmul.f32 %v1444, %v83
    %v1447 = vsub.f32 %v1435, %v1445
    %v1448 = vsub.f32 %v1436, %v1446
    %v1449 = vmul.f32 %v1447, %v1447
    %v1450 = vmul.f32 %v1448, %v1448
    %v1451 = vsel %vm76, %v1449, 0.0
    %1452 = vadd.xlane.f32.xlu0 %v1451
    %v1453 = vpop.xlane.xlu0 %1452
    %v1454 = vsel %vm76, %v1450, 0.0
    %1455 = vadd.xlane.f32.xlu0 %v1454
    %v1456 = vpop.xlane.xlu0 %1455
    %v1457 = vmul.f32 %v1453, %v83
    %v1458 = vmul.f32 %v1456, %v83
    %v1459 = vadd.f32 %v1457, 1e-12
    %v1460 = vadd.f32 %v1458, 1e-12
    %v1461 = vrsqrt.pop %v1459
    %v1462 = vrsqrt.pop %v1460
    %v1463 = vmul.f32 %v1447, %v1461
    %v1464 = vmul.f32 %v1448, %v1462
    %v1465 = vlaneseq
    %v1466 = vshrl.u32 %v1465, 7
    %v1467 = vsub.s32 0, %v1466
    %v1468 = vrot.slane %v1437, %v1467
    %v1469 = vmul.f32 %v1463, %v1468
    %v1470 = vmul.f32 %v1464, %v1468
    %v1471 = vlaneseq
    %v1472 = vshrl.u32 %v1471, 7
    %v1473 = vsub.s32 0, %v1472
    %v1474 = vrot.slane %v1438, %v1473
    %v1475 = vadd.f32 %v1469, %v1474
    %v1476 = vadd.f32 %v1470, %v1474
    %v1477 = vld [vmem:[#allocation2 + $0x140] sm:$0xff]
    %v1478 = vld [vmem:[#allocation2 + $0x148] sm:$0xff]
    %v1479 = vld [vmem:[#allocation2 + $0x150] sm:$0xff]
    %v1480 = vld [vmem:[#allocation2 + $0x158] sm:$0xff]
    %v1481 = vld [vmem:[%s3 + $0x10] sm:$0x1]
    %v1482 = vlaneseq
    %v1483 = vshrl.u32 %v1482, 7
    %v1484 = vsub.s32 0, %v1483
    %v1485 = vrot.slane %v1481, %v1484
    %v1487 = vsel %vm76, %v1475, 0
    %v1490 = vsel %vm76, %v1476, 0
    %1492 = vmatprep.subr.mxu0 0.0
    %1493 = vmatpush1.msra.mxu0 0.0
    %1494 = vmatprep.subr.mxu0 0.0
    %1495 = vmatpush1.msra.mxu0 0.0
    %1496 = vmatprep.subr.mxu0 0.0
    %1497 = vmatpush1.msra.mxu0 0.0
    %1498 = vmatprep.subr.mxu0 0.0
    %1499 = vmatpush1.msra.mxu0 0.0
    %1500 = vmatprep.subr.mxu0 0.0
    %1501 = vmatpush1.msra.mxu0 0.0
    %1502 = vmatprep.subr.mxu0 0.0
    %1503 = vmatpush1.msra.mxu0 0.0
    %1504 = vmatprep.subr.mxu0 0.0
    %1505 = vmatpush1.msra.mxu0 0.0
    %1506 = vmatprep.subr.mxu0 0.0
    %1507 = vmatpush1.msra.mxu0 0.0
    %1508 = vmatprep.subr.mxu0 0.0
    %1509 = vmatpush1.msra.mxu0 0.0
    %1510 = vmatprep.subr.mxu0 0.0
    %1511 = vmatpush1.msra.mxu0 0.0
    %1512 = vmatprep.subr.mxu0 0.0
    %1513 = vmatpush1.msra.mxu0 0.0
    %1514 = vmatprep.subr.mxu0 0.0
    %1515 = vmatpush1.msra.mxu0 0.0
    %1516 = vmatprep.subr.mxu0 0.0
    %1517 = vmatpush1.msra.mxu0 %v1480
    %1518 = vmatprep.subr.mxu0 0.0
    %1519 = vmatpush1.msra.mxu0 %v1479
    %1520 = vmatprep.subr.mxu0 0.0
    %1521 = vmatpush1.msra.mxu0 %v1478
    %1522 = vmatprep.subr.mxu0 0.0
    %1523 = vmatpush1.msra.mxu0 %v1477
    %1524 = vmatprep.subr.mxu0 0.0
    %1525 = vmatpush2.msra.mxu0 0.0
    %1526 = vmatprep.subr.mxu0 0.0
    %1527 = vmatpush2.msra.mxu0 0.0
    %1528 = vmatprep.subr.mxu0 0.0
    %1529 = vmatpush2.msra.mxu0 0.0
    %1530 = vmatprep.subr.mxu0 0.0
    %1531 = vmatpush2.msra.mxu0 0.0
    %1532 = vmatprep.subr.mxu0 0.0
    %1533 = vmatpush2.msra.mxu0 0.0
    %1534 = vmatprep.subr.mxu0 0.0
    %1535 = vmatpush2.msra.mxu0 0.0
    %1536 = vmatprep.subr.mxu0 0.0
    %1537 = vmatpush2.msra.mxu0 0.0
    %1538 = vmatprep.subr.mxu0 0.0
    %1539 = vmatpush2.msra.mxu0 0.0
    %1540 = vmatprep.subr.mxu0 0.0
    %1541 = vmatpush2.msra.mxu0 0.0
    %1542 = vmatprep.subr.mxu0 0.0
    %1543 = vmatpush2.msra.mxu0 0.0
    %1544 = vmatprep.subr.mxu0 0.0
    %1545 = vmatpush2.msra.mxu0 0.0
    %1546 = vmatprep.subr.mxu0 0.0
    %1547 = vmatpush2.msra.mxu0 0.0
    %1548 = vmatprep.subr.mxu0 0.0
    %1549 = vmatpush2.msra.mxu0 0.0
    %1550 = vmatprep.subr.mxu0 0.0
    %1551 = vmatpush2.msra.mxu0 0.0
    %1552 = vmatprep.subr.mxu0 0.0
    %1553 = vmatpush2.msra.mxu0 0.0
    %1554 = vmatprep.subr.mxu0 0.0
    %1555 = vmatpush2.msra.mxu0 0.0
    %1556 = vmatprep.mubr.f32.mxu0 0.0
    %1557 = vmatmul.mubr.f32.gmra.mxu0 %v1487
    %v1558 = vpop.f32.mrf.mxu0
    %v1559 = vadd.f32 %v1485, %v1558
    %v1560 = vpop.f32.mrf.mxu0
    %1561 = vmatprep.mubr.f32.mxu0 0.0
    %1562 = vmatmul.mubr.f32.gmra.mxu0 %v1490
    %v1563 = vpop.f32.mrf.mxu0
    %v1564 = vadd.f32 %v1485, %v1563
    %v1565 = vpop.f32.mrf.mxu0
    %1566 = vdwg.mxu0
    %v1567 = vld [vmem:[#allocation2 + $0x160] sm:$0xff]
    %v1568 = vld [vmem:[#allocation2 + $0x168] sm:$0xff]
    %v1569 = vld [vmem:[#allocation2 + $0x170] sm:$0xff]
    %v1570 = vld [vmem:[#allocation2 + $0x178] sm:$0xff]
    %v1571 = vld [vmem:[%s3 + $0x11] sm:$0x1]
    %v1572 = vlaneseq
    %v1573 = vshrl.u32 %v1572, 7
    %v1574 = vsub.s32 0, %v1573
    %v1575 = vrot.slane %v1571, %v1574
    %1576 = vmatprep.subr.mxu0 0.0
    %1577 = vmatpush1.msra.mxu0 0.0
    %1578 = vmatprep.subr.mxu0 0.0
    %1579 = vmatpush1.msra.mxu0 0.0
    %1580 = vmatprep.subr.mxu0 0.0
    %1581 = vmatpush1.msra.mxu0 0.0
    %1582 = vmatprep.subr.mxu0 0.0
    %1583 = vmatpush1.msra.mxu0 0.0
    %1584 = vmatprep.subr.mxu0 0.0
    %1585 = vmatpush1.msra.mxu0 0.0
    %1586 = vmatprep.subr.mxu0 0.0
    %1587 = vmatpush1.msra.mxu0 0.0
    %1588 = vmatprep.subr.mxu0 0.0
    %1589 = vmatpush1.msra.mxu0 0.0
    %1590 = vmatprep.subr.mxu0 0.0
    %1591 = vmatpush1.msra.mxu0 0.0
    %1592 = vmatprep.subr.mxu0 0.0
    %1593 = vmatpush1.msra.mxu0 0.0
    %1594 = vmatprep.subr.mxu0 0.0
    %1595 = vmatpush1.msra.mxu0 0.0
    %1596 = vmatprep.subr.mxu0 0.0
    %1597 = vmatpush1.msra.mxu0 0.0
    %1598 = vmatprep.subr.mxu0 0.0
    %1599 = vmatpush1.msra.mxu0 0.0
    %1600 = vmatprep.subr.mxu0 0.0
    %1601 = vmatpush1.msra.mxu0 %v1570
    %1602 = vmatprep.subr.mxu0 0.0
    %1603 = vmatpush1.msra.mxu0 %v1569
    %1604 = vmatprep.subr.mxu0 0.0
    %1605 = vmatpush1.msra.mxu0 %v1568
    %1606 = vmatprep.subr.mxu0 0.0
    %1607 = vmatpush1.msra.mxu0 %v1567
    %1608 = vmatprep.subr.mxu0 0.0
    %1609 = vmatpush2.msra.mxu0 0.0
    %1610 = vmatprep.subr.mxu0 0.0
    %1611 = vmatpush2.msra.mxu0 0.0
    %1612 = vmatprep.subr.mxu0 0.0
    %1613 = vmatpush2.msra.mxu0 0.0
    %1614 = vmatprep.subr.mxu0 0.0
    %1615 = vmatpush2.msra.mxu0 0.0
    %1616 = vmatprep.subr.mxu0 0.0
    %1617 = vmatpush2.msra.mxu0 0.0
    %1618 = vmatprep.subr.mxu0 0.0
    %1619 = vmatpush2.msra.mxu0 0.0
    %1620 = vmatprep.subr.mxu0 0.0
    %1621 = vmatpush2.msra.mxu0 0.0
    %1622 = vmatprep.subr.mxu0 0.0
    %1623 = vmatpush2.msra.mxu0 0.0
    %1624 = vmatprep.subr.mxu0 0.0
    %1625 = vmatpush2.msra.mxu0 0.0
    %1626 = vmatprep.subr.mxu0 0.0
    %1627 = vmatpush2.msra.mxu0 0.0
    %1628 = vmatprep.subr.mxu0 0.0
    %1629 = vmatpush2.msra.mxu0 0.0
    %1630 = vmatprep.subr.mxu0 0.0
    %1631 = vmatpush2.msra.mxu0 0.0
    %1632 = vmatprep.subr.mxu0 0.0
    %1633 = vmatpush2.msra.mxu0 0.0
    %1634 = vmatprep.subr.mxu0 0.0
    %1635 = vmatpush2.msra.mxu0 0.0
    %1636 = vmatprep.subr.mxu0 0.0
    %1637 = vmatpush2.msra.mxu0 0.0
    %1638 = vmatprep.subr.mxu0 0.0
    %1639 = vmatpush2.msra.mxu0 0.0
    %1640 = vmatprep.mubr.f32.mxu0 0.0
    %1641 = vmatmul.mubr.f32.gmra.mxu0 %v1487
    %v1642 = vpop.f32.mrf.mxu0
    %v1643 = vadd.f32 %v1575, %v1642
    %v1644 = vpop.f32.mrf.mxu0
    %1645 = vmatprep.mubr.f32.mxu0 0.0
    %1646 = vmatmul.mubr.f32.gmra.mxu0 %v1490
    %v1647 = vpop.f32.mrf.mxu0
    %v1648 = vadd.f32 %v1575, %v1647
    %v1649 = vpop.f32.mrf.mxu0
    %1650 = vdwg.mxu0
    %v1651 = vld [vmem:[#allocation2 + $0x180] sm:$0xff]
    %v1652 = vld [vmem:[#allocation2 + $0x188] sm:$0xff]
    %v1653 = vld [vmem:[#allocation2 + $0x190] sm:$0xff]
    %v1654 = vld [vmem:[#allocation2 + $0x198] sm:$0xff]
    %v1655 = vld [vmem:[%s3 + $0x12] sm:$0x1]
    %v1656 = vlaneseq
    %v1657 = vshrl.u32 %v1656, 7
    %v1658 = vsub.s32 0, %v1657
    %v1659 = vrot.slane %v1655, %v1658
    %1660 = vmatprep.subr.mxu0 0.0
    %1661 = vmatpush1.msra.mxu0 0.0
    %1662 = vmatprep.subr.mxu0 0.0
    %1663 = vmatpush1.msra.mxu0 0.0
    %1664 = vmatprep.subr.mxu0 0.0
    %1665 = vmatpush1.msra.mxu0 0.0
    %1666 = vmatprep.subr.mxu0 0.0
    %1667 = vmatpush1.msra.mxu0 0.0
    %1668 = vmatprep.subr.mxu0 0.0
    %1669 = vmatpush1.msra.mxu0 0.0
    %1670 = vmatprep.subr.mxu0 0.0
    %1671 = vmatpush1.msra.mxu0 0.0
    %1672 = vmatprep.subr.mxu0 0.0
    %1673 = vmatpush1.msra.mxu0 0.0
    %1674 = vmatprep.subr.mxu0 0.0
    %1675 = vmatpush1.msra.mxu0 0.0
    %1676 = vmatprep.subr.mxu0 0.0
    %1677 = vmatpush1.msra.mxu0 0.0
    %1678 = vmatprep.subr.mxu0 0.0
    %1679 = vmatpush1.msra.mxu0 0.0
    %1680 = vmatprep.subr.mxu0 0.0
    %1681 = vmatpush1.msra.mxu0 0.0
    %1682 = vmatprep.subr.mxu0 0.0
    %1683 = vmatpush1.msra.mxu0 0.0
    %1684 = vmatprep.subr.mxu0 0.0
    %1685 = vmatpush1.msra.mxu0 %v1654
    %1686 = vmatprep.subr.mxu0 0.0
    %1687 = vmatpush1.msra.mxu0 %v1653
    %1688 = vmatprep.subr.mxu0 0.0
    %1689 = vmatpush1.msra.mxu0 %v1652
    %1690 = vmatprep.subr.mxu0 0.0
    %1691 = vmatpush1.msra.mxu0 %v1651
    %1692 = vmatprep.subr.mxu0 0.0
    %1693 = vmatpush2.msra.mxu0 0.0
    %1694 = vmatprep.subr.mxu0 0.0
    %1695 = vmatpush2.msra.mxu0 0.0
    %1696 = vmatprep.subr.mxu0 0.0
    %1697 = vmatpush2.msra.mxu0 0.0
    %1698 = vmatprep.subr.mxu0 0.0
    %1699 = vmatpush2.msra.mxu0 0.0
    %1700 = vmatprep.subr.mxu0 0.0
    %1701 = vmatpush2.msra.mxu0 0.0
    %1702 = vmatprep.subr.mxu0 0.0
    %1703 = vmatpush2.msra.mxu0 0.0
    %1704 = vmatprep.subr.mxu0 0.0
    %1705 = vmatpush2.msra.mxu0 0.0
    %1706 = vmatprep.subr.mxu0 0.0
    %1707 = vmatpush2.msra.mxu0 0.0
    %1708 = vmatprep.subr.mxu0 0.0
    %1709 = vmatpush2.msra.mxu0 0.0
    %1710 = vmatprep.subr.mxu0 0.0
    %1711 = vmatpush2.msra.mxu0 0.0
    %1712 = vmatprep.subr.mxu0 0.0
    %1713 = vmatpush2.msra.mxu0 0.0
    %1714 = vmatprep.subr.mxu0 0.0
    %1715 = vmatpush2.msra.mxu0 0.0
    %1716 = vmatprep.subr.mxu0 0.0
    %1717 = vmatpush2.msra.mxu0 0.0
    %1718 = vmatprep.subr.mxu0 0.0
    %1719 = vmatpush2.msra.mxu0 0.0
    %1720 = vmatprep.subr.mxu0 0.0
    %1721 = vmatpush2.msra.mxu0 0.0
    %1722 = vmatprep.subr.mxu0 0.0
    %1723 = vmatpush2.msra.mxu0 0.0
    %1724 = vmatprep.mubr.f32.mxu0 0.0
    %1725 = vmatmul.mubr.f32.gmra.mxu0 %v1487
    %v1726 = vpop.f32.mrf.mxu0
    %v1727 = vadd.f32 %v1659, %v1726
    %v1728 = vpop.f32.mrf.mxu0
    %1729 = vmatprep.mubr.f32.mxu0 0.0
    %1730 = vmatmul.mubr.f32.gmra.mxu0 %v1490
    %v1731 = vpop.f32.mrf.mxu0
    %v1732 = vadd.f32 %v1659, %v1731
    %v1733 = vpop.f32.mrf.mxu0
    %1734 = vdwg.mxu0
    %v1735 = vld [vmem:[#allocation2 + $0x1a0] sm:$0xff]
    %v1736 = vld [vmem:[#allocation2 + $0x1a8] sm:$0xff]
    %v1737 = vld [vmem:[#allocation2 + $0x1b0] sm:$0xff]
    %v1738 = vld [vmem:[#allocation2 + $0x1b8] sm:$0xff]
    %v1739 = vld [vmem:[%s3 + $0x13] sm:$0x1]
    %v1740 = vlaneseq
    %v1741 = vshrl.u32 %v1740, 7
    %v1742 = vsub.s32 0, %v1741
    %v1743 = vrot.slane %v1739, %v1742
    %1744 = vmatprep.subr.mxu0 0.0
    %1745 = vmatpush1.msra.mxu0 0.0
    %1746 = vmatprep.subr.mxu0 0.0
    %1747 = vmatpush1.msra.mxu0 0.0
    %1748 = vmatprep.subr.mxu0 0.0
    %1749 = vmatpush1.msra.mxu0 0.0
    %1750 = vmatprep.subr.mxu0 0.0
    %1751 = vmatpush1.msra.mxu0 0.0
    %1752 = vmatprep.subr.mxu0 0.0
    %1753 = vmatpush1.msra.mxu0 0.0
    %1754 = vmatprep.subr.mxu0 0.0
    %1755 = vmatpush1.msra.mxu0 0.0
    %1756 = vmatprep.subr.mxu0 0.0
    %1757 = vmatpush1.msra.mxu0 0.0
    %1758 = vmatprep.subr.mxu0 0.0
    %1759 = vmatpush1.msra.mxu0 0.0
    %1760 = vmatprep.subr.mxu0 0.0
    %1761 = vmatpush1.msra.mxu0 0.0
    %1762 = vmatprep.subr.mxu0 0.0
    %1763 = vmatpush1.msra.mxu0 0.0
    %1764 = vmatprep.subr.mxu0 0.0
    %1765 = vmatpush1.msra.mxu0 0.0
    %1766 = vmatprep.subr.mxu0 0.0
    %1767 = vmatpush1.msra.mxu0 0.0
    %1768 = vmatprep.subr.mxu0 0.0
    %1769 = vmatpush1.msra.mxu0 %v1738
    %1770 = vmatprep.subr.mxu0 0.0
    %1771 = vmatpush1.msra.mxu0 %v1737
    %1772 = vmatprep.subr.mxu0 0.0
    %1773 = vmatpush1.msra.mxu0 %v1736
    %1774 = vmatprep.subr.mxu0 0.0
    %1775 = vmatpush1.msra.mxu0 %v1735
    %1776 = vmatprep.subr.mxu0 0.0
    %1777 = vmatpush2.msra.mxu0 0.0
    %1778 = vmatprep.subr.mxu0 0.0
    %1779 = vmatpush2.msra.mxu0 0.0
    %1780 = vmatprep.subr.mxu0 0.0
    %1781 = vmatpush2.msra.mxu0 0.0
    %1782 = vmatprep.subr.mxu0 0.0
    %1783 = vmatpush2.msra.mxu0 0.0
    %1784 = vmatprep.subr.mxu0 0.0
    %1785 = vmatpush2.msra.mxu0 0.0
    %1786 = vmatprep.subr.mxu0 0.0
    %1787 = vmatpush2.msra.mxu0 0.0
    %1788 = vmatprep.subr.mxu0 0.0
    %1789 = vmatpush2.msra.mxu0 0.0
    %1790 = vmatprep.subr.mxu0 0.0
    %1791 = vmatpush2.msra.mxu0 0.0
    %1792 = vmatprep.subr.mxu0 0.0
    %1793 = vmatpush2.msra.mxu0 0.0
    %1794 = vmatprep.subr.mxu0 0.0
    %1795 = vmatpush2.msra.mxu0 0.0
    %1796 = vmatprep.subr.mxu0 0.0
    %1797 = vmatpush2.msra.mxu0 0.0
    %1798 = vmatprep.subr.mxu0 0.0
    %1799 = vmatpush2.msra.mxu0 0.0
    %1800 = vmatprep.subr.mxu0 0.0
    %1801 = vmatpush2.msra.mxu0 0.0
    %1802 = vmatprep.subr.mxu0 0.0
    %1803 = vmatpush2.msra.mxu0 0.0
    %1804 = vmatprep.subr.mxu0 0.0
    %1805 = vmatpush2.msra.mxu0 0.0
    %1806 = vmatprep.subr.mxu0 0.0
    %1807 = vmatpush2.msra.mxu0 0.0
    %1808 = vmatprep.mubr.f32.mxu0 0.0
    %1809 = vmatmul.mubr.f32.gmra.mxu0 %v1487
    %v1810 = vpop.f32.mrf.mxu0
    %v1811 = vadd.f32 %v1743, %v1810
    %v1812 = vpop.f32.mrf.mxu0
    %1813 = vmatprep.mubr.f32.mxu0 0.0
    %1814 = vmatmul.mubr.f32.gmra.mxu0 %v1490
    %v1815 = vpop.f32.mrf.mxu0
    %v1816 = vadd.f32 %v1743, %v1815
    %v1817 = vpop.f32.mrf.mxu0
    %1818 = vdwg.mxu0
    %v1819 = vld [vmem:[#allocation2 + $0x1c0] sm:$0xff]
    %v1820 = vld [vmem:[#allocation2 + $0x1c8] sm:$0xff]
    %v1821 = vld [vmem:[#allocation2 + $0x1d0] sm:$0xff]
    %v1822 = vld [vmem:[#allocation2 + $0x1d8] sm:$0xff]
    %v1823 = vld [vmem:[%s3 + $0x14] sm:$0x1]
    %v1824 = vlaneseq
    %v1825 = vshrl.u32 %v1824, 7
    %v1826 = vsub.s32 0, %v1825
    %v1827 = vrot.slane %v1823, %v1826
    %1828 = vmatprep.subr.mxu0 0.0
    %1829 = vmatpush1.msra.mxu0 0.0
    %1830 = vmatprep.subr.mxu0 0.0
    %1831 = vmatpush1.msra.mxu0 0.0
    %1832 = vmatprep.subr.mxu0 0.0
    %1833 = vmatpush1.msra.mxu0 0.0
    %1834 = vmatprep.subr.mxu0 0.0
    %1835 = vmatpush1.msra.mxu0 0.0
    %1836 = vmatprep.subr.mxu0 0.0
    %1837 = vmatpush1.msra.mxu0 0.0
    %1838 = vmatprep.subr.mxu0 0.0
    %1839 = vmatpush1.msra.mxu0 0.0
    %1840 = vmatprep.subr.mxu0 0.0
    %1841 = vmatpush1.msra.mxu0 0.0
    %1842 = vmatprep.subr.mxu0 0.0
    %1843 = vmatpush1.msra.mxu0 0.0
    %1844 = vmatprep.subr.mxu0 0.0
    %1845 = vmatpush1.msra.mxu0 0.0
    %1846 = vmatprep.subr.mxu0 0.0
    %1847 = vmatpush1.msra.mxu0 0.0
    %1848 = vmatprep.subr.mxu0 0.0
    %1849 = vmatpush1.msra.mxu0 0.0
    %1850 = vmatprep.subr.mxu0 0.0
    %1851 = vmatpush1.msra.mxu0 0.0
    %1852 = vmatprep.subr.mxu0 0.0
    %1853 = vmatpush1.msra.mxu0 %v1822
    %1854 = vmatprep.subr.mxu0 0.0
    %1855 = vmatpush1.msra.mxu0 %v1821
    %1856 = vmatprep.subr.mxu0 0.0
    %1857 = vmatpush1.msra.mxu0 %v1820
    %1858 = vmatprep.subr.mxu0 0.0
    %1859 = vmatpush1.msra.mxu0 %v1819
    %1860 = vmatprep.subr.mxu0 0.0
    %1861 = vmatpush2.msra.mxu0 0.0
    %1862 = vmatprep.subr.mxu0 0.0
    %1863 = vmatpush2.msra.mxu0 0.0
    %1864 = vmatprep.subr.mxu0 0.0
    %1865 = vmatpush2.msra.mxu0 0.0
    %1866 = vmatprep.subr.mxu0 0.0
    %1867 = vmatpush2.msra.mxu0 0.0
    %1868 = vmatprep.subr.mxu0 0.0
    %1869 = vmatpush2.msra.mxu0 0.0
    %1870 = vmatprep.subr.mxu0 0.0
    %1871 = vmatpush2.msra.mxu0 0.0
    %1872 = vmatprep.subr.mxu0 0.0
    %1873 = vmatpush2.msra.mxu0 0.0
    %1874 = vmatprep.subr.mxu0 0.0
    %1875 = vmatpush2.msra.mxu0 0.0
    %1876 = vmatprep.subr.mxu0 0.0
    %1877 = vmatpush2.msra.mxu0 0.0
    %1878 = vmatprep.subr.mxu0 0.0
    %1879 = vmatpush2.msra.mxu0 0.0
    %1880 = vmatprep.subr.mxu0 0.0
    %1881 = vmatpush2.msra.mxu0 0.0
    %1882 = vmatprep.subr.mxu0 0.0
    %1883 = vmatpush2.msra.mxu0 0.0
    %1884 = vmatprep.subr.mxu0 0.0
    %1885 = vmatpush2.msra.mxu0 0.0
    %1886 = vmatprep.subr.mxu0 0.0
    %1887 = vmatpush2.msra.mxu0 0.0
    %1888 = vmatprep.subr.mxu0 0.0
    %1889 = vmatpush2.msra.mxu0 0.0
    %1890 = vmatprep.subr.mxu0 0.0
    %1891 = vmatpush2.msra.mxu0 0.0
    %1892 = vmatprep.mubr.f32.mxu0 0.0
    %1893 = vmatmul.mubr.f32.gmra.mxu0 %v1487
    %v1894 = vpop.f32.mrf.mxu0
    %v1895 = vadd.f32 %v1827, %v1894
    %v1896 = vpop.f32.mrf.mxu0
    %1897 = vmatprep.mubr.f32.mxu0 0.0
    %1898 = vmatmul.mubr.f32.gmra.mxu0 %v1490
    %v1899 = vpop.f32.mrf.mxu0
    %v1900 = vadd.f32 %v1827, %v1899
    %v1901 = vpop.f32.mrf.mxu0
    %1902 = vdwg.mxu0
    %v1903 = vld [vmem:[#allocation2 + $0x1e0] sm:$0xff]
    %v1904 = vld [vmem:[#allocation2 + $0x1e8] sm:$0xff]
    %v1905 = vld [vmem:[#allocation2 + $0x1f0] sm:$0xff]
    %v1906 = vld [vmem:[#allocation2 + $0x1f8] sm:$0xff]
    %v1907 = vld [vmem:[%s3 + $0x15] sm:$0x1]
    %v1908 = vlaneseq
    %v1909 = vshrl.u32 %v1908, 7
    %v1910 = vsub.s32 0, %v1909
    %v1911 = vrot.slane %v1907, %v1910
    %1912 = vmatprep.subr.mxu0 0.0
    %1913 = vmatpush1.msra.mxu0 0.0
    %1914 = vmatprep.subr.mxu0 0.0
    %1915 = vmatpush1.msra.mxu0 0.0
    %1916 = vmatprep.subr.mxu0 0.0
    %1917 = vmatpush1.msra.mxu0 0.0
    %1918 = vmatprep.subr.mxu0 0.0
    %1919 = vmatpush1.msra.mxu0 0.0
    %1920 = vmatprep.subr.mxu0 0.0
    %1921 = vmatpush1.msra.mxu0 0.0
    %1922 = vmatprep.subr.mxu0 0.0
    %1923 = vmatpush1.msra.mxu0 0.0
    %1924 = vmatprep.subr.mxu0 0.0
    %1925 = vmatpush1.msra.mxu0 0.0
    %1926 = vmatprep.subr.mxu0 0.0
    %1927 = vmatpush1.msra.mxu0 0.0
    %1928 = vmatprep.subr.mxu0 0.0
    %1929 = vmatpush1.msra.mxu0 0.0
    %1930 = vmatprep.subr.mxu0 0.0
    %1931 = vmatpush1.msra.mxu0 0.0
    %1932 = vmatprep.subr.mxu0 0.0
    %1933 = vmatpush1.msra.mxu0 0.0
    %1934 = vmatprep.subr.mxu0 0.0
    %1935 = vmatpush1.msra.mxu0 0.0
    %1936 = vmatprep.subr.mxu0 0.0
    %1937 = vmatpush1.msra.mxu0 %v1906
    %1938 = vmatprep.subr.mxu0 0.0
    %1939 = vmatpush1.msra.mxu0 %v1905
    %1940 = vmatprep.subr.mxu0 0.0
    %1941 = vmatpush1.msra.mxu0 %v1904
    %1942 = vmatprep.subr.mxu0 0.0
    %1943 = vmatpush1.msra.mxu0 %v1903
    %1944 = vmatprep.subr.mxu0 0.0
    %1945 = vmatpush2.msra.mxu0 0.0
    %1946 = vmatprep.subr.mxu0 0.0
    %1947 = vmatpush2.msra.mxu0 0.0
    %1948 = vmatprep.subr.mxu0 0.0
    %1949 = vmatpush2.msra.mxu0 0.0
    %1950 = vmatprep.subr.mxu0 0.0
    %1951 = vmatpush2.msra.mxu0 0.0
    %1952 = vmatprep.subr.mxu0 0.0
    %1953 = vmatpush2.msra.mxu0 0.0
    %1954 = vmatprep.subr.mxu0 0.0
    %1955 = vmatpush2.msra.mxu0 0.0
    %1956 = vmatprep.subr.mxu0 0.0
    %1957 = vmatpush2.msra.mxu0 0.0
    %1958 = vmatprep.subr.mxu0 0.0
    %1959 = vmatpush2.msra.mxu0 0.0
    %1960 = vmatprep.subr.mxu0 0.0
    %1961 = vmatpush2.msra.mxu0 0.0
    %1962 = vmatprep.subr.mxu0 0.0
    %1963 = vmatpush2.msra.mxu0 0.0
    %1964 = vmatprep.subr.mxu0 0.0
    %1965 = vmatpush2.msra.mxu0 0.0
    %1966 = vmatprep.subr.mxu0 0.0
    %1967 = vmatpush2.msra.mxu0 0.0
    %1968 = vmatprep.subr.mxu0 0.0
    %1969 = vmatpush2.msra.mxu0 0.0
    %1970 = vmatprep.subr.mxu0 0.0
    %1971 = vmatpush2.msra.mxu0 0.0
    %1972 = vmatprep.subr.mxu0 0.0
    %1973 = vmatpush2.msra.mxu0 0.0
    %1974 = vmatprep.subr.mxu0 0.0
    %1975 = vmatpush2.msra.mxu0 0.0
    %1976 = vmatprep.mubr.f32.mxu0 0.0
    %1977 = vmatmul.mubr.f32.gmra.mxu0 %v1487
    %v1978 = vpop.f32.mrf.mxu0
    %v1979 = vadd.f32 %v1911, %v1978
    %v1980 = vpop.f32.mrf.mxu0
    %1981 = vmatprep.mubr.f32.mxu0 0.0
    %1982 = vmatmul.mubr.f32.gmra.mxu0 %v1490
    %v1983 = vpop.f32.mrf.mxu0
    %v1984 = vadd.f32 %v1911, %v1983
    %v1985 = vpop.f32.mrf.mxu0
    %1986 = vdwg.mxu0
    %v1988 = vsel %vm626, %v1559, 0
    %v1991 = vsel %vm626, %v1564, 0
    %v1994 = vsel %vm626, %v1727, 0
    %v1997 = vsel %vm626, %v1732, 0
    %1999 = vmatprep.subr.mxu0 0.0
    %2000 = vmatpush1.xpose.msra.mxu0 0.0
    %2001 = vmatprep.subr.mxu0 0.0
    %2002 = vmatpush1.xpose.msra.mxu0 0.0
    %2003 = vmatprep.subr.mxu0 0.0
    %2004 = vmatpush1.xpose.msra.mxu0 0.0
    %2005 = vmatprep.subr.mxu0 0.0
    %2006 = vmatpush1.xpose.msra.mxu0 0.0
    %2007 = vmatprep.subr.mxu0 0.0
    %2008 = vmatpush1.xpose.msra.mxu0 0.0
    %2009 = vmatprep.subr.mxu0 0.0
    %2010 = vmatpush1.xpose.msra.mxu0 0.0
    %2011 = vmatprep.subr.mxu0 0.0
    %2012 = vmatpush1.xpose.msra.mxu0 0.0
    %2013 = vmatprep.subr.mxu0 0.0
    %2014 = vmatpush1.xpose.msra.mxu0 0.0
    %2015 = vmatprep.subr.mxu0 0.0
    %2016 = vmatpush1.xpose.msra.mxu0 0.0
    %2017 = vmatprep.subr.mxu0 0.0
    %2018 = vmatpush1.xpose.msra.mxu0 0.0
    %2019 = vmatprep.subr.mxu0 0.0
    %2020 = vmatpush1.xpose.msra.mxu0 0.0
    %2021 = vmatprep.subr.mxu0 0.0
    %2022 = vmatpush1.xpose.msra.mxu0 0.0
    %2023 = vmatprep.subr.mxu0 0.0
    %2024 = vmatpush1.xpose.msra.mxu0 0.0
    %2025 = vmatprep.subr.mxu0 0.0
    %2026 = vmatpush1.xpose.msra.mxu0 0.0
    %2027 = vmatprep.subr.mxu0 0.0
    %2028 = vmatpush1.xpose.msra.mxu0 %v1997
    %2029 = vmatprep.subr.mxu0 0.0
    %2030 = vmatpush1.xpose.msra.mxu0 %v1994
    %2031 = vmatprep.subr.mxu0 0.0
    %2032 = vmatpush2.xpose.msra.mxu0 0.0
    %2033 = vmatprep.subr.mxu0 0.0
    %2034 = vmatpush2.xpose.msra.mxu0 0.0
    %2035 = vmatprep.subr.mxu0 0.0
    %2036 = vmatpush2.xpose.msra.mxu0 0.0
    %2037 = vmatprep.subr.mxu0 0.0
    %2038 = vmatpush2.xpose.msra.mxu0 0.0
    %2039 = vmatprep.subr.mxu0 0.0
    %2040 = vmatpush2.xpose.msra.mxu0 0.0
    %2041 = vmatprep.subr.mxu0 0.0
    %2042 = vmatpush2.xpose.msra.mxu0 0.0
    %2043 = vmatprep.subr.mxu0 0.0
    %2044 = vmatpush2.xpose.msra.mxu0 0.0
    %2045 = vmatprep.subr.mxu0 0.0
    %2046 = vmatpush2.xpose.msra.mxu0 0.0
    %2047 = vmatprep.subr.mxu0 0.0
    %2048 = vmatpush2.xpose.msra.mxu0 0.0
    %2049 = vmatprep.subr.mxu0 0.0
    %2050 = vmatpush2.xpose.msra.mxu0 0.0
    %2051 = vmatprep.subr.mxu0 0.0
    %2052 = vmatpush2.xpose.msra.mxu0 0.0
    %2053 = vmatprep.subr.mxu0 0.0
    %2054 = vmatpush2.xpose.msra.mxu0 0.0
    %2055 = vmatprep.subr.mxu0 0.0
    %2056 = vmatpush2.xpose.msra.mxu0 0.0
    %2057 = vmatprep.subr.mxu0 0.0
    %2058 = vmatpush2.xpose.msra.mxu0 0.0
    %2059 = vmatprep.subr.mxu0 0.0
    %2060 = vmatpush2.xpose.msra.mxu0 0.0
    %2061 = vmatprep.subr.mxu0 0.0
    %2062 = vmatpush2.xpose.msra.mxu0 0.0
    %2063 = vmatprep.mubr.f32.mxu0 0.0
    %2064 = vmatmul.mubr.f32.gmra.mxu0 %v1988
    %v2065 = vpop.f32.mrf.mxu0
    %v2066 = vadd.f32 0.0, %v2065
    %v2067 = vpop.f32.mrf.mxu0
    %2068 = vmatprep.mubr.f32.mxu0 0.0
    %2069 = vmatmul.mubr.f32.gmra.mxu0 %v1991
    %v2070 = vpop.f32.mrf.mxu0
    %v2071 = vadd.f32 0.0, %v2070
    %v2072 = vpop.f32.mrf.mxu0
    %2073 = vdwg.mxu0
    %v2075 = vsel %vm626, %v1643, 0
    %v2078 = vsel %vm626, %v1648, 0
    %v2081 = vsel %vm626, %v1811, 0
    %v2084 = vsel %vm626, %v1816, 0
    %2086 = vmatprep.subr.mxu0 0.0
    %2087 = vmatpush1.xpose.msra.mxu0 0.0
    %2088 = vmatprep.subr.mxu0 0.0
    %2089 = vmatpush1.xpose.msra.mxu0 0.0
    %2090 = vmatprep.subr.mxu0 0.0
    %2091 = vmatpush1.xpose.msra.mxu0 0.0
    %2092 = vmatprep.subr.mxu0 0.0
    %2093 = vmatpush1.xpose.msra.mxu0 0.0
    %2094 = vmatprep.subr.mxu0 0.0
    %2095 = vmatpush1.xpose.msra.mxu0 0.0
    %2096 = vmatprep.subr.mxu0 0.0
    %2097 = vmatpush1.xpose.msra.mxu0 0.0
    %2098 = vmatprep.subr.mxu0 0.0
    %2099 = vmatpush1.xpose.msra.mxu0 0.0
    %2100 = vmatprep.subr.mxu0 0.0
    %2101 = vmatpush1.xpose.msra.mxu0 0.0
    %2102 = vmatprep.subr.mxu0 0.0
    %2103 = vmatpush1.xpose.msra.mxu0 0.0
    %2104 = vmatprep.subr.mxu0 0.0
    %2105 = vmatpush1.xpose.msra.mxu0 0.0
    %2106 = vmatprep.subr.mxu0 0.0
    %2107 = vmatpush1.xpose.msra.mxu0 0.0
    %2108 = vmatprep.subr.mxu0 0.0
    %2109 = vmatpush1.xpose.msra.mxu0 0.0
    %2110 = vmatprep.subr.mxu0 0.0
    %2111 = vmatpush1.xpose.msra.mxu0 0.0
    %2112 = vmatprep.subr.mxu0 0.0
    %2113 = vmatpush1.xpose.msra.mxu0 0.0
    %2114 = vmatprep.subr.mxu0 0.0
    %2115 = vmatpush1.xpose.msra.mxu0 %v2084
    %2116 = vmatprep.subr.mxu0 0.0
    %2117 = vmatpush1.xpose.msra.mxu0 %v2081
    %2118 = vmatprep.subr.mxu0 0.0
    %2119 = vmatpush2.xpose.msra.mxu0 0.0
    %2120 = vmatprep.subr.mxu0 0.0
    %2121 = vmatpush2.xpose.msra.mxu0 0.0
    %2122 = vmatprep.subr.mxu0 0.0
    %2123 = vmatpush2.xpose.msra.mxu0 0.0
    %2124 = vmatprep.subr.mxu0 0.0
    %2125 = vmatpush2.xpose.msra.mxu0 0.0
    %2126 = vmatprep.subr.mxu0 0.0
    %2127 = vmatpush2.xpose.msra.mxu0 0.0
    %2128 = vmatprep.subr.mxu0 0.0
    %2129 = vmatpush2.xpose.msra.mxu0 0.0
    %2130 = vmatprep.subr.mxu0 0.0
    %2131 = vmatpush2.xpose.msra.mxu0 0.0
    %2132 = vmatprep.subr.mxu0 0.0
    %2133 = vmatpush2.xpose.msra.mxu0 0.0
    %2134 = vmatprep.subr.mxu0 0.0
    %2135 = vmatpush2.xpose.msra.mxu0 0.0
    %2136 = vmatprep.subr.mxu0 0.0
    %2137 = vmatpush2.xpose.msra.mxu0 0.0
    %2138 = vmatprep.subr.mxu0 0.0
    %2139 = vmatpush2.xpose.msra.mxu0 0.0
    %2140 = vmatprep.subr.mxu0 0.0
    %2141 = vmatpush2.xpose.msra.mxu0 0.0
    %2142 = vmatprep.subr.mxu0 0.0
    %2143 = vmatpush2.xpose.msra.mxu0 0.0
    %2144 = vmatprep.subr.mxu0 0.0
    %2145 = vmatpush2.xpose.msra.mxu0 0.0
    %2146 = vmatprep.subr.mxu0 0.0
    %2147 = vmatpush2.xpose.msra.mxu0 0.0
    %2148 = vmatprep.subr.mxu0 0.0
    %2149 = vmatpush2.xpose.msra.mxu0 0.0
    %2150 = vmatprep.mubr.f32.mxu0 0.0
    %2151 = vmatmul.mubr.f32.gmra.mxu0 %v2075
    %v2152 = vpop.f32.mrf.mxu0
    %v2153 = vadd.f32 0.0, %v2152
    %v2154 = vpop.f32.mrf.mxu0
    %2155 = vmatprep.mubr.f32.mxu0 0.0
    %2156 = vmatmul.mubr.f32.gmra.mxu0 %v2078
    %v2157 = vpop.f32.mrf.mxu0
    %v2158 = vadd.f32 0.0, %v2157
    %v2159 = vpop.f32.mrf.mxu0
    %2160 = vdwg.mxu0
    %v2161 = vmul.f32 %v2066, 0.25
    %v2162 = vmul.f32 %v2071, 0.25
    %v2163 = vmul.f32 %v2153, 0.25
    %v2164 = vmul.f32 %v2158, 0.25
    %v2165 = vadd.f32 %v2161, %v72
    %v2166 = vadd.f32 %v2162, %v73
    %v2167 = vadd.f32 %v2163, %v72
    %v2168 = vadd.f32 %v2164, %v73
    %v2169 = vsel %vm626, %v2165, -inf
    %2170 = vmax.xlane.f32.xlu0 %v2169
    %v2171 = vpop.xlane.xlu0 %2170
    %v2172 = vsel %vm626, %v2166, -inf
    %2173 = vmax.xlane.f32.xlu0 %v2172
    %v2174 = vpop.xlane.xlu0 %2173
    %v2175 = vsel %vm626, %v2167, -inf
    %2176 = vmax.xlane.f32.xlu0 %v2175
    %v2177 = vpop.xlane.xlu0 %2176
    %v2178 = vsel %vm626, %v2168, -inf
    %2179 = vmax.xlane.f32.xlu0 %v2178
    %v2180 = vpop.xlane.xlu0 %2179
    %v2181 = vsub.f32 %v2165, %v2171
    %v2182 = vsub.f32 %v2166, %v2174
    %v2183 = vsub.f32 %v2167, %v2177
    %v2184 = vsub.f32 %v2168, %v2180
    %v2185 = vmul.f32 %v2181, 1.442695
    %v2186 = vpow.pop %v2185
    %v2187 = vmul.f32 %v2182, 1.442695
    %v2188 = vpow.pop %v2187
    %v2189 = vmul.f32 %v2183, 1.442695
    %v2190 = vpow.pop %v2189
    %v2191 = vmul.f32 %v2184, 1.442695
    %v2192 = vpow.pop %v2191
    %v2193 = vsel %vm626, %v2186, 0.0
    %2194 = vadd.xlane.f32.xlu0 %v2193
    %v2195 = vpop.xlane.xlu0 %2194
    %v2196 = vsel %vm626, %v2188, 0.0
    %2197 = vadd.xlane.f32.xlu0 %v2196
    %v2198 = vpop.xlane.xlu0 %2197
    %v2199 = vsel %vm626, %v2190, 0.0
    %2200 = vadd.xlane.f32.xlu0 %v2199
    %v2201 = vpop.xlane.xlu0 %2200
    %v2202 = vsel %vm626, %v2192, 0.0
    %2203 = vadd.xlane.f32.xlu0 %v2202
    %v2204 = vpop.xlane.xlu0 %2203
    %v2206 = vsel %vm626, %v2186, 0
    %v2209 = vsel %vm626, %v2188, 0
    %2211 = vmatprep.subr.mxu0 0.0
    %2212 = vmatpush1.msra.mxu0 0.0
    %2213 = vmatprep.subr.mxu0 0.0
    %2214 = vmatpush1.msra.mxu0 0.0
    %2215 = vmatprep.subr.mxu0 0.0
    %2216 = vmatpush1.msra.mxu0 0.0
    %2217 = vmatprep.subr.mxu0 0.0
    %2218 = vmatpush1.msra.mxu0 0.0
    %2219 = vmatprep.subr.mxu0 0.0
    %2220 = vmatpush1.msra.mxu0 0.0
    %2221 = vmatprep.subr.mxu0 0.0
    %2222 = vmatpush1.msra.mxu0 0.0
    %2223 = vmatprep.subr.mxu0 0.0
    %2224 = vmatpush1.msra.mxu0 0.0
    %2225 = vmatprep.subr.mxu0 0.0
    %2226 = vmatpush1.msra.mxu0 0.0
    %2227 = vmatprep.subr.mxu0 0.0
    %2228 = vmatpush1.msra.mxu0 0.0
    %2229 = vmatprep.subr.mxu0 0.0
    %2230 = vmatpush1.msra.mxu0 0.0
    %2231 = vmatprep.subr.mxu0 0.0
    %2232 = vmatpush1.msra.mxu0 0.0
    %2233 = vmatprep.subr.mxu0 0.0
    %2234 = vmatpush1.msra.mxu0 0.0
    %2235 = vmatprep.subr.mxu0 0.0
    %2236 = vmatpush1.msra.mxu0 0.0
    %2237 = vmatprep.subr.mxu0 0.0
    %2238 = vmatpush1.msra.mxu0 0.0
    %2239 = vmatprep.subr.mxu0 0.0
    %2240 = vmatpush1.msra.mxu0 %v1900
    %2241 = vmatprep.subr.mxu0 0.0
    %2242 = vmatpush1.msra.mxu0 %v1895
    %2243 = vmatprep.subr.mxu0 0.0
    %2244 = vmatpush2.msra.mxu0 0.0
    %2245 = vmatprep.subr.mxu0 0.0
    %2246 = vmatpush2.msra.mxu0 0.0
    %2247 = vmatprep.subr.mxu0 0.0
    %2248 = vmatpush2.msra.mxu0 0.0
    %2249 = vmatprep.subr.mxu0 0.0
    %2250 = vmatpush2.msra.mxu0 0.0
    %2251 = vmatprep.subr.mxu0 0.0
    %2252 = vmatpush2.msra.mxu0 0.0
    %2253 = vmatprep.subr.mxu0 0.0
    %2254 = vmatpush2.msra.mxu0 0.0
    %2255 = vmatprep.subr.mxu0 0.0
    %2256 = vmatpush2.msra.mxu0 0.0
    %2257 = vmatprep.subr.mxu0 0.0
    %2258 = vmatpush2.msra.mxu0 0.0
    %2259 = vmatprep.subr.mxu0 0.0
    %2260 = vmatpush2.msra.mxu0 0.0
    %2261 = vmatprep.subr.mxu0 0.0
    %2262 = vmatpush2.msra.mxu0 0.0
    %2263 = vmatprep.subr.mxu0 0.0
    %2264 = vmatpush2.msra.mxu0 0.0
    %2265 = vmatprep.subr.mxu0 0.0
    %2266 = vmatpush2.msra.mxu0 0.0
    %2267 = vmatprep.subr.mxu0 0.0
    %2268 = vmatpush2.msra.mxu0 0.0
    %2269 = vmatprep.subr.mxu0 0.0
    %2270 = vmatpush2.msra.mxu0 0.0
    %2271 = vmatprep.subr.mxu0 0.0
    %2272 = vmatpush2.msra.mxu0 0.0
    %2273 = vmatprep.subr.mxu0 0.0
    %2274 = vmatpush2.msra.mxu0 0.0
    %2275 = vmatprep.mubr.f32.mxu0 0.0
    %2276 = vmatmul.mubr.f32.gmra.mxu0 %v2206
    %v2277 = vpop.f32.mrf.mxu0
    %v2278 = vadd.f32 0.0, %v2277
    %v2279 = vpop.f32.mrf.mxu0
    %2280 = vmatprep.mubr.f32.mxu0 0.0
    %2281 = vmatmul.mubr.f32.gmra.mxu0 %v2209
    %v2282 = vpop.f32.mrf.mxu0
    %v2283 = vadd.f32 0.0, %v2282
    %v2284 = vpop.f32.mrf.mxu0
    %2285 = vdwg.mxu0
    %v2287 = vsel %vm626, %v2190, 0
    %v2290 = vsel %vm626, %v2192, 0
    %2292 = vmatprep.subr.mxu0 0.0
    %2293 = vmatpush1.msra.mxu0 0.0
    %2294 = vmatprep.subr.mxu0 0.0
    %2295 = vmatpush1.msra.mxu0 0.0
    %2296 = vmatprep.subr.mxu0 0.0
    %2297 = vmatpush1.msra.mxu0 0.0
    %2298 = vmatprep.subr.mxu0 0.0
    %2299 = vmatpush1.msra.mxu0 0.0
    %2300 = vmatprep.subr.mxu0 0.0
    %2301 = vmatpush1.msra.mxu0 0.0
    %2302 = vmatprep.subr.mxu0 0.0
    %2303 = vmatpush1.msra.mxu0 0.0
    %2304 = vmatprep.subr.mxu0 0.0
    %2305 = vmatpush1.msra.mxu0 0.0
    %2306 = vmatprep.subr.mxu0 0.0
    %2307 = vmatpush1.msra.mxu0 0.0
    %2308 = vmatprep.subr.mxu0 0.0
    %2309 = vmatpush1.msra.mxu0 0.0
    %2310 = vmatprep.subr.mxu0 0.0
    %2311 = vmatpush1.msra.mxu0 0.0
    %2312 = vmatprep.subr.mxu0 0.0
    %2313 = vmatpush1.msra.mxu0 0.0
    %2314 = vmatprep.subr.mxu0 0.0
    %2315 = vmatpush1.msra.mxu0 0.0
    %2316 = vmatprep.subr.mxu0 0.0
    %2317 = vmatpush1.msra.mxu0 0.0
    %2318 = vmatprep.subr.mxu0 0.0
    %2319 = vmatpush1.msra.mxu0 0.0
    %2320 = vmatprep.subr.mxu0 0.0
    %2321 = vmatpush1.msra.mxu0 %v1984
    %2322 = vmatprep.subr.mxu0 0.0
    %2323 = vmatpush1.msra.mxu0 %v1979
    %2324 = vmatprep.subr.mxu0 0.0
    %2325 = vmatpush2.msra.mxu0 0.0
    %2326 = vmatprep.subr.mxu0 0.0
    %2327 = vmatpush2.msra.mxu0 0.0
    %2328 = vmatprep.subr.mxu0 0.0
    %2329 = vmatpush2.msra.mxu0 0.0
    %2330 = vmatprep.subr.mxu0 0.0
    %2331 = vmatpush2.msra.mxu0 0.0
    %2332 = vmatprep.subr.mxu0 0.0
    %2333 = vmatpush2.msra.mxu0 0.0
    %2334 = vmatprep.subr.mxu0 0.0
    %2335 = vmatpush2.msra.mxu0 0.0
    %2336 = vmatprep.subr.mxu0 0.0
    %2337 = vmatpush2.msra.mxu0 0.0
    %2338 = vmatprep.subr.mxu0 0.0
    %2339 = vmatpush2.msra.mxu0 0.0
    %2340 = vmatprep.subr.mxu0 0.0
    %2341 = vmatpush2.msra.mxu0 0.0
    %2342 = vmatprep.subr.mxu0 0.0
    %2343 = vmatpush2.msra.mxu0 0.0
    %2344 = vmatprep.subr.mxu0 0.0
    %2345 = vmatpush2.msra.mxu0 0.0
    %2346 = vmatprep.subr.mxu0 0.0
    %2347 = vmatpush2.msra.mxu0 0.0
    %2348 = vmatprep.subr.mxu0 0.0
    %2349 = vmatpush2.msra.mxu0 0.0
    %2350 = vmatprep.subr.mxu0 0.0
    %2351 = vmatpush2.msra.mxu0 0.0
    %2352 = vmatprep.subr.mxu0 0.0
    %2353 = vmatpush2.msra.mxu0 0.0
    %2354 = vmatprep.subr.mxu0 0.0
    %2355 = vmatpush2.msra.mxu0 0.0
    %2356 = vmatprep.mubr.f32.mxu0 0.0
    %2357 = vmatmul.mubr.f32.gmra.mxu0 %v2287
    %v2358 = vpop.f32.mrf.mxu0
    %v2359 = vadd.f32 0.0, %v2358
    %v2360 = vpop.f32.mrf.mxu0
    %2361 = vmatprep.mubr.f32.mxu0 0.0
    %2362 = vmatmul.mubr.f32.gmra.mxu0 %v2290
    %v2363 = vpop.f32.mrf.mxu0
    %v2364 = vadd.f32 0.0, %v2363
    %v2365 = vpop.f32.mrf.mxu0
    %2366 = vdwg.mxu0
    %v2367 = vrcp.pop %v2195
    %v2368 = vmul.f32 %v2278, %v2367
    %v2369 = vrcp.pop %v2198
    %v2370 = vmul.f32 %v2283, %v2369
    %v2371 = vrcp.pop %v2201
    %v2372 = vmul.f32 %v2359, %v2371
    %v2373 = vrcp.pop %v2204
    %v2374 = vmul.f32 %v2364, %v2373
    %v2375 = vld [vmem:[%s3 + $0x16] sm:$0x1]
    %v2376 = vld [vmem:[#allocation2 + $0x200] sm:$0xff]
    %v2377 = vld [vmem:[#allocation2 + $0x208] sm:$0xff]
    %v2379 = vsel %vm626, %v2368, 0
    %v2382 = vsel %vm626, %v2370, 0
    %2384 = vmatprep.subr.mxu0 0.0
    %2385 = vmatpush1.msra.mxu0 0.0
    %2386 = vmatprep.subr.mxu0 0.0
    %2387 = vmatpush1.msra.mxu0 0.0
    %2388 = vmatprep.subr.mxu0 0.0
    %2389 = vmatpush1.msra.mxu0 0.0
    %2390 = vmatprep.subr.mxu0 0.0
    %2391 = vmatpush1.msra.mxu0 0.0
    %2392 = vmatprep.subr.mxu0 0.0
    %2393 = vmatpush1.msra.mxu0 0.0
    %2394 = vmatprep.subr.mxu0 0.0
    %2395 = vmatpush1.msra.mxu0 0.0
    %2396 = vmatprep.subr.mxu0 0.0
    %2397 = vmatpush1.msra.mxu0 0.0
    %2398 = vmatprep.subr.mxu0 0.0
    %2399 = vmatpush1.msra.mxu0 0.0
    %2400 = vmatprep.subr.mxu0 0.0
    %2401 = vmatpush1.msra.mxu0 0.0
    %2402 = vmatprep.subr.mxu0 0.0
    %2403 = vmatpush1.msra.mxu0 0.0
    %2404 = vmatprep.subr.mxu0 0.0
    %2405 = vmatpush1.msra.mxu0 0.0
    %2406 = vmatprep.subr.mxu0 0.0
    %2407 = vmatpush1.msra.mxu0 0.0
    %2408 = vmatprep.subr.mxu0 0.0
    %2409 = vmatpush1.msra.mxu0 0.0
    %2410 = vmatprep.subr.mxu0 0.0
    %2411 = vmatpush1.msra.mxu0 0.0
    %2412 = vmatprep.subr.mxu0 0.0
    %2413 = vmatpush1.msra.mxu0 %v2377
    %2414 = vmatprep.subr.mxu0 0.0
    %2415 = vmatpush1.msra.mxu0 %v2376
    %2416 = vmatprep.subr.mxu0 0.0
    %2417 = vmatpush2.msra.mxu0 0.0
    %2418 = vmatprep.subr.mxu0 0.0
    %2419 = vmatpush2.msra.mxu0 0.0
    %2420 = vmatprep.subr.mxu0 0.0
    %2421 = vmatpush2.msra.mxu0 0.0
    %2422 = vmatprep.subr.mxu0 0.0
    %2423 = vmatpush2.msra.mxu0 0.0
    %2424 = vmatprep.subr.mxu0 0.0
    %2425 = vmatpush2.msra.mxu0 0.0
    %2426 = vmatprep.subr.mxu0 0.0
    %2427 = vmatpush2.msra.mxu0 0.0
    %2428 = vmatprep.subr.mxu0 0.0
    %2429 = vmatpush2.msra.mxu0 0.0
    %2430 = vmatprep.subr.mxu0 0.0
    %2431 = vmatpush2.msra.mxu0 0.0
    %2432 = vmatprep.subr.mxu0 0.0
    %2433 = vmatpush2.msra.mxu0 0.0
    %2434 = vmatprep.subr.mxu0 0.0
    %2435 = vmatpush2.msra.mxu0 0.0
    %2436 = vmatprep.subr.mxu0 0.0
    %2437 = vmatpush2.msra.mxu0 0.0
    %2438 = vmatprep.subr.mxu0 0.0
    %2439 = vmatpush2.msra.mxu0 0.0
    %2440 = vmatprep.subr.mxu0 0.0
    %2441 = vmatpush2.msra.mxu0 0.0
    %2442 = vmatprep.subr.mxu0 0.0
    %2443 = vmatpush2.msra.mxu0 0.0
    %2444 = vmatprep.subr.mxu0 0.0
    %2445 = vmatpush2.msra.mxu0 0.0
    %2446 = vmatprep.subr.mxu0 0.0
    %2447 = vmatpush2.msra.mxu0 0.0
    %2448 = vmatprep.mubr.f32.mxu0 0.0
    %2449 = vmatmul.mubr.f32.gmra.mxu0 %v2379
    %v2450 = vpop.f32.mrf.mxu0
    %v2451 = vadd.f32 0.0, %v2450
    %v2452 = vpop.f32.mrf.mxu0
    %2453 = vmatprep.mubr.f32.mxu0 0.0
    %2454 = vmatmul.mubr.f32.gmra.mxu0 %v2382
    %v2455 = vpop.f32.mrf.mxu0
    %v2456 = vadd.f32 0.0, %v2455
    %v2457 = vpop.f32.mrf.mxu0
    %2458 = vdwg.mxu0
    %v2459 = vlaneseq
    %v2460 = vshrl.u32 %v2459, 7
    %v2461 = vsub.s32 0, %v2460
    %v2462 = vrot.slane %v2375, %v2461
    %v2463 = vadd.f32 %v2462, %v2451
    %v2464 = vadd.f32 %v2462, %v2456
    %v2465 = vld [vmem:[#allocation2 + $0x210] sm:$0xff]
    %v2466 = vld [vmem:[#allocation2 + $0x218] sm:$0xff]
    %v2468 = vsel %vm626, %v2372, 0
    %v2471 = vsel %vm626, %v2374, 0
    %2473 = vmatprep.subr.mxu0 0.0
    %2474 = vmatpush1.msra.mxu0 0.0
    %2475 = vmatprep.subr.mxu0 0.0
    %2476 = vmatpush1.msra.mxu0 0.0
    %2477 = vmatprep.subr.mxu0 0.0
    %2478 = vmatpush1.msra.mxu0 0.0
    %2479 = vmatprep.subr.mxu0 0.0
    %2480 = vmatpush1.msra.mxu0 0.0
    %2481 = vmatprep.subr.mxu0 0.0
    %2482 = vmatpush1.msra.mxu0 0.0
    %2483 = vmatprep.subr.mxu0 0.0
    %2484 = vmatpush1.msra.mxu0 0.0
    %2485 = vmatprep.subr.mxu0 0.0
    %2486 = vmatpush1.msra.mxu0 0.0
    %2487 = vmatprep.subr.mxu0 0.0
    %2488 = vmatpush1.msra.mxu0 0.0
    %2489 = vmatprep.subr.mxu0 0.0
    %2490 = vmatpush1.msra.mxu0 0.0
    %2491 = vmatprep.subr.mxu0 0.0
    %2492 = vmatpush1.msra.mxu0 0.0
    %2493 = vmatprep.subr.mxu0 0.0
    %2494 = vmatpush1.msra.mxu0 0.0
    %2495 = vmatprep.subr.mxu0 0.0
    %2496 = vmatpush1.msra.mxu0 0.0
    %2497 = vmatprep.subr.mxu0 0.0
    %2498 = vmatpush1.msra.mxu0 0.0
    %2499 = vmatprep.subr.mxu0 0.0
    %2500 = vmatpush1.msra.mxu0 0.0
    %2501 = vmatprep.subr.mxu0 0.0
    %2502 = vmatpush1.msra.mxu0 %v2466
    %2503 = vmatprep.subr.mxu0 0.0
    %2504 = vmatpush1.msra.mxu0 %v2465
    %2505 = vmatprep.subr.mxu0 0.0
    %2506 = vmatpush2.msra.mxu0 0.0
    %2507 = vmatprep.subr.mxu0 0.0
    %2508 = vmatpush2.msra.mxu0 0.0
    %2509 = vmatprep.subr.mxu0 0.0
    %2510 = vmatpush2.msra.mxu0 0.0
    %2511 = vmatprep.subr.mxu0 0.0
    %2512 = vmatpush2.msra.mxu0 0.0
    %2513 = vmatprep.subr.mxu0 0.0
    %2514 = vmatpush2.msra.mxu0 0.0
    %2515 = vmatprep.subr.mxu0 0.0
    %2516 = vmatpush2.msra.mxu0 0.0
    %2517 = vmatprep.subr.mxu0 0.0
    %2518 = vmatpush2.msra.mxu0 0.0
    %2519 = vmatprep.subr.mxu0 0.0
    %2520 = vmatpush2.msra.mxu0 0.0
    %2521 = vmatprep.subr.mxu0 0.0
    %2522 = vmatpush2.msra.mxu0 0.0
    %2523 = vmatprep.subr.mxu0 0.0
    %2524 = vmatpush2.msra.mxu0 0.0
    %2525 = vmatprep.subr.mxu0 0.0
    %2526 = vmatpush2.msra.mxu0 0.0
    %2527 = vmatprep.subr.mxu0 0.0
    %2528 = vmatpush2.msra.mxu0 0.0
    %2529 = vmatprep.subr.mxu0 0.0
    %2530 = vmatpush2.msra.mxu0 0.0
    %2531 = vmatprep.subr.mxu0 0.0
    %2532 = vmatpush2.msra.mxu0 0.0
    %2533 = vmatprep.subr.mxu0 0.0
    %2534 = vmatpush2.msra.mxu0 0.0
    %2535 = vmatprep.subr.mxu0 0.0
    %2536 = vmatpush2.msra.mxu0 0.0
    %2537 = vmatprep.mubr.f32.mxu0 0.0
    %2538 = vmatmul.mubr.f32.gmra.mxu0 %v2468
    %v2539 = vpop.f32.mrf.mxu0
    %v2540 = vadd.f32 0.0, %v2539
    %v2541 = vpop.f32.mrf.mxu0
    %2542 = vmatprep.mubr.f32.mxu0 0.0
    %2543 = vmatmul.mubr.f32.gmra.mxu0 %v2471
    %v2544 = vpop.f32.mrf.mxu0
    %v2545 = vadd.f32 0.0, %v2544
    %v2546 = vpop.f32.mrf.mxu0
    %2547 = vdwg.mxu0
    %v2548 = vadd.f32 %v2463, %v2540
    %v2549 = vadd.f32 %v2464, %v2545
    %v2550 = vadd.f32 %v1475, %v2548
    %v2551 = vadd.f32 %v1476, %v2549
    %v2552 = vld [vmem:[%s3 + $0x17] sm:$0x1]
    %v2553 = vld [vmem:[%s3 + $0x18] sm:$0x1]
    %v2554 = vsel %vm76, %v2550, 0.0
    %2555 = vadd.xlane.f32.xlu0 %v2554
    %v2556 = vpop.xlane.xlu0 %2555
    %v2557 = vsel %vm76, %v2551, 0.0
    %2558 = vadd.xlane.f32.xlu0 %v2557
    %v2559 = vpop.xlane.xlu0 %2558
    %v2560 = vmul.f32 %v2556, %v83
    %v2561 = vmul.f32 %v2559, %v83
    %v2562 = vsub.f32 %v2550, %v2560
    %v2563 = vsub.f32 %v2551, %v2561
    %v2564 = vmul.f32 %v2562, %v2562
    %v2565 = vmul.f32 %v2563, %v2563
    %v2566 = vsel %vm76, %v2564, 0.0
    %2567 = vadd.xlane.f32.xlu0 %v2566
    %v2568 = vpop.xlane.xlu0 %2567
    %v2569 = vsel %vm76, %v2565, 0.0
    %2570 = vadd.xlane.f32.xlu0 %v2569
    %v2571 = vpop.xlane.xlu0 %2570
    %v2572 = vmul.f32 %v2568, %v83
    %v2573 = vmul.f32 %v2571, %v83
    %v2574 = vadd.f32 %v2572, 1e-12
    %v2575 = vadd.f32 %v2573, 1e-12
    %v2576 = vrsqrt.pop %v2574
    %v2577 = vrsqrt.pop %v2575
    %v2578 = vmul.f32 %v2562, %v2576
    %v2579 = vmul.f32 %v2563, %v2577
    %v2580 = vlaneseq
    %v2581 = vshrl.u32 %v2580, 7
    %v2582 = vsub.s32 0, %v2581
    %v2583 = vrot.slane %v2552, %v2582
    %v2584 = vmul.f32 %v2578, %v2583
    %v2585 = vmul.f32 %v2579, %v2583
    %v2586 = vlaneseq
    %v2587 = vshrl.u32 %v2586, 7
    %v2588 = vsub.s32 0, %v2587
    %v2589 = vrot.slane %v2553, %v2588
    %v2590 = vadd.f32 %v2584, %v2589
    %v2591 = vadd.f32 %v2585, %v2589
    %v2592 = vld [vmem:[#allocation2 + $0x220] sm:$0xff]
    %v2593 = vld [vmem:[#allocation2 + $0x228] sm:$0xff]
    %v2594 = vld [vmem:[#allocation2 + $0x230] sm:$0xff]
    %v2595 = vld [vmem:[#allocation2 + $0x238] sm:$0xff]
    %v2596 = vld [vmem:[%s3 + $0x19] sm:$0x1]
    %v2597 = vlaneseq
    %v2598 = vshrl.u32 %v2597, 7
    %v2599 = vsub.s32 0, %v2598
    %v2600 = vrot.slane %v2596, %v2599
    %v2602 = vsel %vm76, %v2590, 0
    %v2605 = vsel %vm76, %v2591, 0
    %2607 = vmatprep.subr.mxu0 0.0
    %2608 = vmatpush1.msra.mxu0 0.0
    %2609 = vmatprep.subr.mxu0 0.0
    %2610 = vmatpush1.msra.mxu0 0.0
    %2611 = vmatprep.subr.mxu0 0.0
    %2612 = vmatpush1.msra.mxu0 0.0
    %2613 = vmatprep.subr.mxu0 0.0
    %2614 = vmatpush1.msra.mxu0 0.0
    %2615 = vmatprep.subr.mxu0 0.0
    %2616 = vmatpush1.msra.mxu0 0.0
    %2617 = vmatprep.subr.mxu0 0.0
    %2618 = vmatpush1.msra.mxu0 0.0
    %2619 = vmatprep.subr.mxu0 0.0
    %2620 = vmatpush1.msra.mxu0 0.0
    %2621 = vmatprep.subr.mxu0 0.0
    %2622 = vmatpush1.msra.mxu0 0.0
    %2623 = vmatprep.subr.mxu0 0.0
    %2624 = vmatpush1.msra.mxu0 0.0
    %2625 = vmatprep.subr.mxu0 0.0
    %2626 = vmatpush1.msra.mxu0 0.0
    %2627 = vmatprep.subr.mxu0 0.0
    %2628 = vmatpush1.msra.mxu0 0.0
    %2629 = vmatprep.subr.mxu0 0.0
    %2630 = vmatpush1.msra.mxu0 0.0
    %2631 = vmatprep.subr.mxu0 0.0
    %2632 = vmatpush1.msra.mxu0 %v2595
    %2633 = vmatprep.subr.mxu0 0.0
    %2634 = vmatpush1.msra.mxu0 %v2594
    %2635 = vmatprep.subr.mxu0 0.0
    %2636 = vmatpush1.msra.mxu0 %v2593
    %2637 = vmatprep.subr.mxu0 0.0
    %2638 = vmatpush1.msra.mxu0 %v2592
    %2639 = vmatprep.subr.mxu0 0.0
    %2640 = vmatpush2.msra.mxu0 0.0
    %2641 = vmatprep.subr.mxu0 0.0
    %2642 = vmatpush2.msra.mxu0 0.0
    %2643 = vmatprep.subr.mxu0 0.0
    %2644 = vmatpush2.msra.mxu0 0.0
    %2645 = vmatprep.subr.mxu0 0.0
    %2646 = vmatpush2.msra.mxu0 0.0
    %2647 = vmatprep.subr.mxu0 0.0
    %2648 = vmatpush2.msra.mxu0 0.0
    %2649 = vmatprep.subr.mxu0 0.0
    %2650 = vmatpush2.msra.mxu0 0.0
    %2651 = vmatprep.subr.mxu0 0.0
    %2652 = vmatpush2.msra.mxu0 0.0
    %2653 = vmatprep.subr.mxu0 0.0
    %2654 = vmatpush2.msra.mxu0 0.0
    %2655 = vmatprep.subr.mxu0 0.0
    %2656 = vmatpush2.msra.mxu0 0.0
    %2657 = vmatprep.subr.mxu0 0.0
    %2658 = vmatpush2.msra.mxu0 0.0
    %2659 = vmatprep.subr.mxu0 0.0
    %2660 = vmatpush2.msra.mxu0 0.0
    %2661 = vmatprep.subr.mxu0 0.0
    %2662 = vmatpush2.msra.mxu0 0.0
    %2663 = vmatprep.subr.mxu0 0.0
    %2664 = vmatpush2.msra.mxu0 0.0
    %2665 = vmatprep.subr.mxu0 0.0
    %2666 = vmatpush2.msra.mxu0 0.0
    %2667 = vmatprep.subr.mxu0 0.0
    %2668 = vmatpush2.msra.mxu0 0.0
    %2669 = vmatprep.subr.mxu0 0.0
    %2670 = vmatpush2.msra.mxu0 0.0
    %2671 = vmatprep.mubr.f32.mxu0 0.0
    %2672 = vmatmul.mubr.f32.gmra.mxu0 %v2602
    %v2673 = vpop.f32.mrf.mxu0
    %v2674 = vadd.f32 %v2600, %v2673
    %v2675 = vpop.f32.mrf.mxu0
    %2676 = vmatprep.mubr.f32.mxu0 0.0
    %2677 = vmatmul.mubr.f32.gmra.mxu0 %v2605
    %v2678 = vpop.f32.mrf.mxu0
    %v2679 = vadd.f32 %v2600, %v2678
    %v2680 = vpop.f32.mrf.mxu0
    %2681 = vdwg.mxu0
    %v2682 = vmul.f32 %v2674, 0.5
    %v2683 = vmul.f32 %v2679, 0.5
    %v2684 = vmul.f32 %v2674, 0.044715
    %v2685 = vmul.f32 %v2679, 0.044715
    %v2686 = vmul.f32 %v2684, %v2674
    %v2687 = vmul.f32 %v2685, %v2679
    %v2688 = vmul.f32 %v2686, %v2674
    %v2689 = vmul.f32 %v2687, %v2679
    %v2690 = vadd.f32 %v2674, %v2688
    %v2691 = vadd.f32 %v2679, %v2689
    %v2692 = vmul.f32 %v2690, 0.7978846
    %v2693 = vmul.f32 %v2691, 0.7978846
    %v2694 = vtanh.pop %v2692
    %v2695 = vtanh.pop %v2693
    %v2696 = vadd.f32 %v2694, 1.0
    %v2697 = vadd.f32 %v2695, 1.0
    %v2698 = vmul.f32 %v2682, %v2696
    %v2699 = vmul.f32 %v2683, %v2697
    %v2700 = vld [vmem:[#allocation2 + $0x240] sm:$0xff]
    %v2701 = vld [vmem:[#allocation2 + $0x248] sm:$0xff]
    %v2702 = vld [vmem:[#allocation2 + $0x250] sm:$0xff]
    %v2703 = vld [vmem:[#allocation2 + $0x258] sm:$0xff]
    %v2704 = vld [vmem:[#allocation2 + $0x260] sm:$0xff]
    %v2705 = vld [vmem:[#allocation2 + $0x268] sm:$0xff]
    %v2706 = vld [vmem:[#allocation2 + $0x270] sm:$0xff]
    %v2707 = vld [vmem:[#allocation2 + $0x278] sm:$0xff]
    %v2708 = vld [vmem:[%s3 + $0x1a] sm:$0x1]
    %v2709 = vlaneseq
    %v2710 = vshrl.u32 %v2709, 7
    %v2711 = vsub.s32 0, %v2710
    %v2712 = vrot.slane %v2708, %v2711
    %v2714 = vsel %vm1353, %v2698, 0
    %v2717 = vsel %vm1353, %v2699, 0
    %2719 = vmatprep.subr.mxu0 0.0
    %2720 = vmatpush1.msra.mxu0 0.0
    %2721 = vmatprep.subr.mxu0 0.0
    %2722 = vmatpush1.msra.mxu0 0.0
    %2723 = vmatprep.subr.mxu0 0.0
    %2724 = vmatpush1.msra.mxu0 0.0
    %2725 = vmatprep.subr.mxu0 0.0
    %2726 = vmatpush1.msra.mxu0 0.0
    %2727 = vmatprep.subr.mxu0 0.0
    %2728 = vmatpush1.msra.mxu0 0.0
    %2729 = vmatprep.subr.mxu0 0.0
    %2730 = vmatpush1.msra.mxu0 0.0
    %2731 = vmatprep.subr.mxu0 0.0
    %2732 = vmatpush1.msra.mxu0 0.0
    %2733 = vmatprep.subr.mxu0 0.0
    %2734 = vmatpush1.msra.mxu0 0.0
    %2735 = vmatprep.subr.mxu0 0.0
    %2736 = vmatpush1.msra.mxu0 %v2707
    %2737 = vmatprep.subr.mxu0 0.0
    %2738 = vmatpush1.msra.mxu0 %v2706
    %2739 = vmatprep.subr.mxu0 0.0
    %2740 = vmatpush1.msra.mxu0 %v2705
    %2741 = vmatprep.subr.mxu0 0.0
    %2742 = vmatpush1.msra.mxu0 %v2704
    %2743 = vmatprep.subr.mxu0 0.0
    %2744 = vmatpush1.msra.mxu0 %v2703
    %2745 = vmatprep.subr.mxu0 0.0
    %2746 = vmatpush1.msra.mxu0 %v2702
    %2747 = vmatprep.subr.mxu0 0.0
    %2748 = vmatpush1.msra.mxu0 %v2701
    %2749 = vmatprep.subr.mxu0 0.0
    %2750 = vmatpush1.msra.mxu0 %v2700
    %2751 = vmatprep.subr.mxu0 0.0
    %2752 = vmatpush2.msra.mxu0 0.0
    %2753 = vmatprep.subr.mxu0 0.0
    %2754 = vmatpush2.msra.mxu0 0.0
    %2755 = vmatprep.subr.mxu0 0.0
    %2756 = vmatpush2.msra.mxu0 0.0
    %2757 = vmatprep.subr.mxu0 0.0
    %2758 = vmatpush2.msra.mxu0 0.0
    %2759 = vmatprep.subr.mxu0 0.0
    %2760 = vmatpush2.msra.mxu0 0.0
    %2761 = vmatprep.subr.mxu0 0.0
    %2762 = vmatpush2.msra.mxu0 0.0
    %2763 = vmatprep.subr.mxu0 0.0
    %2764 = vmatpush2.msra.mxu0 0.0
    %2765 = vmatprep.subr.mxu0 0.0
    %2766 = vmatpush2.msra.mxu0 0.0
    %2767 = vmatprep.subr.mxu0 0.0
    %2768 = vmatpush2.msra.mxu0 0.0
    %2769 = vmatprep.subr.mxu0 0.0
    %2770 = vmatpush2.msra.mxu0 0.0
    %2771 = vmatprep.subr.mxu0 0.0
    %2772 = vmatpush2.msra.mxu0 0.0
    %2773 = vmatprep.subr.mxu0 0.0
    %2774 = vmatpush2.msra.mxu0 0.0
    %2775 = vmatprep.subr.mxu0 0.0
    %2776 = vmatpush2.msra.mxu0 0.0
    %2777 = vmatprep.subr.mxu0 0.0
    %2778 = vmatpush2.msra.mxu0 0.0
    %2779 = vmatprep.subr.mxu0 0.0
    %2780 = vmatpush2.msra.mxu0 0.0
    %2781 = vmatprep.subr.mxu0 0.0
    %2782 = vmatpush2.msra.mxu0 0.0
    %2783 = vmatprep.mubr.f32.mxu0 0.0
    %2784 = vmatmul.mubr.f32.gmra.mxu0 %v2714
    %v2785 = vpop.f32.mrf.mxu0
    %v2786 = vadd.f32 %v2712, %v2785
    %v2787 = vpop.f32.mrf.mxu0
    %2788 = vmatprep.mubr.f32.mxu0 0.0
    %2789 = vmatmul.mubr.f32.gmra.mxu0 %v2717
    %v2790 = vpop.f32.mrf.mxu0
    %v2791 = vadd.f32 %v2712, %v2790
    %v2792 = vpop.f32.mrf.mxu0
    %2793 = vdwg.mxu0
    %v2794 = vadd.f32 %v2590, %v2786
    %v2795 = vadd.f32 %v2591, %v2791
    %v2796 = vld [vmem:[%s3 + $0x1b] sm:$0x1]
    %v2797 = vld [vmem:[%s3 + $0x1c] sm:$0x1]
    %v2798 = vsel %vm76, %v2794, 0.0
    %2799 = vadd.xlane.f32.xlu0 %v2798
    %v2800 = vpop.xlane.xlu0 %2799
    %v2801 = vsel %vm76, %v2795, 0.0
    %2802 = vadd.xlane.f32.xlu0 %v2801
    %v2803 = vpop.xlane.xlu0 %2802
    %v2804 = vmul.f32 %v2800, %v83
    %v2805 = vmul.f32 %v2803, %v83
    %v2806 = vsub.f32 %v2794, %v2804
    %v2807 = vsub.f32 %v2795, %v2805
    %v2808 = vmul.f32 %v2806, %v2806
    %v2809 = vmul.f32 %v2807, %v2807
    %v2810 = vsel %vm76, %v2808, 0.0
    %2811 = vadd.xlane.f32.xlu0 %v2810
    %v2812 = vpop.xlane.xlu0 %2811
    %v2813 = vsel %vm76, %v2809, 0.0
    %2814 = vadd.xlane.f32.xlu0 %v2813
    %v2815 = vpop.xlane.xlu0 %2814
    %v2816 = vmul.f32 %v2812, %v83
    %v2817 = vmul.f32 %v2815, %v83
    %v2818 = vadd.f32 %v2816, 1e-12
    %v2819 = vadd.f32 %v2817, 1e-12
    %v2820 = vrsqrt.pop %v2818
    %v2821 = vrsqrt.pop %v2819
    %v2822 = vmul.f32 %v2806, %v2820
    %v2823 = vmul.f32 %v2807, %v2821
    %v2824 = vlaneseq
    %v2825 = vshrl.u32 %v2824, 7
    %v2826 = vsub.s32 0, %v2825
    %v2827 = vrot.slane %v2796, %v2826
    %v2828 = vmul.f32 %v2822, %v2827
    %v2829 = vmul.f32 %v2823, %v2827
    %v2830 = vlaneseq
    %v2831 = vshrl.u32 %v2830, 7
    %v2832 = vsub.s32 0, %v2831
    %v2833 = vrot.slane %v2797, %v2832
    %v2834 = vadd.f32 %v2828, %v2833
    %v2835 = vadd.f32 %v2829, %v2833
    %v2836 = vld [vmem:[#allocation2 + $0x280] sm:$0xff]
    %v2837 = vld [vmem:[#allocation2 + $0x288] sm:$0xff]
    %v2838 = vld [vmem:[#allocation2 + $0x290] sm:$0xff]
    %v2839 = vld [vmem:[#allocation2 + $0x298] sm:$0xff]
    %v2840 = vld [vmem:[%s3 + $0x2] sm:$0x1]
    %v2841 = vlaneseq
    %v2842 = vshrl.u32 %v2841, 7
    %v2843 = vsub.s32 0, %v2842
    %v2844 = vrot.slane %v2840, %v2843
    %v2846 = vsel %vm76, %v2834, 0
    %v2849 = vsel %vm76, %v2835, 0
    %2851 = vmatprep.subr.mxu0 0.0
    %2852 = vmatpush1.msra.mxu0 0.0
    %2853 = vmatprep.subr.mxu0 0.0
    %2854 = vmatpush1.msra.mxu0 0.0
    %2855 = vmatprep.subr.mxu0 0.0
    %2856 = vmatpush1.msra.mxu0 0.0
    %2857 = vmatprep.subr.mxu0 0.0
    %2858 = vmatpush1.msra.mxu0 0.0
    %2859 = vmatprep.subr.mxu0 0.0
    %2860 = vmatpush1.msra.mxu0 0.0
    %2861 = vmatprep.subr.mxu0 0.0
    %2862 = vmatpush1.msra.mxu0 0.0
    %2863 = vmatprep.subr.mxu0 0.0
    %2864 = vmatpush1.msra.mxu0 0.0
    %2865 = vmatprep.subr.mxu0 0.0
    %2866 = vmatpush1.msra.mxu0 0.0
    %2867 = vmatprep.subr.mxu0 0.0
    %2868 = vmatpush1.msra.mxu0 0.0
    %2869 = vmatprep.subr.mxu0 0.0
    %2870 = vmatpush1.msra.mxu0 0.0
    %2871 = vmatprep.subr.mxu0 0.0
    %2872 = vmatpush1.msra.mxu0 0.0
    %2873 = vmatprep.subr.mxu0 0.0
    %2874 = vmatpush1.msra.mxu0 0.0
    %2875 = vmatprep.subr.mxu0 0.0
    %2876 = vmatpush1.msra.mxu0 %v2839
    %2877 = vmatprep.subr.mxu0 0.0
    %2878 = vmatpush1.msra.mxu0 %v2838
    %2879 = vmatprep.subr.mxu0 0.0
    %2880 = vmatpush1.msra.mxu0 %v2837
    %2881 = vmatprep.subr.mxu0 0.0
    %2882 = vmatpush1.msra.mxu0 %v2836
    %2883 = vmatprep.subr.mxu0 0.0
    %2884 = vmatpush2.msra.mxu0 0.0
    %2885 = vmatprep.subr.mxu0 0.0
    %2886 = vmatpush2.msra.mxu0 0.0
    %2887 = vmatprep.subr.mxu0 0.0
    %2888 = vmatpush2.msra.mxu0 0.0
    %2889 = vmatprep.subr.mxu0 0.0
    %2890 = vmatpush2.msra.mxu0 0.0
    %2891 = vmatprep.subr.mxu0 0.0
    %2892 = vmatpush2.msra.mxu0 0.0
    %2893 = vmatprep.subr.mxu0 0.0
    %2894 = vmatpush2.msra.mxu0 0.0
    %2895 = vmatprep.subr.mxu0 0.0
    %2896 = vmatpush2.msra.mxu0 0.0
    %2897 = vmatprep.subr.mxu0 0.0
    %2898 = vmatpush2.msra.mxu0 0.0
    %2899 = vmatprep.subr.mxu0 0.0
    %2900 = vmatpush2.msra.mxu0 0.0
    %2901 = vmatprep.subr.mxu0 0.0
    %2902 = vmatpush2.msra.mxu0 0.0
    %2903 = vmatprep.subr.mxu0 0.0
    %2904 = vmatpush2.msra.mxu0 0.0
    %2905 = vmatprep.subr.mxu0 0.0
    %2906 = vmatpush2.msra.mxu0 0.0
    %2907 = vmatprep.subr.mxu0 0.0
    %2908 = vmatpush2.msra.mxu0 0.0
    %2909 = vmatprep.subr.mxu0 0.0
    %2910 = vmatpush2.msra.mxu0 0.0
    %2911 = vmatprep.subr.mxu0 0.0
    %2912 = vmatpush2.msra.mxu0 0.0
    %2913 = vmatprep.subr.mxu0 0.0
    %2914 = vmatpush2.msra.mxu0 0.0
    %2915 = vmatprep.mubr.f32.mxu0 0.0
    %2916 = vmatmul.mubr.f32.gmra.mxu0 %v2846
    %v2917 = vpop.f32.mrf.mxu0
    %v2918 = vadd.f32 %v2844, %v2917
    %v2919 = vpop.f32.mrf.mxu0
    %2920 = vmatprep.mubr.f32.mxu0 0.0
    %2921 = vmatmul.mubr.f32.gmra.mxu0 %v2849
    %v2922 = vpop.f32.mrf.mxu0
    %v2923 = vadd.f32 %v2844, %v2922
    %v2924 = vpop.f32.mrf.mxu0
    %2925 = vdwg.mxu0
    %2926 = vst [vmem:[%s4] sm:$0xff] %v2918
    %2927 = vst [vmem:[%s4 + $0x8] sm:$0xff] %v2923
    // Predicated region
    $region22: #{md_bio_forward.1} parent=1 // pred_check
      _
    $region23: #{md_bio_forward.1} parent=1 // pred_check_branch
      %2929 = sbr.rel (0) target = $region25
    $region24: #{md_bio_forward.1} parent=1 // pred_region
      _
    $region25: #{md_bio_forward.1} parent=1 // pred_fallthru
      _
    // Predicated region
    $region26: #{md_bio_forward.1} parent=1 // pred_check
      _
    $region27: #{md_bio_forward.1} parent=1 // pred_check_branch
      %2931 = sbr.rel (0) target = $region29
    $region28: #{md_bio_forward.1} parent=1 // pred_region
      _
    $region29: #{md_bio_forward.1} parent=1 // pred_fallthru
      _
    %2932 = vsyncpa [#allocation3], 1

</llo_original>
